<compile_context>
chip_gen: v7x
topology: tpu7x:2x2x1
jax: 0.10.0
libtpu: 0.0.40
codegen_flags: <defaults>
</compile_context>

<pallas_src>
import functools

import jax
import jax.numpy as jnp
from jax.experimental import pallas as pl
from jax.experimental.pallas import tpu as pltpu


# ----------------------------- Pallas kernel --------------------------------

def _conv3x3_bn_act_kernel(x_ref, w_ref, scale_ref, shift_ref, *rest,
                           block_h, fuse_residual):
    """One (batch, row-tile) step of: 3x3 conv (pad=1) + BN + [residual] + ReLU.

    x_ref     : (1, H+2, W+2, C)    zero-padded input, full image of this batch elem
    w_ref     : (9, C, Co)  bf16    conv taps, t = 3*dh + dw
    scale_ref : (1, Co)     f32     BN scale = gamma / sqrt(running_var + eps)
    shift_ref : (1, Co)     f32     BN shift = beta - running_mean * scale
    res_ref   : (1, block_h, W, Co) (only if fuse_residual)
    o_ref     : (1, block_h, W, Co)
    """
    if fuse_residual:
        res_ref, o_ref = rest
    else:
        (o_ref,) = rest

    th = block_h
    W = o_ref.shape[2]
    C = x_ref.shape[-1]
    Co = o_ref.shape[-1]
    row0 = pl.multiple_of(pl.program_id(1) * th, th)

    acc = jnp.zeros((th * W, Co), jnp.float32)
    for t in range(9):                              # static -> fully unrolled taps
        dh, dw = divmod(t, 3)
        xs = x_ref[:, pl.ds(row0 + dh, th), pl.ds(dw, W), :]      # (1, th, W, C)
        xs = xs.reshape(th * W, C).astype(jnp.bfloat16)           # bf16 MXU operand
        acc = acc + jnp.dot(xs, w_ref[t],
                            preferred_element_type=jnp.float32)   # f32 accumulation

    y = acc * scale_ref[...] + shift_ref[...]        # fused BatchNorm (eval mode)
    if fuse_residual:
        y = y + res_ref[...].reshape(th * W, Co).astype(jnp.float32)
    y = jnp.maximum(y, 0.0)                          # ReLU
    o_ref[...] = y.reshape(1, th, W, Co).astype(o_ref.dtype)


def conv3x3_bn_act(x_pad, w9, scale, shift, residual=None, *, block_h=8):
    """Fused 3x3 conv (pad=1, stride=1) + BN + optional residual + ReLU.

    x_pad    : (B, H+2, W+2, C) f32, zero padded
    w9       : (9, C, Co) bf16
    scale/shift : (Co,) f32
    residual : optional (B, H, W, Co) f32 added before the final ReLU
    returns  : (B, H, W, Co) f32
    """
    B, Hp, Wp, C = x_pad.shape
    H, W = Hp - 2, Wp - 2
    Co = w9.shape[-1]
    assert H % block_h == 0, (H, block_h)
    grid = (B, H // block_h)

    in_specs = [
        # full padded image of one batch element; index map is constant in j,
        # so the block is DMA'd once per batch element and reused from VMEM.
        pl.BlockSpec((1, Hp, Wp, C), lambda b, j: (b, 0, 0, 0)),
        pl.BlockSpec((9, C, Co), lambda b, j: (0, 0, 0)),
        pl.BlockSpec((1, Co), lambda b, j: (0, 0)),
        pl.BlockSpec((1, Co), lambda b, j: (0, 0)),
    ]
    args = [x_pad, w9, scale.reshape(1, Co), shift.reshape(1, Co)]
    if residual is not None:
        in_specs.append(pl.BlockSpec((1, block_h, W, Co),
                                     lambda b, j: (b, j, 0, 0)))
        args.append(residual)

    kernel = functools.partial(_conv3x3_bn_act_kernel, block_h=block_h,
                               fuse_residual=residual is not None)
    return pl.pallas_call(
        kernel,
        out_shape=jax.ShapeDtypeStruct((B, H, W, Co), jnp.float32),
        grid=grid,
        in_specs=in_specs,
        out_specs=pl.BlockSpec((1, block_h, W, Co), lambda b, j: (b, j, 0, 0)),
        compiler_params=pltpu.CompilerParams(
            # batch axis shards across TensorCores; row-tile axis iterates
            # sequentially so the per-batch input block is fetched only once.
            dimension_semantics=("parallel", "arbitrary")),
    )(*args)


# ------------------------------ JAX glue -------------------------------------

def _fold_bn(gamma, beta, mean, var, eps):
    scale = gamma * jax.lax.rsqrt(var + eps)
    shift = beta - mean * scale
    return scale, shift


def _w_oihw_to_taps(w):
    # PyTorch conv weight (Co, Ci, 3, 3) -> (9, Ci, Co) with t = 3*dh + dw,
    # stored bf16 (halves weight DMA bytes; MXU operands are bf16 anyway).
    co, ci, kh, kw = w.shape
    return jnp.transpose(w, (2, 3, 1, 0)).reshape(kh * kw, ci, co).astype(jnp.bfloat16)


def residual_block_forward(x_nchw, params, *, eps=1e-5, block_h=8):
    """Pallas forward of ResidualBlock (stride=1, shortcut=None). NCHW in/out."""
    # TODO(synk): stride>1 and non-identity (projection) `shortcut` modules are
    # not implemented; the default ResidualBlock config (stride=1, shortcut=None)
    # requires in_ch == out_ch, which is what this path handles.
    x = jnp.transpose(x_nchw, (0, 2, 3, 1)).astype(jnp.float32)    # NCHW -> NHWC

    w1 = _w_oihw_to_taps(params["w1"])
    w2 = _w_oihw_to_taps(params["w2"])
    s1, b1 = _fold_bn(params["bn1_gamma"], params["bn1_beta"],
                      params["bn1_mean"], params["bn1_var"], eps)
    s2, b2 = _fold_bn(params["bn2_gamma"], params["bn2_beta"],
                      params["bn2_mean"], params["bn2_var"], eps)

    pad = ((0, 0), (1, 1), (1, 1), (0, 0))
    y = conv3x3_bn_act(jnp.pad(x, pad), w1, s1, b1, block_h=block_h)   # conv1+BN1+ReLU
    y = conv3x3_bn_act(jnp.pad(y, pad), w2, s2, b2, residual=x,        # conv2+BN2+add+ReLU
                       block_h=block_h)
    return jnp.transpose(y, (0, 3, 1, 2))                              # NHWC -> NCHW


def init_residual_block_params(key, in_ch, out_ch):
    ks = jax.random.split(key, 10)
    std1 = (2.0 / (in_ch * 9)) ** 0.5
    std2 = (2.0 / (out_ch * 9)) ** 0.5
    return {
        "w1": std1 * jax.random.normal(ks[0], (out_ch, in_ch, 3, 3), jnp.float32),
        "w2": std2 * jax.random.normal(ks[1], (out_ch, out_ch, 3, 3), jnp.float32),
        "bn1_gamma": 1.0 + 0.1 * jax.random.normal(ks[2], (out_ch,), jnp.float32),
        "bn1_beta": 0.1 * jax.random.normal(ks[3], (out_ch,), jnp.float32),
        "bn1_mean": 0.1 * jax.random.normal(ks[4], (out_ch,), jnp.float32),
        "bn1_var": 1.0 + 0.25 * jax.random.uniform(ks[5], (out_ch,), jnp.float32),
        "bn2_gamma": 1.0 + 0.1 * jax.random.normal(ks[6], (out_ch,), jnp.float32),
        "bn2_beta": 0.1 * jax.random.normal(ks[7], (out_ch,), jnp.float32),
        "bn2_mean": 0.1 * jax.random.normal(ks[8], (out_ch,), jnp.float32),
        "bn2_var": 1.0 + 0.25 * jax.random.uniform(ks[9], (out_ch,), jnp.float32),
    }


# Pure-JAX reference (same bf16 matmul operands / f32 accumulation / eval BN).
def residual_block_ref(x_nchw, params, eps=1e-5):
    def conv(x, w):
        return jax.lax.conv_general_dilated(
            x.astype(jnp.bfloat16), w.astype(jnp.bfloat16),
            window_strides=(1, 1), padding=((1, 1), (1, 1)),
            dimension_numbers=("NCHW", "OIHW", "NCHW"),
            preferred_element_type=jnp.float32)

    def bn(x, g, b, m, v):
        s = g * jax.lax.rsqrt(v + eps)
        return x * s[None, :, None, None] + (b - m * s)[None, :, None, None]

    y = conv(x_nchw, params["w1"])
    y = jnp.maximum(bn(y, params["bn1_gamma"], params["bn1_beta"],
                       params["bn1_mean"], params["bn1_var"]), 0.0)
    y = conv(y, params["w2"])
    y = bn(y, params["bn2_gamma"], params["bn2_beta"],
           params["bn2_mean"], params["bn2_var"])
    return jnp.maximum(y + x_nchw.astype(jnp.float32), 0.0)


# --------------------------------- main --------------------------------------

if __name__ == "__main__":
    # Identity shortcut => in_ch == out_ch, stride == 1.
    # channels = 128 so the channel axis fills the 128-lane vreg dimension.
    B, C, H, W = 2, 128, 16, 16

    key = jax.random.PRNGKey(0)
    k_params, k_x = jax.random.split(key)
    params = init_residual_block_params(k_params, C, C)
    x = jax.random.normal(k_x, (B, C, H, W), dtype=jnp.float32)

    fwd = jax.jit(functools.partial(residual_block_forward, block_h=8))
    out = jax.block_until_ready(fwd(x, params))

    assert out.shape == (B, C, H, W)
    assert bool(jnp.all(jnp.isfinite(out)))

    ref = jax.block_until_ready(residual_block_ref(x, params))
    rel_err = float(jnp.max(jnp.abs(out - ref)) / (jnp.max(jnp.abs(ref)) + 1e-6))
    assert rel_err < 1e-2, f"mismatch vs reference: rel_err={rel_err}"

    print("KERNEL_OK")
</pallas_src>

<mosaic_0001>
module attributes {stable_mosaic.version = 11 : i64} {
  func.func @_conv3x3_bn_act_kernel(%arg0: i32, %arg1: i32, %arg2: memref<1x18x18x128xf32, #tpu.memory_space<vmem>>, %arg3: memref<9x128x128xbf16, #tpu.memory_space<vmem>>, %arg4: memref<1x128xf32, #tpu.memory_space<vmem>>, %arg5: memref<1x128xf32, #tpu.memory_space<vmem>>, %arg6: memref<1x8x16x128xf32, #tpu.memory_space<vmem>>) attributes {dimension_semantics = [#tpu.dimension_semantics<parallel>, #tpu.dimension_semantics<arbitrary>], iteration_bounds = array<i64: 2, 2>, scalar_prefetch = 0 : i64, scratch_operands = 0 : i64, tpu.core_type = #tpu.core_type<tc>, window_params = [{transform_indices = @transform_0, window_bounds = array<i64: 1, 18, 18, 128>}, {pipeline_mode = #tpu.pipeline_mode<synchronous>, transform_indices = @transform_1, window_bounds = array<i64: 9, 128, 128>}, {pipeline_mode = #tpu.pipeline_mode<synchronous>, transform_indices = @transform_2, window_bounds = array<i64: 1, 128>}, {pipeline_mode = #tpu.pipeline_mode<synchronous>, transform_indices = @transform_3, window_bounds = array<i64: 1, 128>}, {transform_indices = @transform_4, window_bounds = array<i64: 1, 8, 16, 128>}]} {
    %c8_i32 = arith.constant 8 : i32
    %0 = arith.muli %arg1, %c8_i32 : i32
    %1 = tpu.assume_multiple %0, 8 : i32
    %cst = arith.constant 0.000000e+00 : f32
    %2 = vector.broadcast %cst : f32 to vector<128x128xf32>
    %c0_i32 = arith.constant 0 : i32
    %3 = arith.addi %1, %c0_i32 : i32
    %c0 = arith.constant 0 : index
    %4 = arith.index_cast %3 : i32 to index
    %c0_0 = arith.constant 0 : index
    %c0_1 = arith.constant 0 : index
    %5 = vector.load %arg2[%c0, %4, %c0_0, %c0_1] : memref<1x18x18x128xf32, #tpu.memory_space<vmem>>, vector<1x8x16x128xf32>
    %6 = vector.shape_cast %5 : vector<1x8x16x128xf32> to vector<128x128xf32>
    %7 = arith.truncf %6 : vector<128x128xf32> to vector<128x128xbf16>
    %c0_2 = arith.constant 0 : index
    %c0_3 = arith.constant 0 : index
    %c0_4 = arith.constant 0 : index
    %8 = vector.load %arg3[%c0_2, %c0_3, %c0_4] : memref<9x128x128xbf16, #tpu.memory_space<vmem>>, vector<1x128x128xbf16>
    %9 = vector.shape_cast %8 : vector<1x128x128xbf16> to vector<128x128xbf16>
    %cst_5 = arith.constant dense<0.000000e+00> : vector<128x128xf32>
    %10 = tpu.matmul %7, %9, %cst_5 {dimension_numbers = #tpu.dot_dimension_numbers<[1], [0], [0], [1], [0, 0, 1, 1], [], []>} : vector<128x128xbf16>, vector<128x128xbf16>, vector<128x128xf32> -> vector<128x128xf32>
    %11 = arith.addf %2, %10 : vector<128x128xf32>
    %c0_i32_6 = arith.constant 0 : i32
    %12 = arith.addi %1, %c0_i32_6 : i32
    %c0_7 = arith.constant 0 : index
    %13 = arith.index_cast %12 : i32 to index
    %c1 = arith.constant 1 : index
    %c0_8 = arith.constant 0 : index
    %14 = vector.load %arg2[%c0_7, %13, %c1, %c0_8] : memref<1x18x18x128xf32, #tpu.memory_space<vmem>>, vector<1x8x16x128xf32>
    %15 = vector.shape_cast %14 : vector<1x8x16x128xf32> to vector<128x128xf32>
    %16 = arith.truncf %15 : vector<128x128xf32> to vector<128x128xbf16>
    %c1_9 = arith.constant 1 : index
    %c0_10 = arith.constant 0 : index
    %c0_11 = arith.constant 0 : index
    %17 = vector.load %arg3[%c1_9, %c0_10, %c0_11] : memref<9x128x128xbf16, #tpu.memory_space<vmem>>, vector<1x128x128xbf16>
    %18 = vector.shape_cast %17 : vector<1x128x128xbf16> to vector<128x128xbf16>
    %cst_12 = arith.constant dense<0.000000e+00> : vector<128x128xf32>
    %19 = tpu.matmul %16, %18, %cst_12 {dimension_numbers = #tpu.dot_dimension_numbers<[1], [0], [0], [1], [0, 0, 1, 1], [], []>} : vector<128x128xbf16>, vector<128x128xbf16>, vector<128x128xf32> -> vector<128x128xf32>
    %20 = arith.addf %11, %19 : vector<128x128xf32>
    %c0_i32_13 = arith.constant 0 : i32
    %21 = arith.addi %1, %c0_i32_13 : i32
    %c0_14 = arith.constant 0 : index
    %22 = arith.index_cast %21 : i32 to index
    %c2 = arith.constant 2 : index
    %c0_15 = arith.constant 0 : index
    %23 = vector.load %arg2[%c0_14, %22, %c2, %c0_15] : memref<1x18x18x128xf32, #tpu.memory_space<vmem>>, vector<1x8x16x128xf32>
    %24 = vector.shape_cast %23 : vector<1x8x16x128xf32> to vector<128x128xf32>
    %25 = arith.truncf %24 : vector<128x128xf32> to vector<128x128xbf16>
    %c2_16 = arith.constant 2 : index
    %c0_17 = arith.constant 0 : index
    %c0_18 = arith.constant 0 : index
    %26 = vector.load %arg3[%c2_16, %c0_17, %c0_18] : memref<9x128x128xbf16, #tpu.memory_space<vmem>>, vector<1x128x128xbf16>
    %27 = vector.shape_cast %26 : vector<1x128x128xbf16> to vector<128x128xbf16>
    %cst_19 = arith.constant dense<0.000000e+00> : vector<128x128xf32>
    %28 = tpu.matmul %25, %27, %cst_19 {dimension_numbers = #tpu.dot_dimension_numbers<[1], [0], [0], [1], [0, 0, 1, 1], [], []>} : vector<128x128xbf16>, vector<128x128xbf16>, vector<128x128xf32> -> vector<128x128xf32>
    %29 = arith.addf %20, %28 : vector<128x128xf32>
    %c1_i32 = arith.constant 1 : i32
    %30 = arith.addi %1, %c1_i32 : i32
    %c0_20 = arith.constant 0 : index
    %31 = arith.index_cast %30 : i32 to index
    %c0_21 = arith.constant 0 : index
    %c0_22 = arith.constant 0 : index
    %32 = vector.load %arg2[%c0_20, %31, %c0_21, %c0_22] : memref<1x18x18x128xf32, #tpu.memory_space<vmem>>, vector<1x8x16x128xf32>
    %33 = vector.shape_cast %32 : vector<1x8x16x128xf32> to vector<128x128xf32>
    %34 = arith.truncf %33 : vector<128x128xf32> to vector<128x128xbf16>
    %c3 = arith.constant 3 : index
    %c0_23 = arith.constant 0 : index
    %c0_24 = arith.constant 0 : index
    %35 = vector.load %arg3[%c3, %c0_23, %c0_24] : memref<9x128x128xbf16, #tpu.memory_space<vmem>>, vector<1x128x128xbf16>
    %36 = vector.shape_cast %35 : vector<1x128x128xbf16> to vector<128x128xbf16>
    %cst_25 = arith.constant dense<0.000000e+00> : vector<128x128xf32>
    %37 = tpu.matmul %34, %36, %cst_25 {dimension_numbers = #tpu.dot_dimension_numbers<[1], [0], [0], [1], [0, 0, 1, 1], [], []>} : vector<128x128xbf16>, vector<128x128xbf16>, vector<128x128xf32> -> vector<128x128xf32>
    %38 = arith.addf %29, %37 : vector<128x128xf32>
    %c1_i32_26 = arith.constant 1 : i32
    %39 = arith.addi %1, %c1_i32_26 : i32
    %c0_27 = arith.constant 0 : index
    %40 = arith.index_cast %39 : i32 to index
    %c1_28 = arith.constant 1 : index
    %c0_29 = arith.constant 0 : index
    %41 = vector.load %arg2[%c0_27, %40, %c1_28, %c0_29] : memref<1x18x18x128xf32, #tpu.memory_space<vmem>>, vector<1x8x16x128xf32>
    %42 = vector.shape_cast %41 : vector<1x8x16x128xf32> to vector<128x128xf32>
    %43 = arith.truncf %42 : vector<128x128xf32> to vector<128x128xbf16>
    %c4 = arith.constant 4 : index
    %c0_30 = arith.constant 0 : index
    %c0_31 = arith.constant 0 : index
    %44 = vector.load %arg3[%c4, %c0_30, %c0_31] : memref<9x128x128xbf16, #tpu.memory_space<vmem>>, vector<1x128x128xbf16>
    %45 = vector.shape_cast %44 : vector<1x128x128xbf16> to vector<128x128xbf16>
    %cst_32 = arith.constant dense<0.000000e+00> : vector<128x128xf32>
    %46 = tpu.matmul %43, %45, %cst_32 {dimension_numbers = #tpu.dot_dimension_numbers<[1], [0], [0], [1], [0, 0, 1, 1], [], []>} : vector<128x128xbf16>, vector<128x128xbf16>, vector<128x128xf32> -> vector<128x128xf32>
    %47 = arith.addf %38, %46 : vector<128x128xf32>
    %c1_i32_33 = arith.constant 1 : i32
    %48 = arith.addi %1, %c1_i32_33 : i32
    %c0_34 = arith.constant 0 : index
    %49 = arith.index_cast %48 : i32 to index
    %c2_35 = arith.constant 2 : index
    %c0_36 = arith.constant 0 : index
    %50 = vector.load %arg2[%c0_34, %49, %c2_35, %c0_36] : memref<1x18x18x128xf32, #tpu.memory_space<vmem>>, vector<1x8x16x128xf32>
    %51 = vector.shape_cast %50 : vector<1x8x16x128xf32> to vector<128x128xf32>
    %52 = arith.truncf %51 : vector<128x128xf32> to vector<128x128xbf16>
    %c5 = arith.constant 5 : index
    %c0_37 = arith.constant 0 : index
    %c0_38 = arith.constant 0 : index
    %53 = vector.load %arg3[%c5, %c0_37, %c0_38] : memref<9x128x128xbf16, #tpu.memory_space<vmem>>, vector<1x128x128xbf16>
    %54 = vector.shape_cast %53 : vector<1x128x128xbf16> to vector<128x128xbf16>
    %cst_39 = arith.constant dense<0.000000e+00> : vector<128x128xf32>
    %55 = tpu.matmul %52, %54, %cst_39 {dimension_numbers = #tpu.dot_dimension_numbers<[1], [0], [0], [1], [0, 0, 1, 1], [], []>} : vector<128x128xbf16>, vector<128x128xbf16>, vector<128x128xf32> -> vector<128x128xf32>
    %56 = arith.addf %47, %55 : vector<128x128xf32>
    %c2_i32 = arith.constant 2 : i32
    %57 = arith.addi %1, %c2_i32 : i32
    %c0_40 = arith.constant 0 : index
    %58 = arith.index_cast %57 : i32 to index
    %c0_41 = arith.constant 0 : index
    %c0_42 = arith.constant 0 : index
    %59 = vector.load %arg2[%c0_40, %58, %c0_41, %c0_42] : memref<1x18x18x128xf32, #tpu.memory_space<vmem>>, vector<1x8x16x128xf32>
    %60 = vector.shape_cast %59 : vector<1x8x16x128xf32> to vector<128x128xf32>
    %61 = arith.truncf %60 : vector<128x128xf32> to vector<128x128xbf16>
    %c6 = arith.constant 6 : index
    %c0_43 = arith.constant 0 : index
    %c0_44 = arith.constant 0 : index
    %62 = vector.load %arg3[%c6, %c0_43, %c0_44] : memref<9x128x128xbf16, #tpu.memory_space<vmem>>, vector<1x128x128xbf16>
    %63 = vector.shape_cast %62 : vector<1x128x128xbf16> to vector<128x128xbf16>
    %cst_45 = arith.constant dense<0.000000e+00> : vector<128x128xf32>
    %64 = tpu.matmul %61, %63, %cst_45 {dimension_numbers = #tpu.dot_dimension_numbers<[1], [0], [0], [1], [0, 0, 1, 1], [], []>} : vector<128x128xbf16>, vector<128x128xbf16>, vector<128x128xf32> -> vector<128x128xf32>
    %65 = arith.addf %56, %64 : vector<128x128xf32>
    %c2_i32_46 = arith.constant 2 : i32
    %66 = arith.addi %1, %c2_i32_46 : i32
    %c0_47 = arith.constant 0 : index
    %67 = arith.index_cast %66 : i32 to index
    %c1_48 = arith.constant 1 : index
    %c0_49 = arith.constant 0 : index
    %68 = vector.load %arg2[%c0_47, %67, %c1_48, %c0_49] : memref<1x18x18x128xf32, #tpu.memory_space<vmem>>, vector<1x8x16x128xf32>
    %69 = vector.shape_cast %68 : vector<1x8x16x128xf32> to vector<128x128xf32>
    %70 = arith.truncf %69 : vector<128x128xf32> to vector<128x128xbf16>
    %c7 = arith.constant 7 : index
    %c0_50 = arith.constant 0 : index
    %c0_51 = arith.constant 0 : index
    %71 = vector.load %arg3[%c7, %c0_50, %c0_51] : memref<9x128x128xbf16, #tpu.memory_space<vmem>>, vector<1x128x128xbf16>
    %72 = vector.shape_cast %71 : vector<1x128x128xbf16> to vector<128x128xbf16>
    %cst_52 = arith.constant dense<0.000000e+00> : vector<128x128xf32>
    %73 = tpu.matmul %70, %72, %cst_52 {dimension_numbers = #tpu.dot_dimension_numbers<[1], [0], [0], [1], [0, 0, 1, 1], [], []>} : vector<128x128xbf16>, vector<128x128xbf16>, vector<128x128xf32> -> vector<128x128xf32>
    %74 = arith.addf %65, %73 : vector<128x128xf32>
    %c2_i32_53 = arith.constant 2 : i32
    %75 = arith.addi %1, %c2_i32_53 : i32
    %c0_54 = arith.constant 0 : index
    %76 = arith.index_cast %75 : i32 to index
    %c2_55 = arith.constant 2 : index
    %c0_56 = arith.constant 0 : index
    %77 = vector.load %arg2[%c0_54, %76, %c2_55, %c0_56] : memref<1x18x18x128xf32, #tpu.memory_space<vmem>>, vector<1x8x16x128xf32>
    %78 = vector.shape_cast %77 : vector<1x8x16x128xf32> to vector<128x128xf32>
    %79 = arith.truncf %78 : vector<128x128xf32> to vector<128x128xbf16>
    %c8 = arith.constant 8 : index
    %c0_57 = arith.constant 0 : index
    %c0_58 = arith.constant 0 : index
    %80 = vector.load %arg3[%c8, %c0_57, %c0_58] : memref<9x128x128xbf16, #tpu.memory_space<vmem>>, vector<1x128x128xbf16>
    %81 = vector.shape_cast %80 : vector<1x128x128xbf16> to vector<128x128xbf16>
    %cst_59 = arith.constant dense<0.000000e+00> : vector<128x128xf32>
    %82 = tpu.matmul %79, %81, %cst_59 {dimension_numbers = #tpu.dot_dimension_numbers<[1], [0], [0], [1], [0, 0, 1, 1], [], []>} : vector<128x128xbf16>, vector<128x128xbf16>, vector<128x128xf32> -> vector<128x128xf32>
    %83 = arith.addf %74, %82 : vector<128x128xf32>
    %c0_60 = arith.constant 0 : index
    %c0_61 = arith.constant 0 : index
    %84 = vector.load %arg4[%c0_60, %c0_61] : memref<1x128xf32, #tpu.memory_space<vmem>>, vector<1x128xf32>
    %85 = vector.broadcast %84 : vector<1x128xf32> to vector<128x128xf32>
    %86 = arith.mulf %83, %85 : vector<128x128xf32>
    %c0_62 = arith.constant 0 : index
    %c0_63 = arith.constant 0 : index
    %87 = vector.load %arg5[%c0_62, %c0_63] : memref<1x128xf32, #tpu.memory_space<vmem>>, vector<1x128xf32>
    %88 = vector.broadcast %87 : vector<1x128xf32> to vector<128x128xf32>
    %89 = arith.addf %86, %88 : vector<128x128xf32>
    %cst_64 = arith.constant 0.000000e+00 : f32
    %90 = vector.broadcast %cst_64 : f32 to vector<128x128xf32>
    %91 = arith.maximumf %89, %90 : vector<128x128xf32>
    %92 = vector.shape_cast %91 : vector<128x128xf32> to vector<1x8x16x128xf32>
    %c0_65 = arith.constant 0 : index
    %c0_66 = arith.constant 0 : index
    %c0_67 = arith.constant 0 : index
    %c0_68 = arith.constant 0 : index
    %93 = vector.load %arg6[%c0_65, %c0_66, %c0_67, %c0_68] : memref<1x8x16x128xf32, #tpu.memory_space<vmem>>, vector<1x8x16x128xf32>
    tpu.vector_store %arg6[%c0_65, %c0_66, %c0_67, %c0_68], %92 {strides = array<i32>} : memref<1x8x16x128xf32, #tpu.memory_space<vmem>>, vector<1x8x16x128xf32>,
    return
  }
  func.func @transform_0(%arg0: i32, %arg1: i32) -> (i32, i32, i32, i32) {
    %c0_i32 = arith.constant 0 : i32
    %c0_i32_0 = arith.constant 0 : i32
    %c0_i32_1 = arith.constant 0 : i32
    %c0_i32_2 = arith.constant 0 : i32
    return %arg0, %c0_i32, %c0_i32_0, %c0_i32_1 : i32, i32, i32, i32
  }
  func.func @transform_1(%arg0: i32, %arg1: i32) -> (i32, i32, i32) {
    %c0_i32 = arith.constant 0 : i32
    %c0_i32_0 = arith.constant 0 : i32
    %c0_i32_1 = arith.constant 0 : i32
    %c0_i32_2 = arith.constant 0 : i32
    return %c0_i32, %c0_i32_0, %c0_i32_1 : i32, i32, i32
  }
  func.func @transform_2(%arg0: i32, %arg1: i32) -> (i32, i32) {
    %c0_i32 = arith.constant 0 : i32
    %c0_i32_0 = arith.constant 0 : i32
    %c0_i32_1 = arith.constant 0 : i32
    return %c0_i32, %c0_i32_0 : i32, i32
  }
  func.func @transform_3(%arg0: i32, %arg1: i32) -> (i32, i32) {
    %c0_i32 = arith.constant 0 : i32
    %c0_i32_0 = arith.constant 0 : i32
    %c0_i32_1 = arith.constant 0 : i32
    return %c0_i32, %c0_i32_0 : i32, i32
  }
  func.func @transform_4(%arg0: i32, %arg1: i32) -> (i32, i32, i32, i32) {
    %c0_i32 = arith.constant 0 : i32
    %c0_i32_0 = arith.constant 0 : i32
    %c0_i32_1 = arith.constant 0 : i32
    return %arg0, %arg1, %c0_i32, %c0_i32_0 : i32, i32, i32, i32
  }
}

module attributes {stable_mosaic.version = 11 : i64} {
  func.func @_conv3x3_bn_act_kernel(%arg0: i32, %arg1: i32, %arg2: memref<1x18x18x128xf32, #tpu.memory_space<vmem>>, %arg3: memref<9x128x128xbf16, #tpu.memory_space<vmem>>, %arg4: memref<1x128xf32, #tpu.memory_space<vmem>>, %arg5: memref<1x128xf32, #tpu.memory_space<vmem>>, %arg6: memref<1x8x16x128xf32, #tpu.memory_space<vmem>>, %arg7: memref<1x8x16x128xf32, #tpu.memory_space<vmem>>) attributes {dimension_semantics = [#tpu.dimension_semantics<parallel>, #tpu.dimension_semantics<arbitrary>], iteration_bounds = array<i64: 2, 2>, scalar_prefetch = 0 : i64, scratch_operands = 0 : i64, tpu.core_type = #tpu.core_type<tc>, window_params = [{transform_indices = @transform_0, window_bounds = array<i64: 1, 18, 18, 128>}, {pipeline_mode = #tpu.pipeline_mode<synchronous>, transform_indices = @transform_1, window_bounds = array<i64: 9, 128, 128>}, {pipeline_mode = #tpu.pipeline_mode<synchronous>, transform_indices = @transform_2, window_bounds = array<i64: 1, 128>}, {pipeline_mode = #tpu.pipeline_mode<synchronous>, transform_indices = @transform_3, window_bounds = array<i64: 1, 128>}, {transform_indices = @transform_4, window_bounds = array<i64: 1, 8, 16, 128>}, {transform_indices = @transform_5, window_bounds = array<i64: 1, 8, 16, 128>}]} {
    %c8_i32 = arith.constant 8 : i32
    %0 = arith.muli %arg1, %c8_i32 : i32
    %1 = tpu.assume_multiple %0, 8 : i32
    %cst = arith.constant 0.000000e+00 : f32
    %2 = vector.broadcast %cst : f32 to vector<128x128xf32>
    %c0_i32 = arith.constant 0 : i32
    %3 = arith.addi %1, %c0_i32 : i32
    %c0 = arith.constant 0 : index
    %4 = arith.index_cast %3 : i32 to index
    %c0_0 = arith.constant 0 : index
    %c0_1 = arith.constant 0 : index
    %5 = vector.load %arg2[%c0, %4, %c0_0, %c0_1] : memref<1x18x18x128xf32, #tpu.memory_space<vmem>>, vector<1x8x16x128xf32>
    %6 = vector.shape_cast %5 : vector<1x8x16x128xf32> to vector<128x128xf32>
    %7 = arith.truncf %6 : vector<128x128xf32> to vector<128x128xbf16>
    %c0_2 = arith.constant 0 : index
    %c0_3 = arith.constant 0 : index
    %c0_4 = arith.constant 0 : index
    %8 = vector.load %arg3[%c0_2, %c0_3, %c0_4] : memref<9x128x128xbf16, #tpu.memory_space<vmem>>, vector<1x128x128xbf16>
    %9 = vector.shape_cast %8 : vector<1x128x128xbf16> to vector<128x128xbf16>
    %cst_5 = arith.constant dense<0.000000e+00> : vector<128x128xf32>
    %10 = tpu.matmul %7, %9, %cst_5 {dimension_numbers = #tpu.dot_dimension_numbers<[1], [0], [0], [1], [0, 0, 1, 1], [], []>} : vector<128x128xbf16>, vector<128x128xbf16>, vector<128x128xf32> -> vector<128x128xf32>
    %11 = arith.addf %2, %10 : vector<128x128xf32>
    %c0_i32_6 = arith.constant 0 : i32
    %12 = arith.addi %1, %c0_i32_6 : i32
    %c0_7 = arith.constant 0 : index
    %13 = arith.index_cast %12 : i32 to index
    %c1 = arith.constant 1 : index
    %c0_8 = arith.constant 0 : index
    %14 = vector.load %arg2[%c0_7, %13, %c1, %c0_8] : memref<1x18x18x128xf32, #tpu.memory_space<vmem>>, vector<1x8x16x128xf32>
    %15 = vector.shape_cast %14 : vector<1x8x16x128xf32> to vector<128x128xf32>
    %16 = arith.truncf %15 : vector<128x128xf32> to vector<128x128xbf16>
    %c1_9 = arith.constant 1 : index
    %c0_10 = arith.constant 0 : index
    %c0_11 = arith.constant 0 : index
    %17 = vector.load %arg3[%c1_9, %c0_10, %c0_11] : memref<9x128x128xbf16, #tpu.memory_space<vmem>>, vector<1x128x128xbf16>
    %18 = vector.shape_cast %17 : vector<1x128x128xbf16> to vector<128x128xbf16>
    %cst_12 = arith.constant dense<0.000000e+00> : vector<128x128xf32>
    %19 = tpu.matmul %16, %18, %cst_12 {dimension_numbers = #tpu.dot_dimension_numbers<[1], [0], [0], [1], [0, 0, 1, 1], [], []>} : vector<128x128xbf16>, vector<128x128xbf16>, vector<128x128xf32> -> vector<128x128xf32>
    %20 = arith.addf %11, %19 : vector<128x128xf32>
    %c0_i32_13 = arith.constant 0 : i32
    %21 = arith.addi %1, %c0_i32_13 : i32
    %c0_14 = arith.constant 0 : index
    %22 = arith.index_cast %21 : i32 to index
    %c2 = arith.constant 2 : index
    %c0_15 = arith.constant 0 : index
    %23 = vector.load %arg2[%c0_14, %22, %c2, %c0_15] : memref<1x18x18x128xf32, #tpu.memory_space<vmem>>, vector<1x8x16x128xf32>
    %24 = vector.shape_cast %23 : vector<1x8x16x128xf32> to vector<128x128xf32>
    %25 = arith.truncf %24 : vector<128x128xf32> to vector<128x128xbf16>
    %c2_16 = arith.constant 2 : index
    %c0_17 = arith.constant 0 : index
    %c0_18 = arith.constant 0 : index
    %26 = vector.load %arg3[%c2_16, %c0_17, %c0_18] : memref<9x128x128xbf16, #tpu.memory_space<vmem>>, vector<1x128x128xbf16>
    %27 = vector.shape_cast %26 : vector<1x128x128xbf16> to vector<128x128xbf16>
    %cst_19 = arith.constant dense<0.000000e+00> : vector<128x128xf32>
    %28 = tpu.matmul %25, %27, %cst_19 {dimension_numbers = #tpu.dot_dimension_numbers<[1], [0], [0], [1], [0, 0, 1, 1], [], []>} : vector<128x128xbf16>, vector<128x128xbf16>, vector<128x128xf32> -> vector<128x128xf32>
    %29 = arith.addf %20, %28 : vector<128x128xf32>
    %c1_i32 = arith.constant 1 : i32
    %30 = arith.addi %1, %c1_i32 : i32
    %c0_20 = arith.constant 0 : index
    %31 = arith.index_cast %30 : i32 to index
    %c0_21 = arith.constant 0 : index
    %c0_22 = arith.constant 0 : index
    %32 = vector.load %arg2[%c0_20, %31, %c0_21, %c0_22] : memref<1x18x18x128xf32, #tpu.memory_space<vmem>>, vector<1x8x16x128xf32>
    %33 = vector.shape_cast %32 : vector<1x8x16x128xf32> to vector<128x128xf32>
    %34 = arith.truncf %33 : vector<128x128xf32> to vector<128x128xbf16>
    %c3 = arith.constant 3 : index
    %c0_23 = arith.constant 0 : index
    %c0_24 = arith.constant 0 : index
    %35 = vector.load %arg3[%c3, %c0_23, %c0_24] : memref<9x128x128xbf16, #tpu.memory_space<vmem>>, vector<1x128x128xbf16>
    %36 = vector.shape_cast %35 : vector<1x128x128xbf16> to vector<128x128xbf16>
    %cst_25 = arith.constant dense<0.000000e+00> : vector<128x128xf32>
    %37 = tpu.matmul %34, %36, %cst_25 {dimension_numbers = #tpu.dot_dimension_numbers<[1], [0], [0], [1], [0, 0, 1, 1], [], []>} : vector<128x128xbf16>, vector<128x128xbf16>, vector<128x128xf32> -> vector<128x128xf32>
    %38 = arith.addf %29, %37 : vector<128x128xf32>
    %c1_i32_26 = arith.constant 1 : i32
    %39 = arith.addi %1, %c1_i32_26 : i32
    %c0_27 = arith.constant 0 : index
    %40 = arith.index_cast %39 : i32 to index
    %c1_28 = arith.constant 1 : index
    %c0_29 = arith.constant 0 : index
    %41 = vector.load %arg2[%c0_27, %40, %c1_28, %c0_29] : memref<1x18x18x128xf32, #tpu.memory_space<vmem>>, vector<1x8x16x128xf32>
    %42 = vector.shape_cast %41 : vector<1x8x16x128xf32> to vector<128x128xf32>
    %43 = arith.truncf %42 : vector<128x128xf32> to vector<128x128xbf16>
    %c4 = arith.constant 4 : index
    %c0_30 = arith.constant 0 : index
    %c0_31 = arith.constant 0 : index
    %44 = vector.load %arg3[%c4, %c0_30, %c0_31] : memref<9x128x128xbf16, #tpu.memory_space<vmem>>, vector<1x128x128xbf16>
    %45 = vector.shape_cast %44 : vector<1x128x128xbf16> to vector<128x128xbf16>
    %cst_32 = arith.constant dense<0.000000e+00> : vector<128x128xf32>
    %46 = tpu.matmul %43, %45, %cst_32 {dimension_numbers = #tpu.dot_dimension_numbers<[1], [0], [0], [1], [0, 0, 1, 1], [], []>} : vector<128x128xbf16>, vector<128x128xbf16>, vector<128x128xf32> -> vector<128x128xf32>
    %47 = arith.addf %38, %46 : vector<128x128xf32>
    %c1_i32_33 = arith.constant 1 : i32
    %48 = arith.addi %1, %c1_i32_33 : i32
    %c0_34 = arith.constant 0 : index
    %49 = arith.index_cast %48 : i32 to index
    %c2_35 = arith.constant 2 : index
    %c0_36 = arith.constant 0 : index
    %50 = vector.load %arg2[%c0_34, %49, %c2_35, %c0_36] : memref<1x18x18x128xf32, #tpu.memory_space<vmem>>, vector<1x8x16x128xf32>
    %51 = vector.shape_cast %50 : vector<1x8x16x128xf32> to vector<128x128xf32>
    %52 = arith.truncf %51 : vector<128x128xf32> to vector<128x128xbf16>
    %c5 = arith.constant 5 : index
    %c0_37 = arith.constant 0 : index
    %c0_38 = arith.constant 0 : index
    %53 = vector.load %arg3[%c5, %c0_37, %c0_38] : memref<9x128x128xbf16, #tpu.memory_space<vmem>>, vector<1x128x128xbf16>
    %54 = vector.shape_cast %53 : vector<1x128x128xbf16> to vector<128x128xbf16>
    %cst_39 = arith.constant dense<0.000000e+00> : vector<128x128xf32>
    %55 = tpu.matmul %52, %54, %cst_39 {dimension_numbers = #tpu.dot_dimension_numbers<[1], [0], [0], [1], [0, 0, 1, 1], [], []>} : vector<128x128xbf16>, vector<128x128xbf16>, vector<128x128xf32> -> vector<128x128xf32>
    %56 = arith.addf %47, %55 : vector<128x128xf32>
    %c2_i32 = arith.constant 2 : i32
    %57 = arith.addi %1, %c2_i32 : i32
    %c0_40 = arith.constant 0 : index
    %58 = arith.index_cast %57 : i32 to index
    %c0_41 = arith.constant 0 : index
    %c0_42 = arith.constant 0 : index
    %59 = vector.load %arg2[%c0_40, %58, %c0_41, %c0_42] : memref<1x18x18x128xf32, #tpu.memory_space<vmem>>, vector<1x8x16x128xf32>
    %60 = vector.shape_cast %59 : vector<1x8x16x128xf32> to vector<128x128xf32>
    %61 = arith.truncf %60 : vector<128x128xf32> to vector<128x128xbf16>
    %c6 = arith.constant 6 : index
    %c0_43 = arith.constant 0 : index
    %c0_44 = arith.constant 0 : index
    %62 = vector.load %arg3[%c6, %c0_43, %c0_44] : memref<9x128x128xbf16, #tpu.memory_space<vmem>>, vector<1x128x128xbf16>
    %63 = vector.shape_cast %62 : vector<1x128x128xbf16> to vector<128x128xbf16>
    %cst_45 = arith.constant dense<0.000000e+00> : vector<128x128xf32>
    %64 = tpu.matmul %61, %63, %cst_45 {dimension_numbers = #tpu.dot_dimension_numbers<[1], [0], [0], [1], [0, 0, 1, 1], [], []>} : vector<128x128xbf16>, vector<128x128xbf16>, vector<128x128xf32> -> vector<128x128xf32>
    %65 = arith.addf %56, %64 : vector<128x128xf32>
    %c2_i32_46 = arith.constant 2 : i32
    %66 = arith.addi %1, %c2_i32_46 : i32
    %c0_47 = arith.constant 0 : index
    %67 = arith.index_cast %66 : i32 to index
    %c1_48 = arith.constant 1 : index
    %c0_49 = arith.constant 0 : index
    %68 = vector.load %arg2[%c0_47, %67, %c1_48, %c0_49] : memref<1x18x18x128xf32, #tpu.memory_space<vmem>>, vector<1x8x16x128xf32>
    %69 = vector.shape_cast %68 : vector<1x8x16x128xf32> to vector<128x128xf32>
    %70 = arith.truncf %69 : vector<128x128xf32> to vector<128x128xbf16>
    %c7 = arith.constant 7 : index
    %c0_50 = arith.constant 0 : index
    %c0_51 = arith.constant 0 : index
    %71 = vector.load %arg3[%c7, %c0_50, %c0_51] : memref<9x128x128xbf16, #tpu.memory_space<vmem>>, vector<1x128x128xbf16>
    %72 = vector.shape_cast %71 : vector<1x128x128xbf16> to vector<128x128xbf16>
    %cst_52 = arith.constant dense<0.000000e+00> : vector<128x128xf32>
    %73 = tpu.matmul %70, %72, %cst_52 {dimension_numbers = #tpu.dot_dimension_numbers<[1], [0], [0], [1], [0, 0, 1, 1], [], []>} : vector<128x128xbf16>, vector<128x128xbf16>, vector<128x128xf32> -> vector<128x128xf32>
    %74 = arith.addf %65, %73 : vector<128x128xf32>
    %c2_i32_53 = arith.constant 2 : i32
    %75 = arith.addi %1, %c2_i32_53 : i32
    %c0_54 = arith.constant 0 : index
    %76 = arith.index_cast %75 : i32 to index
    %c2_55 = arith.constant 2 : index
    %c0_56 = arith.constant 0 : index
    %77 = vector.load %arg2[%c0_54, %76, %c2_55, %c0_56] : memref<1x18x18x128xf32, #tpu.memory_space<vmem>>, vector<1x8x16x128xf32>
    %78 = vector.shape_cast %77 : vector<1x8x16x128xf32> to vector<128x128xf32>
    %79 = arith.truncf %78 : vector<128x128xf32> to vector<128x128xbf16>
    %c8 = arith.constant 8 : index
    %c0_57 = arith.constant 0 : index
    %c0_58 = arith.constant 0 : index
    %80 = vector.load %arg3[%c8, %c0_57, %c0_58] : memref<9x128x128xbf16, #tpu.memory_space<vmem>>, vector<1x128x128xbf16>
    %81 = vector.shape_cast %80 : vector<1x128x128xbf16> to vector<128x128xbf16>
    %cst_59 = arith.constant dense<0.000000e+00> : vector<128x128xf32>
    %82 = tpu.matmul %79, %81, %cst_59 {dimension_numbers = #tpu.dot_dimension_numbers<[1], [0], [0], [1], [0, 0, 1, 1], [], []>} : vector<128x128xbf16>, vector<128x128xbf16>, vector<128x128xf32> -> vector<128x128xf32>
    %83 = arith.addf %74, %82 : vector<128x128xf32>
    %c0_60 = arith.constant 0 : index
    %c0_61 = arith.constant 0 : index
    %84 = vector.load %arg4[%c0_60, %c0_61] : memref<1x128xf32, #tpu.memory_space<vmem>>, vector<1x128xf32>
    %85 = vector.broadcast %84 : vector<1x128xf32> to vector<128x128xf32>
    %86 = arith.mulf %83, %85 : vector<128x128xf32>
    %c0_62 = arith.constant 0 : index
    %c0_63 = arith.constant 0 : index
    %87 = vector.load %arg5[%c0_62, %c0_63] : memref<1x128xf32, #tpu.memory_space<vmem>>, vector<1x128xf32>
    %88 = vector.broadcast %87 : vector<1x128xf32> to vector<128x128xf32>
    %89 = arith.addf %86, %88 : vector<128x128xf32>
    %c0_64 = arith.constant 0 : index
    %c0_65 = arith.constant 0 : index
    %c0_66 = arith.constant 0 : index
    %c0_67 = arith.constant 0 : index
    %90 = vector.load %arg6[%c0_64, %c0_65, %c0_66, %c0_67] : memref<1x8x16x128xf32, #tpu.memory_space<vmem>>, vector<1x8x16x128xf32>
    %91 = vector.shape_cast %90 : vector<1x8x16x128xf32> to vector<128x128xf32>
    %92 = arith.addf %89, %91 : vector<128x128xf32>
    %cst_68 = arith.constant 0.000000e+00 : f32
    %93 = vector.broadcast %cst_68 : f32 to vector<128x128xf32>
    %94 = arith.maximumf %92, %93 : vector<128x128xf32>
    %95 = vector.shape_cast %94 : vector<128x128xf32> to vector<1x8x16x128xf32>
    %c0_69 = arith.constant 0 : index
    %c0_70 = arith.constant 0 : index
    %c0_71 = arith.constant 0 : index
    %c0_72 = arith.constant 0 : index
    %96 = vector.load %arg7[%c0_69, %c0_70, %c0_71, %c0_72] : memref<1x8x16x128xf32, #tpu.memory_space<vmem>>, vector<1x8x16x128xf32>
    tpu.vector_store %arg7[%c0_69, %c0_70, %c0_71, %c0_72], %95 {strides = array<i32>} : memref<1x8x16x128xf32, #tpu.memory_space<vmem>>, vector<1x8x16x128xf32>,
    return
  }
  func.func @transform_0(%arg0: i32, %arg1: i32) -> (i32, i32, i32, i32) {
    %c0_i32 = arith.constant 0 : i32
    %c0_i32_0 = arith.constant 0 : i32
    %c0_i32_1 = arith.constant 0 : i32
    %c0_i32_2 = arith.constant 0 : i32
    return %arg0, %c0_i32, %c0_i32_0, %c0_i32_1 : i32, i32, i32, i32
  }
  func.func @transform_1(%arg0: i32, %arg1: i32) -> (i32, i32, i32) {
    %c0_i32 = arith.constant 0 : i32
    %c0_i32_0 = arith.constant 0 : i32
    %c0_i32_1 = arith.constant 0 : i32
    %c0_i32_2 = arith.constant 0 : i32
    return %c0_i32, %c0_i32_0, %c0_i32_1 : i32, i32, i32
  }
  func.func @transform_2(%arg0: i32, %arg1: i32) -> (i32, i32) {
    %c0_i32 = arith.constant 0 : i32
    %c0_i32_0 = arith.constant 0 : i32
    %c0_i32_1 = arith.constant 0 : i32
    return %c0_i32, %c0_i32_0 : i32, i32
  }
  func.func @transform_3(%arg0: i32, %arg1: i32) -> (i32, i32) {
    %c0_i32 = arith.constant 0 : i32
    %c0_i32_0 = arith.constant 0 : i32
    %c0_i32_1 = arith.constant 0 : i32
    return %c0_i32, %c0_i32_0 : i32, i32
  }
  func.func @transform_4(%arg0: i32, %arg1: i32) -> (i32, i32, i32, i32) {
    %c0_i32 = arith.constant 0 : i32
    %c0_i32_0 = arith.constant 0 : i32
    %c0_i32_1 = arith.constant 0 : i32
    return %arg0, %arg1, %c0_i32, %c0_i32_0 : i32, i32, i32, i32
  }
  func.func @transform_5(%arg0: i32, %arg1: i32) -> (i32, i32, i32, i32) {
    %c0_i32 = arith.constant 0 : i32
    %c0_i32_0 = arith.constant 0 : i32
    %c0_i32_1 = arith.constant 0 : i32
    return %arg0, %arg1, %c0_i32, %c0_i32_0 : i32, i32, i32, i32
  }
}

</mosaic_0001>

<llo_original>
// kernel: residual_block_forward.3
$region0: #{residual_block_forward.3}
  #allocation0 [shape = 'u32[]', space=smem, size = 0x4, offset = 0x4, fixed_abs, tag = 'smem constant byte address 0x4 - core index']
  #allocation1 [shape = 'u32[144,128]{1,0:T(1,128)}', space=vmem, size = 0x12000, scoped, tag = 'internal scratch']
  %s0 = inlined_call_operand.vmem [shape: f32[2,18,18,128], index: 0, kind: input, shape index: {}]
  %s1 = inlined_call_operand.vmem [shape: bf16[9,128,128], index: 1, kind: input, shape index: {}]
  %s2 = inlined_call_operand.vmem [shape: f32[1,128], index: 2, kind: input, shape index: {}]
  %s3 = inlined_call_operand.vmem [shape: f32[1,128], index: 3, kind: input, shape index: {}]
  %s4 = inlined_call_operand.vmem [shape: f32[2,16,16,128], index: 4, kind: input, shape index: {}]
  %s5 = inlined_call_operand.hbm [shape: f32[2,16,16,128], index: 5, kind: output, shape index: {}]
  %s6 = sld [smem:[#allocation0]]
  $region53: #{residual_block_forward.3} parent=0
    _
  %s8 = ssub.s32 1, %s6
  %s9 = scalar_select 0, %s8, %s6
  $region1: #{residual_block_forward.3} parent=0
    #allocation2 [shape = 'u8[131072]{0}', space=vmem, size = 0x20000, scoped, tag = 'output window, operand 0']
    #allocation3 [shape = 's32[2]{0}', space=sflag, size = 0x8, scoped, tag = 'scoped memory for residual_block_forward.3']
    %10 = vsyncpa [#allocation3], 0
    %s11 = scalar_lea.sflag [#allocation3], 1
    %12 = vsyncpa %s11, 0
    loop: start=0, step=1, limit=6
    $region2: #{residual_block_forward.3} parent=1 // loop_pre_header
      _
    $region3: #{residual_block_forward.3} parent=1 // loop_header
      %s14 = sphi 0, %s18
      %p15 = scmp.ge.s32.totalorder %s14, 6
      %s21 = sphi 0, %s33
      %s22 = sphi 0, %s29
      %s23 = sphi 0, %s21
      %s24 = sphi 0, %s22
      %s25 = sphi 0, %s23
      %s26 = sphi 0, %s24
      %s36 = sphi 0, %s38
      %s39 = sphi 0, %s36
      %s40 = sphi 0, %s39
      %s56 = sphi 0, %s40
      %s60 = sphi 0, %s60
      %s62 = sphi 0, %s60
      %s63 = sphi 0, %s62
      %s77 = sphi 0, %s63
      %s81 = sphi 0, %s81
      %s83 = sphi 0, %s81
      %s84 = sphi 0, %s83
      %s98 = sphi 0, %s84
      %s102 = sphi 0, %s102
      %s104 = sphi 0, %s102
      %s105 = sphi 0, %s104
      %s119 = sphi 0, %s105
      %s127 = sphi 0, %s129
      %s130 = sphi 0, %s127
      %s131 = sphi 0, %s130
      %s147 = sphi 0, %s131
      %s155 = sphi 0, %s157
      %s158 = sphi 0, %s155
      %s159 = sphi 0, %s158
      %s175 = sphi 0, %s159
    $region4: #{residual_block_forward.3} parent=1 // loop_header_branch
      %17 = sbr.rel (%p15) target = $region8
    $region5: #{residual_block_forward.3} parent=1 // loop_body
      %s19 = ssub.s32 %s14, 1
      %s20 = ssub.s32 %s14, 2
      %s27 = sadd.s32 1, %s22
      %p28 = scmp.ge.s32.totalorder %s27, 2
      %s29 = scalar_select %p28, 0, %s27
      %s30 = sadd.s32 1, %s21
      %s31 = scalar_select %p28, %s30, %s21
      %p32 = scmp.ge.s32.totalorder %s31, 2
      %s33 = scalar_select %p32, 0, %s31
      %s34 = ssub.s32 %s21, %s33
      %p35 = scmp.eq.s32.totalorder %s34, 0
      %s37 = sadd.s32 %s36, 1
      %s38 = scalar_select %p35, %s36, %s37
      %p41 = pneg %p35
      %p42 = scmp.eq.s32.totalorder %s14, 3
      %p43 = por %p41, %p42
      %p44 = scmp.ne.s32.totalorder %s36, %s39
      %p45 = scmp.eq.s32.totalorder %s14, 0
      %p46 = por %p44, %p45
      %p47 = scmp.ne.s32.totalorder %s36, %s39
      %p48 = scmp.eq.s32.totalorder %s19, 3
      %p49 = por %p47, %p48
      %p50 = scmp.ne.s32.totalorder %s39, %s40
      %p51 = scmp.eq.s32.totalorder %s19, 0
      %p52 = por %p50, %p51
      %p53 = scmp.ne.s32.totalorder %s39, %s40
      %p54 = scmp.eq.s32.totalorder %s20, 3
      %p55 = por %p53, %p54
      %p57 = scmp.ne.s32.totalorder %s40, %s56
      %p58 = scmp.eq.s32.totalorder %s20, 0
      %p59 = por %p57, %p58
      %s61 = sadd.s32 %s60, 1
      %p64 = scmp.eq.s32.totalorder %s14, 3
      %p65 = scmp.ne.s32.totalorder %s60, %s62
      %p66 = scmp.eq.s32.totalorder %s14, 0
      %p67 = por %p65, %p66
      %p68 = scmp.ne.s32.totalorder %s60, %s62
      %p69 = scmp.eq.s32.totalorder %s19, 3
      %p70 = por %p68, %p69
      %p71 = scmp.ne.s32.totalorder %s62, %s63
      %p72 = scmp.eq.s32.totalorder %s19, 0
      %p73 = por %p71, %p72
      %p74 = scmp.ne.s32.totalorder %s62, %s63
      %p75 = scmp.eq.s32.totalorder %s20, 3
      %p76 = por %p74, %p75
      %p78 = scmp.ne.s32.totalorder %s63, %s77
      %p79 = scmp.eq.s32.totalorder %s20, 0
      %p80 = por %p78, %p79
      %s82 = sadd.s32 %s81, 1
      %p85 = scmp.eq.s32.totalorder %s14, 3
      %p86 = scmp.ne.s32.totalorder %s81, %s83
      %p87 = scmp.eq.s32.totalorder %s14, 0
      %p88 = por %p86, %p87
      %p89 = scmp.ne.s32.totalorder %s81, %s83
      %p90 = scmp.eq.s32.totalorder %s19, 3
      %p91 = por %p89, %p90
      %p92 = scmp.ne.s32.totalorder %s83, %s84
      %p93 = scmp.eq.s32.totalorder %s19, 0
      %p94 = por %p92, %p93
      %p95 = scmp.ne.s32.totalorder %s83, %s84
      %p96 = scmp.eq.s32.totalorder %s20, 3
      %p97 = por %p95, %p96
      %p99 = scmp.ne.s32.totalorder %s84, %s98
      %p100 = scmp.eq.s32.totalorder %s20, 0
      %p101 = por %p99, %p100
      %s103 = sadd.s32 %s102, 1
      %p106 = scmp.eq.s32.totalorder %s14, 3
      %p107 = scmp.ne.s32.totalorder %s102, %s104
      %p108 = scmp.eq.s32.totalorder %s14, 0
      %p109 = por %p107, %p108
      %p110 = scmp.ne.s32.totalorder %s102, %s104
      %p111 = scmp.eq.s32.totalorder %s19, 3
      %p112 = por %p110, %p111
      %p113 = scmp.ne.s32.totalorder %s104, %s105
      %p114 = scmp.eq.s32.totalorder %s19, 0
      %p115 = por %p113, %p114
      %p116 = scmp.ne.s32.totalorder %s104, %s105
      %p117 = scmp.eq.s32.totalorder %s20, 3
      %p118 = por %p116, %p117
      %p120 = scmp.ne.s32.totalorder %s105, %s119
      %p121 = scmp.eq.s32.totalorder %s20, 0
      %p122 = por %p120, %p121
      %s123 = ssub.s32 %s21, %s33
      %s124 = ssub.s32 %s22, %s29
      %s125 = sor.u32 %s123, %s124
      %p126 = scmp.eq.s32.totalorder %s125, 0
      %s128 = sadd.s32 %s127, 1
      %s129 = scalar_select %p126, %s127, %s128
      %p132 = pneg %p126
      %p133 = scmp.eq.s32.totalorder %s14, 3
      %p134 = por %p132, %p133
      %p135 = scmp.ne.s32.totalorder %s127, %s130
      %p136 = scmp.eq.s32.totalorder %s14, 0
      %p137 = por %p135, %p136
      %p138 = scmp.ne.s32.totalorder %s127, %s130
      %p139 = scmp.eq.s32.totalorder %s19, 3
      %p140 = por %p138, %p139
      %p141 = scmp.ne.s32.totalorder %s130, %s131
      %p142 = scmp.eq.s32.totalorder %s19, 0
      %p143 = por %p141, %p142
      %p144 = scmp.ne.s32.totalorder %s130, %s131
      %p145 = scmp.eq.s32.totalorder %s20, 3
      %p146 = por %p144, %p145
      %p148 = scmp.ne.s32.totalorder %s131, %s147
      %p149 = scmp.eq.s32.totalorder %s20, 0
      %p150 = por %p148, %p149
      %s151 = ssub.s32 %s21, %s33
      %s152 = ssub.s32 %s22, %s29
      %s153 = sor.u32 %s151, %s152
      %p154 = scmp.eq.s32.totalorder %s153, 0
      %s156 = sadd.s32 %s155, 1
      %s157 = scalar_select %p154, %s155, %s156
      %p160 = pneg %p154
      %p161 = scmp.eq.s32.totalorder %s14, 3
      %p162 = por %p160, %p161
      %p163 = scmp.ne.s32.totalorder %s155, %s158
      %p164 = scmp.eq.s32.totalorder %s14, 0
      %p165 = por %p163, %p164
      %p166 = scmp.ne.s32.totalorder %s155, %s158
      %p167 = scmp.eq.s32.totalorder %s19, 3
      %p168 = por %p166, %p167
      %p169 = scmp.ne.s32.totalorder %s158, %s159
      %p170 = scmp.eq.s32.totalorder %s19, 0
      %p171 = por %p169, %p170
      %p172 = scmp.ne.s32.totalorder %s158, %s159
      %p173 = scmp.eq.s32.totalorder %s20, 3
      %p174 = por %p172, %p173
      %p176 = scmp.ne.s32.totalorder %s159, %s175
      %p177 = scmp.eq.s32.totalorder %s20, 0
      %p178 = por %p176, %p177
      %p179 = scmp.le.s32.totalorder 1, %s14
      %p180 = scmp.lt.s32.totalorder %s14, 5
      %p181 = pnand %p179, %p180
      %p182 = pneg %p181
      // Predicated region
      $region9: #{residual_block_forward.3} parent=5 // pred_check
        _
      $region10: #{residual_block_forward.3} parent=5 // pred_check_branch
        %184 = sbr.rel (%p181) target = $region12
      $region11: #{residual_block_forward.3} parent=5 // pred_region
        %s185 = ssub.s32 %s14, 1
        // Predicated region
        $region13: #{residual_block_forward.3} parent=11 // pred_check
          %p186 = pneg %p73
        $region14: #{residual_block_forward.3} parent=11 // pred_check_branch
          %188 = sbr.rel (%p186) target = $region16
        $region15: #{residual_block_forward.3} parent=11 // pred_region
          _
        $region16: #{residual_block_forward.3} parent=11 // pred_fallthru
          _
        // Predicated region
        $region17: #{residual_block_forward.3} parent=11 // pred_check
          %p189 = pneg %p94
        $region18: #{residual_block_forward.3} parent=11 // pred_check_branch
          %191 = sbr.rel (%p189) target = $region20
        $region19: #{residual_block_forward.3} parent=11 // pred_region
          _
        $region20: #{residual_block_forward.3} parent=11 // pred_fallthru
          _
        // Predicated region
        $region21: #{residual_block_forward.3} parent=11 // pred_check
          %p192 = pneg %p115
        $region22: #{residual_block_forward.3} parent=11 // pred_check_branch
          %194 = sbr.rel (%p192) target = $region24
        $region23: #{residual_block_forward.3} parent=11 // pred_region
          _
        $region24: #{residual_block_forward.3} parent=11 // pred_fallthru
          _
      $region12: #{residual_block_forward.3} parent=5 // pred_fallthru
        _
      %p195 = scmp.lt.s32.totalorder %s14, 4
      // Predicated region
      $region25: #{residual_block_forward.3} parent=5 // pred_check
        %p196 = pneg %p195
      $region26: #{residual_block_forward.3} parent=5 // pred_check_branch
        %198 = sbr.rel (%p196) target = $region28
      $region27: #{residual_block_forward.3} parent=5 // pred_region
        // Predicated region
        $region29: #{residual_block_forward.3} parent=27 // pred_check
          %p199 = pneg %p46
        $region30: #{residual_block_forward.3} parent=27 // pred_check_branch
          %201 = sbr.rel (%p199) target = $region32
        $region31: #{residual_block_forward.3} parent=27 // pred_region
          %p202 = scmp.lt.s32.totalorder %s21, 1
          %s203 = scalar_select %p202, %s21, 1
          %s204 = smul.addr %s203, 54
          %s205 = smul.addr %s204, 8
          %s206 = scalar_lea.vmem %s0, %s205
        $region32: #{residual_block_forward.3} parent=27 // pred_fallthru
          _
        // Predicated region
        $region33: #{residual_block_forward.3} parent=27 // pred_check
          %p207 = pneg %p137
        $region34: #{residual_block_forward.3} parent=27 // pred_check_branch
          %209 = sbr.rel (%p207) target = $region36
        $region35: #{residual_block_forward.3} parent=27 // pred_region
          %s210 = smul.u32 8, %s22
          %p211 = scmp.lt.s32.totalorder %s21, 1
          %s212 = scalar_select %p211, %s21, 1
          %p213 = scmp.lt.s32.totalorder %s210, 15
          %s214 = scalar_select %p213, %s210, 15
          %s215 = smul.addr %s214, 2
          %s216 = smul.addr %s212, 32
          %s217 = sadd.s32 %s215, %s216
          %s218 = smul.addr %s217, 8
          %s219 = scalar_lea.vmem %s4, %s218
          %s220 = smul.u32 8, %s22
        $region36: #{residual_block_forward.3} parent=27 // pred_fallthru
          _
      $region28: #{residual_block_forward.3} parent=5 // pred_fallthru
        _
      %p221 = scmp.le.s32.totalorder 1, %s14
      %p222 = scmp.lt.s32.totalorder %s14, 5
      %p223 = pnand %p221, %p222
      %p224 = pneg %p223
      // Predicated region
      $region37: #{residual_block_forward.3} parent=5 // pred_check
        _
      $region38: #{residual_block_forward.3} parent=5 // pred_check_branch
        %226 = sbr.rel (%p223) target = $region40
      $region39: #{residual_block_forward.3} parent=5 // pred_region
        %s227 = ssub.s32 %s14, 1
        %p228 = scmp.lt.s32.totalorder %s23, 1
        %s229 = scalar_select %p228, %s23, 1
        %s230 = smul.addr %s229, 54
        %s231 = smul.addr %s230, 8
        %s232 = scalar_lea.vmem %s0, %s231
        %p233 = pneg %p52
        %p234 = pneg %p49
        %p235 = pneg %p73
        %p236 = pneg %p70
        %p237 = pneg %p94
        %p238 = pneg %p91
        %p239 = pneg %p115
        %p240 = pneg %p112
        %s241 = smul.u32 8, %s24
        %p242 = scmp.lt.s32.totalorder %s23, 1
        %s243 = scalar_select %p242, %s23, 1
        %p244 = scmp.lt.s32.totalorder %s241, 15
        %s245 = scalar_select %p244, %s241, 15
        %s246 = smul.addr %s245, 2
        %s247 = smul.addr %s243, 32
        %s248 = sadd.s32 %s246, %s247
        %s249 = smul.addr %s248, 8
        %s250 = scalar_lea.vmem %s4, %s249
        %p251 = pneg %p143
        %p252 = pneg %p140
        %p253 = pneg %p171
        %p254 = pneg %p168
        %s255 = sand.u32 %s158, 1
        %s256 = scalar_lea.sflag [#allocation3], %s255
        %s257 = sand.u32 %s158, 1
        %s258 = smul.addr %s257, 128
        %s259 = scalar_lea.vmem [#allocation2], %s258
        %p260 = scmp.lt.s32.totalorder %s23, 1
        %s261 = scalar_select %p260, %s23, 1
        %s262 = smul.addr %s261, 54
        %s263 = smul.addr %s262, 8
        %s264 = scalar_lea.vmem %s0, %s263
        %s265 = smul.u32 8, %s24
        %p266 = scmp.lt.s32.totalorder %s23, 1
        %s267 = scalar_select %p266, %s23, 1
        %p268 = scmp.lt.s32.totalorder %s265, 15
        %s269 = scalar_select %p268, %s265, 15
        %s270 = smul.addr %s269, 2
        %s271 = smul.addr %s267, 32
        %s272 = sadd.s32 %s270, %s271
        %s273 = smul.addr %s272, 8
        %s274 = scalar_lea.vmem %s4, %s273
        %s275 = smul.u32 8, %s24
        %s276 = smul.u32 8, %s24
        %s278 = smul.u32 %s24, 8
        %s279 = smul.u32 %s278, 24
        %s280 = scalar_lea.vmem %s264, %s279
        %v281 = vld [vmem:[%s280] sm:$0xff]
        %v282 = vld [vmem:[%s280 + $0x8] sm:$0xff]
        %v283 = vld [vmem:[%s280 + $0x18] sm:$0xff]
        %v284 = vld [vmem:[%s280 + $0x20] sm:$0xff]
        %v285 = vld [vmem:[%s280 + $0x30] sm:$0xff]
        %v286 = vld [vmem:[%s280 + $0x38] sm:$0xff]
        %v287 = vld [vmem:[%s280 + $0x48] sm:$0xff]
        %v288 = vld [vmem:[%s280 + $0x50] sm:$0xff]
        %v289 = vld [vmem:[%s280 + $0x60] sm:$0xff]
        %v290 = vld [vmem:[%s280 + $0x68] sm:$0xff]
        %v291 = vld [vmem:[%s280 + $0x78] sm:$0xff]
        %v292 = vld [vmem:[%s280 + $0x80] sm:$0xff]
        %v293 = vld [vmem:[%s280 + $0x90] sm:$0xff]
        %v294 = vld [vmem:[%s280 + $0x98] sm:$0xff]
        %v295 = vld [vmem:[%s280 + $0xa8] sm:$0xff]
        %v296 = vld [vmem:[%s280 + $0xb0] sm:$0xff]
        %v297 = vpack.c.bf16 %v282, %v281
        %v298 = vpack.c.bf16 %v284, %v283
        %v299 = vpack.c.bf16 %v286, %v285
        %v300 = vpack.c.bf16 %v288, %v287
        %v301 = vpack.c.bf16 %v290, %v289
        %v302 = vpack.c.bf16 %v292, %v291
        %v303 = vpack.c.bf16 %v294, %v293
        %v304 = vpack.c.bf16 %v296, %v295
        %v305 = vld [vmem:[%s1] sm:$0xf]
        %v306 = vld [vmem:[%s1 + $0x4] sm:$0xf]
        %v307 = vld [vmem:[%s1 + $0x8] sm:$0xf]
        %v308 = vld [vmem:[%s1 + $0xc] sm:$0xf]
        %v309 = vld [vmem:[%s1 + $0x10] sm:$0xf]
        %v310 = vld [vmem:[%s1 + $0x14] sm:$0xf]
        %v311 = vld [vmem:[%s1 + $0x18] sm:$0xf]
        %v312 = vld [vmem:[%s1 + $0x1c] sm:$0xf]
        %v313 = vld [vmem:[%s1 + $0x20] sm:$0xf]
        %v314 = vld [vmem:[%s1 + $0x24] sm:$0xf]
        %v315 = vld [vmem:[%s1 + $0x28] sm:$0xf]
        %v316 = vld [vmem:[%s1 + $0x2c] sm:$0xf]
        %v317 = vld [vmem:[%s1 + $0x30] sm:$0xf]
        %v318 = vld [vmem:[%s1 + $0x34] sm:$0xf]
        %v319 = vld [vmem:[%s1 + $0x38] sm:$0xf]
        %v320 = vld [vmem:[%s1 + $0x3c] sm:$0xf]
        %v321 = vld [vmem:[%s280 + $0x1] sm:$0xff]
        %v322 = vld [vmem:[%s280 + $0x9] sm:$0xff]
        %v323 = vld [vmem:[%s280 + $0x19] sm:$0xff]
        %v324 = vld [vmem:[%s280 + $0x21] sm:$0xff]
        %v325 = vld [vmem:[%s280 + $0x31] sm:$0xff]
        %v326 = vld [vmem:[%s280 + $0x39] sm:$0xff]
        %v327 = vld [vmem:[%s280 + $0x49] sm:$0xff]
        %v328 = vld [vmem:[%s280 + $0x51] sm:$0xff]
        %v329 = vld [vmem:[%s280 + $0x61] sm:$0xff]
        %v330 = vld [vmem:[%s280 + $0x69] sm:$0xff]
        %v331 = vld [vmem:[%s280 + $0x79] sm:$0xff]
        %v332 = vld [vmem:[%s280 + $0x81] sm:$0xff]
        %v333 = vld [vmem:[%s280 + $0x91] sm:$0xff]
        %v334 = vld [vmem:[%s280 + $0x99] sm:$0xff]
        %v335 = vld [vmem:[%s280 + $0xa9] sm:$0xff]
        %v336 = vld [vmem:[%s280 + $0xb1] sm:$0xff]
        %v337 = vpack.c.bf16 %v322, %v321
        %v338 = vpack.c.bf16 %v324, %v323
        %v339 = vpack.c.bf16 %v326, %v325
        %v340 = vpack.c.bf16 %v328, %v327
        %v341 = vpack.c.bf16 %v330, %v329
        %v342 = vpack.c.bf16 %v332, %v331
        %v343 = vpack.c.bf16 %v334, %v333
        %v344 = vpack.c.bf16 %v336, %v335
        %s345 = scalar_lea.vmem %s1, 64
        %v346 = vld [vmem:[%s345] sm:$0xf]
        %v347 = vld [vmem:[%s345 + $0x4] sm:$0xf]
        %v348 = vld [vmem:[%s345 + $0x8] sm:$0xf]
        %v349 = vld [vmem:[%s345 + $0xc] sm:$0xf]
        %v350 = vld [vmem:[%s345 + $0x10] sm:$0xf]
        %v351 = vld [vmem:[%s345 + $0x14] sm:$0xf]
        %v352 = vld [vmem:[%s345 + $0x18] sm:$0xf]
        %v353 = vld [vmem:[%s345 + $0x1c] sm:$0xf]
        %v354 = vld [vmem:[%s345 + $0x20] sm:$0xf]
        %v355 = vld [vmem:[%s345 + $0x24] sm:$0xf]
        %v356 = vld [vmem:[%s345 + $0x28] sm:$0xf]
        %v357 = vld [vmem:[%s345 + $0x2c] sm:$0xf]
        %v358 = vld [vmem:[%s345 + $0x30] sm:$0xf]
        %v359 = vld [vmem:[%s345 + $0x34] sm:$0xf]
        %v360 = vld [vmem:[%s345 + $0x38] sm:$0xf]
        %v361 = vld [vmem:[%s345 + $0x3c] sm:$0xf]
        %v378 = vunpack.c.l.b16 %v346
        %v379 = vunpack.c.l.b16 %v347
        %v380 = vunpack.c.l.b16 %v348
        %v381 = vunpack.c.l.b16 %v349
        %v382 = vunpack.c.l.b16 %v350
        %v383 = vunpack.c.l.b16 %v351
        %v384 = vunpack.c.l.b16 %v352
        %v385 = vunpack.c.l.b16 %v353
        %v386 = vunpack.c.l.b16 %v354
        %v387 = vunpack.c.l.b16 %v355
        %v388 = vunpack.c.l.b16 %v356
        %v389 = vunpack.c.l.b16 %v357
        %v390 = vunpack.c.l.b16 %v358
        %v391 = vunpack.c.l.b16 %v359
        %v392 = vunpack.c.l.b16 %v360
        %v393 = vunpack.c.l.b16 %v361
        %v394 = vpack.c.b16 %v379, %v378
        %v395 = vpack.c.b16 %v381, %v380
        %v396 = vpack.c.b16 %v383, %v382
        %v397 = vpack.c.b16 %v385, %v384
        %v398 = vpack.c.b16 %v387, %v386
        %v399 = vpack.c.b16 %v389, %v388
        %v400 = vpack.c.b16 %v391, %v390
        %v401 = vpack.c.b16 %v393, %v392
        %410 = vmatprep.subr.bf16.mxu0 0
        %411 = vmatpush1.bf16.msra.mxu0 %v394
        %412 = vmatprep.subr.bf16.mxu0 0
        %413 = vmatpush1.bf16.msra.mxu0 %v395
        %414 = vmatprep.subr.bf16.mxu0 0
        %415 = vmatpush1.bf16.msra.mxu0 %v396
        %416 = vmatprep.subr.bf16.mxu0 0
        %417 = vmatpush1.bf16.msra.mxu0 %v397
        %418 = vmatprep.subr.bf16.mxu0 0
        %419 = vmatpush1.bf16.msra.mxu0 %v398
        %420 = vmatprep.subr.bf16.mxu0 0
        %421 = vmatpush1.bf16.msra.mxu0 %v399
        %422 = vmatprep.subr.bf16.mxu0 0
        %423 = vmatpush1.bf16.msra.mxu0 %v400
        %424 = vmatprep.subr.bf16.mxu0 0
        %425 = vmatpush1.bf16.msra.mxu0 %v401
        %426 = vmatprep.subr.bf16.mxu0 0
        %427 = vmatpush1.bf16.msra.mxu0 0
        %428 = vmatprep.subr.bf16.mxu0 0
        %429 = vmatpush1.bf16.msra.mxu0 0
        %430 = vmatprep.subr.bf16.mxu0 0
        %431 = vmatpush1.bf16.msra.mxu0 0
        %432 = vmatprep.subr.bf16.mxu0 0
        %433 = vmatpush1.bf16.msra.mxu0 0
        %434 = vmatprep.subr.bf16.mxu0 0
        %435 = vmatpush1.bf16.msra.mxu0 0
        %436 = vmatprep.subr.bf16.mxu0 0
        %437 = vmatpush1.bf16.msra.mxu0 0
        %438 = vmatprep.subr.bf16.mxu0 0
        %439 = vmatpush1.bf16.msra.mxu0 0
        %440 = vmatprep.subr.bf16.mxu0 0
        %441 = vmatpush1.bf16.msra.mxu0 0
        %442 = vmatprep.mubr.bf16.mxu0 0
        %443 = vmatmul.mubr.bf16.gmra.mrb[0].mxu0 %v337
        %v444 = vpop.f32.mrb[0].mxu0
        %v445 = vadd.f32 0.0, %v444
        %v446 = vpop.f32.mrb[0].mxu0
        %v447 = vpop.f32.mrb[0].mxu0
        %v448 = vadd.f32 0.0, %v447
        %v449 = vpop.f32.mrb[0].mxu0
        %450 = vmatprep.mubr.bf16.mxu0 0
        %451 = vmatmul.mubr.bf16.gmra.mrb[0].mxu0 %v338
        %v452 = vpop.f32.mrb[0].mxu0
        %v453 = vadd.f32 0.0, %v452
        %v454 = vpop.f32.mrb[0].mxu0
        %v455 = vpop.f32.mrb[0].mxu0
        %v456 = vadd.f32 0.0, %v455
        %v457 = vpop.f32.mrb[0].mxu0
        %458 = vmatprep.mubr.bf16.mxu0 0
        %459 = vmatmul.mubr.bf16.gmra.mrb[0].mxu0 %v339
        %v460 = vpop.f32.mrb[0].mxu0
        %v461 = vadd.f32 0.0, %v460
        %v462 = vpop.f32.mrb[0].mxu0
        %v463 = vpop.f32.mrb[0].mxu0
        %v464 = vadd.f32 0.0, %v463
        %v465 = vpop.f32.mrb[0].mxu0
        %466 = vmatprep.mubr.bf16.mxu0 0
        %467 = vmatmul.mubr.bf16.gmra.mrb[0].mxu0 %v340
        %v468 = vpop.f32.mrb[0].mxu0
        %v469 = vadd.f32 0.0, %v468
        %v470 = vpop.f32.mrb[0].mxu0
        %v471 = vpop.f32.mrb[0].mxu0
        %v472 = vadd.f32 0.0, %v471
        %v473 = vpop.f32.mrb[0].mxu0
        %474 = vmatprep.mubr.bf16.mxu0 0
        %475 = vmatmul.mubr.bf16.gmra.mrb[0].mxu0 %v341
        %v476 = vpop.f32.mrb[0].mxu0
        %v477 = vadd.f32 0.0, %v476
        %v478 = vpop.f32.mrb[0].mxu0
        %v479 = vpop.f32.mrb[0].mxu0
        %v480 = vadd.f32 0.0, %v479
        %v481 = vpop.f32.mrb[0].mxu0
        %482 = vmatprep.mubr.bf16.mxu0 0
        %483 = vmatmul.mubr.bf16.gmra.mrb[0].mxu0 %v342
        %v484 = vpop.f32.mrb[0].mxu0
        %v485 = vadd.f32 0.0, %v484
        %v486 = vpop.f32.mrb[0].mxu0
        %v487 = vpop.f32.mrb[0].mxu0
        %v488 = vadd.f32 0.0, %v487
        %v489 = vpop.f32.mrb[0].mxu0
        %490 = vmatprep.mubr.bf16.mxu0 0
        %491 = vmatmul.mubr.bf16.gmra.mrb[0].mxu0 %v343
        %v492 = vpop.f32.mrb[0].mxu0
        %v493 = vadd.f32 0.0, %v492
        %v494 = vpop.f32.mrb[0].mxu0
        %v495 = vpop.f32.mrb[0].mxu0
        %v496 = vadd.f32 0.0, %v495
        %v497 = vpop.f32.mrb[0].mxu0
        %498 = vmatprep.mubr.bf16.mxu0 0
        %499 = vmatmul.mubr.bf16.gmra.mrb[0].mxu0 %v344
        %v500 = vpop.f32.mrb[0].mxu0
        %v501 = vadd.f32 0.0, %v500
        %v502 = vpop.f32.mrb[0].mxu0
        %v503 = vpop.f32.mrb[0].mxu0
        %v504 = vadd.f32 0.0, %v503
        %v505 = vpop.f32.mrb[0].mxu0
        %506 = vdwg.mxu0
        %v523 = vunpack.c.l.b16 %v305
        %v524 = vunpack.c.l.b16 %v306
        %v525 = vunpack.c.l.b16 %v307
        %v526 = vunpack.c.l.b16 %v308
        %v527 = vunpack.c.l.b16 %v309
        %v528 = vunpack.c.l.b16 %v310
        %v529 = vunpack.c.l.b16 %v311
        %v530 = vunpack.c.l.b16 %v312
        %v531 = vunpack.c.l.b16 %v313
        %v532 = vunpack.c.l.b16 %v314
        %v533 = vunpack.c.l.b16 %v315
        %v534 = vunpack.c.l.b16 %v316
        %v535 = vunpack.c.l.b16 %v317
        %v536 = vunpack.c.l.b16 %v318
        %v537 = vunpack.c.l.b16 %v319
        %v538 = vunpack.c.l.b16 %v320
        %v539 = vpack.c.b16 %v524, %v523
        %v540 = vpack.c.b16 %v526, %v525
        %v541 = vpack.c.b16 %v528, %v527
        %v542 = vpack.c.b16 %v530, %v529
        %v543 = vpack.c.b16 %v532, %v531
        %v544 = vpack.c.b16 %v534, %v533
        %v545 = vpack.c.b16 %v536, %v535
        %v546 = vpack.c.b16 %v538, %v537
        %555 = vmatprep.subr.bf16.mxu0 0
        %556 = vmatpush1.bf16.msra.mxu0 %v539
        %557 = vmatprep.subr.bf16.mxu0 0
        %558 = vmatpush1.bf16.msra.mxu0 %v540
        %559 = vmatprep.subr.bf16.mxu0 0
        %560 = vmatpush1.bf16.msra.mxu0 %v541
        %561 = vmatprep.subr.bf16.mxu0 0
        %562 = vmatpush1.bf16.msra.mxu0 %v542
        %563 = vmatprep.subr.bf16.mxu0 0
        %564 = vmatpush1.bf16.msra.mxu0 %v543
        %565 = vmatprep.subr.bf16.mxu0 0
        %566 = vmatpush1.bf16.msra.mxu0 %v544
        %567 = vmatprep.subr.bf16.mxu0 0
        %568 = vmatpush1.bf16.msra.mxu0 %v545
        %569 = vmatprep.subr.bf16.mxu0 0
        %570 = vmatpush1.bf16.msra.mxu0 %v546
        %571 = vmatprep.subr.bf16.mxu0 0
        %572 = vmatpush1.bf16.msra.mxu0 0
        %573 = vmatprep.subr.bf16.mxu0 0
        %574 = vmatpush1.bf16.msra.mxu0 0
        %575 = vmatprep.subr.bf16.mxu0 0
        %576 = vmatpush1.bf16.msra.mxu0 0
        %577 = vmatprep.subr.bf16.mxu0 0
        %578 = vmatpush1.bf16.msra.mxu0 0
        %579 = vmatprep.subr.bf16.mxu0 0
        %580 = vmatpush1.bf16.msra.mxu0 0
        %581 = vmatprep.subr.bf16.mxu0 0
        %582 = vmatpush1.bf16.msra.mxu0 0
        %583 = vmatprep.subr.bf16.mxu0 0
        %584 = vmatpush1.bf16.msra.mxu0 0
        %585 = vmatprep.subr.bf16.mxu0 0
        %586 = vmatpush1.bf16.msra.mxu0 0
        %587 = vmatprep.mubr.bf16.mxu0 0
        %588 = vmatmul.mubr.bf16.gmra.mrb[0].mxu0 %v297
        %v589 = vpop.f32.mrb[0].mxu0
        %v590 = vadd.f32 %v445, %v589
        %v591 = vpop.f32.mrb[0].mxu0
        %v592 = vpop.f32.mrb[0].mxu0
        %v593 = vadd.f32 %v448, %v592
        %v594 = vpop.f32.mrb[0].mxu0
        %595 = vmatprep.mubr.bf16.mxu0 0
        %596 = vmatmul.mubr.bf16.gmra.mrb[0].mxu0 %v298
        %v597 = vpop.f32.mrb[0].mxu0
        %v598 = vadd.f32 %v453, %v597
        %v599 = vpop.f32.mrb[0].mxu0
        %v600 = vpop.f32.mrb[0].mxu0
        %v601 = vadd.f32 %v456, %v600
        %v602 = vpop.f32.mrb[0].mxu0
        %603 = vmatprep.mubr.bf16.mxu0 0
        %604 = vmatmul.mubr.bf16.gmra.mrb[0].mxu0 %v299
        %v605 = vpop.f32.mrb[0].mxu0
        %v606 = vadd.f32 %v461, %v605
        %v607 = vpop.f32.mrb[0].mxu0
        %v608 = vpop.f32.mrb[0].mxu0
        %v609 = vadd.f32 %v464, %v608
        %v610 = vpop.f32.mrb[0].mxu0
        %611 = vmatprep.mubr.bf16.mxu0 0
        %612 = vmatmul.mubr.bf16.gmra.mrb[0].mxu0 %v300
        %v613 = vpop.f32.mrb[0].mxu0
        %v614 = vadd.f32 %v469, %v613
        %v615 = vpop.f32.mrb[0].mxu0
        %v616 = vpop.f32.mrb[0].mxu0
        %v617 = vadd.f32 %v472, %v616
        %v618 = vpop.f32.mrb[0].mxu0
        %619 = vmatprep.mubr.bf16.mxu0 0
        %620 = vmatmul.mubr.bf16.gmra.mrb[0].mxu0 %v301
        %v621 = vpop.f32.mrb[0].mxu0
        %v622 = vadd.f32 %v477, %v621
        %v623 = vpop.f32.mrb[0].mxu0
        %v624 = vpop.f32.mrb[0].mxu0
        %v625 = vadd.f32 %v480, %v624
        %v626 = vpop.f32.mrb[0].mxu0
        %627 = vmatprep.mubr.bf16.mxu0 0
        %628 = vmatmul.mubr.bf16.gmra.mrb[0].mxu0 %v302
        %v629 = vpop.f32.mrb[0].mxu0
        %v630 = vadd.f32 %v485, %v629
        %v631 = vpop.f32.mrb[0].mxu0
        %v632 = vpop.f32.mrb[0].mxu0
        %v633 = vadd.f32 %v488, %v632
        %v634 = vpop.f32.mrb[0].mxu0
        %635 = vmatprep.mubr.bf16.mxu0 0
        %636 = vmatmul.mubr.bf16.gmra.mrb[0].mxu0 %v303
        %v637 = vpop.f32.mrb[0].mxu0
        %v638 = vadd.f32 %v493, %v637
        %v639 = vpop.f32.mrb[0].mxu0
        %v640 = vpop.f32.mrb[0].mxu0
        %v641 = vadd.f32 %v496, %v640
        %v642 = vpop.f32.mrb[0].mxu0
        %643 = vmatprep.mubr.bf16.mxu0 0
        %644 = vmatmul.mubr.bf16.gmra.mrb[0].mxu0 %v304
        %v645 = vpop.f32.mrb[0].mxu0
        %v646 = vadd.f32 %v501, %v645
        %v647 = vpop.f32.mrb[0].mxu0
        %v648 = vpop.f32.mrb[0].mxu0
        %v649 = vadd.f32 %v504, %v648
        %v650 = vpop.f32.mrb[0].mxu0
        %651 = vdwg.mxu0
        %v652 = vld [vmem:[%s280 + $0x2] sm:$0xff]
        %v653 = vld [vmem:[%s280 + $0xa] sm:$0xff]
        %v654 = vld [vmem:[%s280 + $0x1a] sm:$0xff]
        %v655 = vld [vmem:[%s280 + $0x22] sm:$0xff]
        %v656 = vld [vmem:[%s280 + $0x32] sm:$0xff]
        %v657 = vld [vmem:[%s280 + $0x3a] sm:$0xff]
        %v658 = vld [vmem:[%s280 + $0x4a] sm:$0xff]
        %v659 = vld [vmem:[%s280 + $0x52] sm:$0xff]
        %v660 = vld [vmem:[%s280 + $0x62] sm:$0xff]
        %v661 = vld [vmem:[%s280 + $0x6a] sm:$0xff]
        %v662 = vld [vmem:[%s280 + $0x7a] sm:$0xff]
        %v663 = vld [vmem:[%s280 + $0x82] sm:$0xff]
        %v664 = vld [vmem:[%s280 + $0x92] sm:$0xff]
        %v665 = vld [vmem:[%s280 + $0x9a] sm:$0xff]
        %v666 = vld [vmem:[%s280 + $0xaa] sm:$0xff]
        %v667 = vld [vmem:[%s280 + $0xb2] sm:$0xff]
        %v668 = vpack.c.bf16 %v653, %v652
        %v669 = vpack.c.bf16 %v655, %v654
        %v670 = vpack.c.bf16 %v657, %v656
        %v671 = vpack.c.bf16 %v659, %v658
        %v672 = vpack.c.bf16 %v661, %v660
        %v673 = vpack.c.bf16 %v663, %v662
        %v674 = vpack.c.bf16 %v665, %v664
        %v675 = vpack.c.bf16 %v667, %v666
        %s676 = scalar_lea.vmem %s1, 128
        %v677 = vld [vmem:[%s676] sm:$0xf]
        %v678 = vld [vmem:[%s676 + $0x4] sm:$0xf]
        %v679 = vld [vmem:[%s676 + $0x8] sm:$0xf]
        %v680 = vld [vmem:[%s676 + $0xc] sm:$0xf]
        %v681 = vld [vmem:[%s676 + $0x10] sm:$0xf]
        %v682 = vld [vmem:[%s676 + $0x14] sm:$0xf]
        %v683 = vld [vmem:[%s676 + $0x18] sm:$0xf]
        %v684 = vld [vmem:[%s676 + $0x1c] sm:$0xf]
        %v685 = vld [vmem:[%s676 + $0x20] sm:$0xf]
        %v686 = vld [vmem:[%s676 + $0x24] sm:$0xf]
        %v687 = vld [vmem:[%s676 + $0x28] sm:$0xf]
        %v688 = vld [vmem:[%s676 + $0x2c] sm:$0xf]
        %v689 = vld [vmem:[%s676 + $0x30] sm:$0xf]
        %v690 = vld [vmem:[%s676 + $0x34] sm:$0xf]
        %v691 = vld [vmem:[%s676 + $0x38] sm:$0xf]
        %v692 = vld [vmem:[%s676 + $0x3c] sm:$0xf]
        %v709 = vunpack.c.l.b16 %v677
        %v710 = vunpack.c.l.b16 %v678
        %v711 = vunpack.c.l.b16 %v679
        %v712 = vunpack.c.l.b16 %v680
        %v713 = vunpack.c.l.b16 %v681
        %v714 = vunpack.c.l.b16 %v682
        %v715 = vunpack.c.l.b16 %v683
        %v716 = vunpack.c.l.b16 %v684
        %v717 = vunpack.c.l.b16 %v685
        %v718 = vunpack.c.l.b16 %v686
        %v719 = vunpack.c.l.b16 %v687
        %v720 = vunpack.c.l.b16 %v688
        %v721 = vunpack.c.l.b16 %v689
        %v722 = vunpack.c.l.b16 %v690
        %v723 = vunpack.c.l.b16 %v691
        %v724 = vunpack.c.l.b16 %v692
        %v725 = vpack.c.b16 %v710, %v709
        %v726 = vpack.c.b16 %v712, %v711
        %v727 = vpack.c.b16 %v714, %v713
        %v728 = vpack.c.b16 %v716, %v715
        %v729 = vpack.c.b16 %v718, %v717
        %v730 = vpack.c.b16 %v720, %v719
        %v731 = vpack.c.b16 %v722, %v721
        %v732 = vpack.c.b16 %v724, %v723
        %741 = vmatprep.subr.bf16.mxu0 0
        %742 = vmatpush1.bf16.msra.mxu0 %v725
        %743 = vmatprep.subr.bf16.mxu0 0
        %744 = vmatpush1.bf16.msra.mxu0 %v726
        %745 = vmatprep.subr.bf16.mxu0 0
        %746 = vmatpush1.bf16.msra.mxu0 %v727
        %747 = vmatprep.subr.bf16.mxu0 0
        %748 = vmatpush1.bf16.msra.mxu0 %v728
        %749 = vmatprep.subr.bf16.mxu0 0
        %750 = vmatpush1.bf16.msra.mxu0 %v729
        %751 = vmatprep.subr.bf16.mxu0 0
        %752 = vmatpush1.bf16.msra.mxu0 %v730
        %753 = vmatprep.subr.bf16.mxu0 0
        %754 = vmatpush1.bf16.msra.mxu0 %v731
        %755 = vmatprep.subr.bf16.mxu0 0
        %756 = vmatpush1.bf16.msra.mxu0 %v732
        %757 = vmatprep.subr.bf16.mxu0 0
        %758 = vmatpush1.bf16.msra.mxu0 0
        %759 = vmatprep.subr.bf16.mxu0 0
        %760 = vmatpush1.bf16.msra.mxu0 0
        %761 = vmatprep.subr.bf16.mxu0 0
        %762 = vmatpush1.bf16.msra.mxu0 0
        %763 = vmatprep.subr.bf16.mxu0 0
        %764 = vmatpush1.bf16.msra.mxu0 0
        %765 = vmatprep.subr.bf16.mxu0 0
        %766 = vmatpush1.bf16.msra.mxu0 0
        %767 = vmatprep.subr.bf16.mxu0 0
        %768 = vmatpush1.bf16.msra.mxu0 0
        %769 = vmatprep.subr.bf16.mxu0 0
        %770 = vmatpush1.bf16.msra.mxu0 0
        %771 = vmatprep.subr.bf16.mxu0 0
        %772 = vmatpush1.bf16.msra.mxu0 0
        %773 = vmatprep.mubr.bf16.mxu0 0
        %774 = vmatmul.mubr.bf16.gmra.mrb[0].mxu0 %v668
        %v775 = vpop.f32.mrb[0].mxu0
        %v776 = vadd.f32 0.0, %v775
        %v777 = vpop.f32.mrb[0].mxu0
        %v778 = vpop.f32.mrb[0].mxu0
        %v779 = vadd.f32 0.0, %v778
        %v780 = vpop.f32.mrb[0].mxu0
        %781 = vmatprep.mubr.bf16.mxu0 0
        %782 = vmatmul.mubr.bf16.gmra.mrb[0].mxu0 %v669
        %v783 = vpop.f32.mrb[0].mxu0
        %v784 = vadd.f32 0.0, %v783
        %v785 = vpop.f32.mrb[0].mxu0
        %v786 = vpop.f32.mrb[0].mxu0
        %v787 = vadd.f32 0.0, %v786
        %v788 = vpop.f32.mrb[0].mxu0
        %789 = vmatprep.mubr.bf16.mxu0 0
        %790 = vmatmul.mubr.bf16.gmra.mrb[0].mxu0 %v670
        %v791 = vpop.f32.mrb[0].mxu0
        %v792 = vadd.f32 0.0, %v791
        %v793 = vpop.f32.mrb[0].mxu0
        %v794 = vpop.f32.mrb[0].mxu0
        %v795 = vadd.f32 0.0, %v794
        %v796 = vpop.f32.mrb[0].mxu0
        %797 = vmatprep.mubr.bf16.mxu0 0
        %798 = vmatmul.mubr.bf16.gmra.mrb[0].mxu0 %v671
        %v799 = vpop.f32.mrb[0].mxu0
        %v800 = vadd.f32 0.0, %v799
        %v801 = vpop.f32.mrb[0].mxu0
        %v802 = vpop.f32.mrb[0].mxu0
        %v803 = vadd.f32 0.0, %v802
        %v804 = vpop.f32.mrb[0].mxu0
        %805 = vmatprep.mubr.bf16.mxu0 0
        %806 = vmatmul.mubr.bf16.gmra.mrb[0].mxu0 %v672
        %v807 = vpop.f32.mrb[0].mxu0
        %v808 = vadd.f32 0.0, %v807
        %v809 = vpop.f32.mrb[0].mxu0
        %v810 = vpop.f32.mrb[0].mxu0
        %v811 = vadd.f32 0.0, %v810
        %v812 = vpop.f32.mrb[0].mxu0
        %813 = vmatprep.mubr.bf16.mxu0 0
        %814 = vmatmul.mubr.bf16.gmra.mrb[0].mxu0 %v673
        %v815 = vpop.f32.mrb[0].mxu0
        %v816 = vadd.f32 0.0, %v815
        %v817 = vpop.f32.mrb[0].mxu0
        %v818 = vpop.f32.mrb[0].mxu0
        %v819 = vadd.f32 0.0, %v818
        %v820 = vpop.f32.mrb[0].mxu0
        %821 = vmatprep.mubr.bf16.mxu0 0
        %822 = vmatmul.mubr.bf16.gmra.mrb[0].mxu0 %v674
        %v823 = vpop.f32.mrb[0].mxu0
        %v824 = vadd.f32 0.0, %v823
        %v825 = vpop.f32.mrb[0].mxu0
        %v826 = vpop.f32.mrb[0].mxu0
        %v827 = vadd.f32 0.0, %v826
        %v828 = vpop.f32.mrb[0].mxu0
        %829 = vmatprep.mubr.bf16.mxu0 0
        %830 = vmatmul.mubr.bf16.gmra.mrb[0].mxu0 %v675
        %v831 = vpop.f32.mrb[0].mxu0
        %v832 = vadd.f32 0.0, %v831
        %v833 = vpop.f32.mrb[0].mxu0
        %v834 = vpop.f32.mrb[0].mxu0
        %v835 = vadd.f32 0.0, %v834
        %v836 = vpop.f32.mrb[0].mxu0
        %837 = vdwg.mxu0
        %v838 = vadd.f32 %v590, %v776
        %v839 = vadd.f32 %v593, %v779
        %v840 = vadd.f32 %v598, %v784
        %v841 = vadd.f32 %v601, %v787
        %v842 = vadd.f32 %v606, %v792
        %v843 = vadd.f32 %v609, %v795
        %v844 = vadd.f32 %v614, %v800
        %v845 = vadd.f32 %v617, %v803
        %v846 = vadd.f32 %v622, %v808
        %v847 = vadd.f32 %v625, %v811
        %v848 = vadd.f32 %v630, %v816
        %v849 = vadd.f32 %v633, %v819
        %v850 = vadd.f32 %v638, %v824
        %v851 = vadd.f32 %v641, %v827
        %v852 = vadd.f32 %v646, %v832
        %v853 = vadd.f32 %v649, %v835
        %s854 = sadd.s32 %s278, 1
        %s855 = smul.u32 %s854, 24
        %s856 = scalar_lea.vmem %s264, %s855
        %v857 = vld [vmem:[%s856] sm:$0xff]
        %v858 = vld [vmem:[%s856 + $0x8] sm:$0xff]
        %v859 = vld [vmem:[%s856 + $0x18] sm:$0xff]
        %v860 = vld [vmem:[%s856 + $0x20] sm:$0xff]
        %v861 = vld [vmem:[%s856 + $0x30] sm:$0xff]
        %v862 = vld [vmem:[%s856 + $0x38] sm:$0xff]
        %v863 = vld [vmem:[%s856 + $0x48] sm:$0xff]
        %v864 = vld [vmem:[%s856 + $0x50] sm:$0xff]
        %v865 = vld [vmem:[%s856 + $0x60] sm:$0xff]
        %v866 = vld [vmem:[%s856 + $0x68] sm:$0xff]
        %v867 = vld [vmem:[%s856 + $0x78] sm:$0xff]
        %v868 = vld [vmem:[%s856 + $0x80] sm:$0xff]
        %v869 = vld [vmem:[%s856 + $0x90] sm:$0xff]
        %v870 = vld [vmem:[%s856 + $0x98] sm:$0xff]
        %v871 = vld [vmem:[%s856 + $0xa8] sm:$0xff]
        %v872 = vld [vmem:[%s856 + $0xb0] sm:$0xff]
        %v873 = vpack.c.bf16 %v858, %v857
        %v874 = vpack.c.bf16 %v860, %v859
        %v875 = vpack.c.bf16 %v862, %v861
        %v876 = vpack.c.bf16 %v864, %v863
        %v877 = vpack.c.bf16 %v866, %v865
        %v878 = vpack.c.bf16 %v868, %v867
        %v879 = vpack.c.bf16 %v870, %v869
        %v880 = vpack.c.bf16 %v872, %v871
        %s881 = scalar_lea.vmem %s1, 192
        %v882 = vld [vmem:[%s881] sm:$0xf]
        %v883 = vld [vmem:[%s881 + $0x4] sm:$0xf]
        %v884 = vld [vmem:[%s881 + $0x8] sm:$0xf]
        %v885 = vld [vmem:[%s881 + $0xc] sm:$0xf]
        %v886 = vld [vmem:[%s881 + $0x10] sm:$0xf]
        %v887 = vld [vmem:[%s881 + $0x14] sm:$0xf]
        %v888 = vld [vmem:[%s881 + $0x18] sm:$0xf]
        %v889 = vld [vmem:[%s881 + $0x1c] sm:$0xf]
        %v890 = vld [vmem:[%s881 + $0x20] sm:$0xf]
        %v891 = vld [vmem:[%s881 + $0x24] sm:$0xf]
        %v892 = vld [vmem:[%s881 + $0x28] sm:$0xf]
        %v893 = vld [vmem:[%s881 + $0x2c] sm:$0xf]
        %v894 = vld [vmem:[%s881 + $0x30] sm:$0xf]
        %v895 = vld [vmem:[%s881 + $0x34] sm:$0xf]
        %v896 = vld [vmem:[%s881 + $0x38] sm:$0xf]
        %v897 = vld [vmem:[%s881 + $0x3c] sm:$0xf]
        %v914 = vunpack.c.l.b16 %v882
        %v915 = vunpack.c.l.b16 %v883
        %v916 = vunpack.c.l.b16 %v884
        %v917 = vunpack.c.l.b16 %v885
        %v918 = vunpack.c.l.b16 %v886
        %v919 = vunpack.c.l.b16 %v887
        %v920 = vunpack.c.l.b16 %v888
        %v921 = vunpack.c.l.b16 %v889
        %v922 = vunpack.c.l.b16 %v890
        %v923 = vunpack.c.l.b16 %v891
        %v924 = vunpack.c.l.b16 %v892
        %v925 = vunpack.c.l.b16 %v893
        %v926 = vunpack.c.l.b16 %v894
        %v927 = vunpack.c.l.b16 %v895
        %v928 = vunpack.c.l.b16 %v896
        %v929 = vunpack.c.l.b16 %v897
        %v930 = vpack.c.b16 %v915, %v914
        %v931 = vpack.c.b16 %v917, %v916
        %v932 = vpack.c.b16 %v919, %v918
        %v933 = vpack.c.b16 %v921, %v920
        %v934 = vpack.c.b16 %v923, %v922
        %v935 = vpack.c.b16 %v925, %v924
        %v936 = vpack.c.b16 %v927, %v926
        %v937 = vpack.c.b16 %v929, %v928
        %946 = vmatprep.subr.bf16.mxu0 0
        %947 = vmatpush1.bf16.msra.mxu0 %v930
        %948 = vmatprep.subr.bf16.mxu0 0
        %949 = vmatpush1.bf16.msra.mxu0 %v931
        %950 = vmatprep.subr.bf16.mxu0 0
        %951 = vmatpush1.bf16.msra.mxu0 %v932
        %952 = vmatprep.subr.bf16.mxu0 0
        %953 = vmatpush1.bf16.msra.mxu0 %v933
        %954 = vmatprep.subr.bf16.mxu0 0
        %955 = vmatpush1.bf16.msra.mxu0 %v934
        %956 = vmatprep.subr.bf16.mxu0 0
        %957 = vmatpush1.bf16.msra.mxu0 %v935
        %958 = vmatprep.subr.bf16.mxu0 0
        %959 = vmatpush1.bf16.msra.mxu0 %v936
        %960 = vmatprep.subr.bf16.mxu0 0
        %961 = vmatpush1.bf16.msra.mxu0 %v937
        %962 = vmatprep.subr.bf16.mxu0 0
        %963 = vmatpush1.bf16.msra.mxu0 0
        %964 = vmatprep.subr.bf16.mxu0 0
        %965 = vmatpush1.bf16.msra.mxu0 0
        %966 = vmatprep.subr.bf16.mxu0 0
        %967 = vmatpush1.bf16.msra.mxu0 0
        %968 = vmatprep.subr.bf16.mxu0 0
        %969 = vmatpush1.bf16.msra.mxu0 0
        %970 = vmatprep.subr.bf16.mxu0 0
        %971 = vmatpush1.bf16.msra.mxu0 0
        %972 = vmatprep.subr.bf16.mxu0 0
        %973 = vmatpush1.bf16.msra.mxu0 0
        %974 = vmatprep.subr.bf16.mxu0 0
        %975 = vmatpush1.bf16.msra.mxu0 0
        %976 = vmatprep.subr.bf16.mxu0 0
        %977 = vmatpush1.bf16.msra.mxu0 0
        %978 = vmatprep.mubr.bf16.mxu0 0
        %979 = vmatmul.mubr.bf16.gmra.mrb[0].mxu0 %v873
        %v980 = vpop.f32.mrb[0].mxu0
        %v981 = vadd.f32 0.0, %v980
        %v982 = vpop.f32.mrb[0].mxu0
        %v983 = vpop.f32.mrb[0].mxu0
        %v984 = vadd.f32 0.0, %v983
        %v985 = vpop.f32.mrb[0].mxu0
        %986 = vmatprep.mubr.bf16.mxu0 0
        %987 = vmatmul.mubr.bf16.gmra.mrb[0].mxu0 %v874
        %v988 = vpop.f32.mrb[0].mxu0
        %v989 = vadd.f32 0.0, %v988
        %v990 = vpop.f32.mrb[0].mxu0
        %v991 = vpop.f32.mrb[0].mxu0
        %v992 = vadd.f32 0.0, %v991
        %v993 = vpop.f32.mrb[0].mxu0
        %994 = vmatprep.mubr.bf16.mxu0 0
        %995 = vmatmul.mubr.bf16.gmra.mrb[0].mxu0 %v875
        %v996 = vpop.f32.mrb[0].mxu0
        %v997 = vadd.f32 0.0, %v996
        %v998 = vpop.f32.mrb[0].mxu0
        %v999 = vpop.f32.mrb[0].mxu0
        %v1000 = vadd.f32 0.0, %v999
        %v1001 = vpop.f32.mrb[0].mxu0
        %1002 = vmatprep.mubr.bf16.mxu0 0
        %1003 = vmatmul.mubr.bf16.gmra.mrb[0].mxu0 %v876
        %v1004 = vpop.f32.mrb[0].mxu0
        %v1005 = vadd.f32 0.0, %v1004
        %v1006 = vpop.f32.mrb[0].mxu0
        %v1007 = vpop.f32.mrb[0].mxu0
        %v1008 = vadd.f32 0.0, %v1007
        %v1009 = vpop.f32.mrb[0].mxu0
        %1010 = vmatprep.mubr.bf16.mxu0 0
        %1011 = vmatmul.mubr.bf16.gmra.mrb[0].mxu0 %v877
        %v1012 = vpop.f32.mrb[0].mxu0
        %v1013 = vadd.f32 0.0, %v1012
        %v1014 = vpop.f32.mrb[0].mxu0
        %v1015 = vpop.f32.mrb[0].mxu0
        %v1016 = vadd.f32 0.0, %v1015
        %v1017 = vpop.f32.mrb[0].mxu0
        %1018 = vmatprep.mubr.bf16.mxu0 0
        %1019 = vmatmul.mubr.bf16.gmra.mrb[0].mxu0 %v878
        %v1020 = vpop.f32.mrb[0].mxu0
        %v1021 = vadd.f32 0.0, %v1020
        %v1022 = vpop.f32.mrb[0].mxu0
        %v1023 = vpop.f32.mrb[0].mxu0
        %v1024 = vadd.f32 0.0, %v1023
        %v1025 = vpop.f32.mrb[0].mxu0
        %1026 = vmatprep.mubr.bf16.mxu0 0
        %1027 = vmatmul.mubr.bf16.gmra.mrb[0].mxu0 %v879
        %v1028 = vpop.f32.mrb[0].mxu0
        %v1029 = vadd.f32 0.0, %v1028
        %v1030 = vpop.f32.mrb[0].mxu0
        %v1031 = vpop.f32.mrb[0].mxu0
        %v1032 = vadd.f32 0.0, %v1031
        %v1033 = vpop.f32.mrb[0].mxu0
        %1034 = vmatprep.mubr.bf16.mxu0 0
        %1035 = vmatmul.mubr.bf16.gmra.mrb[0].mxu0 %v880
        %v1036 = vpop.f32.mrb[0].mxu0
        %v1037 = vadd.f32 0.0, %v1036
        %v1038 = vpop.f32.mrb[0].mxu0
        %v1039 = vpop.f32.mrb[0].mxu0
        %v1040 = vadd.f32 0.0, %v1039
        %v1041 = vpop.f32.mrb[0].mxu0
        %1042 = vdwg.mxu0
        %v1043 = vadd.f32 %v838, %v981
        %v1044 = vadd.f32 %v839, %v984
        %v1045 = vadd.f32 %v840, %v989
        %v1046 = vadd.f32 %v841, %v992
        %v1047 = vadd.f32 %v842, %v997
        %v1048 = vadd.f32 %v843, %v1000
        %v1049 = vadd.f32 %v844, %v1005
        %v1050 = vadd.f32 %v845, %v1008
        %v1051 = vadd.f32 %v846, %v1013
        %v1052 = vadd.f32 %v847, %v1016
        %v1053 = vadd.f32 %v848, %v1021
        %v1054 = vadd.f32 %v849, %v1024
        %v1055 = vadd.f32 %v850, %v1029
        %v1056 = vadd.f32 %v851, %v1032
        %v1057 = vadd.f32 %v852, %v1037
        %v1058 = vadd.f32 %v853, %v1040
        %v1059 = vld [vmem:[%s856 + $0x1] sm:$0xff]
        %v1060 = vld [vmem:[%s856 + $0x9] sm:$0xff]
        %v1061 = vld [vmem:[%s856 + $0x19] sm:$0xff]
        %v1062 = vld [vmem:[%s856 + $0x21] sm:$0xff]
        %v1063 = vld [vmem:[%s856 + $0x31] sm:$0xff]
        %v1064 = vld [vmem:[%s856 + $0x39] sm:$0xff]
        %v1065 = vld [vmem:[%s856 + $0x49] sm:$0xff]
        %v1066 = vld [vmem:[%s856 + $0x51] sm:$0xff]
        %v1067 = vld [vmem:[%s856 + $0x61] sm:$0xff]
        %v1068 = vld [vmem:[%s856 + $0x69] sm:$0xff]
        %v1069 = vld [vmem:[%s856 + $0x79] sm:$0xff]
        %v1070 = vld [vmem:[%s856 + $0x81] sm:$0xff]
        %v1071 = vld [vmem:[%s856 + $0x91] sm:$0xff]
        %v1072 = vld [vmem:[%s856 + $0x99] sm:$0xff]
        %v1073 = vld [vmem:[%s856 + $0xa9] sm:$0xff]
        %v1074 = vld [vmem:[%s856 + $0xb1] sm:$0xff]
        %v1075 = vpack.c.bf16 %v1060, %v1059
        %v1076 = vpack.c.bf16 %v1062, %v1061
        %v1077 = vpack.c.bf16 %v1064, %v1063
        %v1078 = vpack.c.bf16 %v1066, %v1065
        %v1079 = vpack.c.bf16 %v1068, %v1067
        %v1080 = vpack.c.bf16 %v1070, %v1069
        %v1081 = vpack.c.bf16 %v1072, %v1071
        %v1082 = vpack.c.bf16 %v1074, %v1073
        %s1083 = scalar_lea.vmem %s1, 256
        %v1084 = vld [vmem:[%s1083] sm:$0xf]
        %v1085 = vld [vmem:[%s1083 + $0x4] sm:$0xf]
        %v1086 = vld [vmem:[%s1083 + $0x8] sm:$0xf]
        %v1087 = vld [vmem:[%s1083 + $0xc] sm:$0xf]
        %v1088 = vld [vmem:[%s1083 + $0x10] sm:$0xf]
        %v1089 = vld [vmem:[%s1083 + $0x14] sm:$0xf]
        %v1090 = vld [vmem:[%s1083 + $0x18] sm:$0xf]
        %v1091 = vld [vmem:[%s1083 + $0x1c] sm:$0xf]
        %v1092 = vld [vmem:[%s1083 + $0x20] sm:$0xf]
        %v1093 = vld [vmem:[%s1083 + $0x24] sm:$0xf]
        %v1094 = vld [vmem:[%s1083 + $0x28] sm:$0xf]
        %v1095 = vld [vmem:[%s1083 + $0x2c] sm:$0xf]
        %v1096 = vld [vmem:[%s1083 + $0x30] sm:$0xf]
        %v1097 = vld [vmem:[%s1083 + $0x34] sm:$0xf]
        %v1098 = vld [vmem:[%s1083 + $0x38] sm:$0xf]
        %v1099 = vld [vmem:[%s1083 + $0x3c] sm:$0xf]
        %v1116 = vunpack.c.l.b16 %v1084
        %v1117 = vunpack.c.l.b16 %v1085
        %v1118 = vunpack.c.l.b16 %v1086
        %v1119 = vunpack.c.l.b16 %v1087
        %v1120 = vunpack.c.l.b16 %v1088
        %v1121 = vunpack.c.l.b16 %v1089
        %v1122 = vunpack.c.l.b16 %v1090
        %v1123 = vunpack.c.l.b16 %v1091
        %v1124 = vunpack.c.l.b16 %v1092
        %v1125 = vunpack.c.l.b16 %v1093
        %v1126 = vunpack.c.l.b16 %v1094
        %v1127 = vunpack.c.l.b16 %v1095
        %v1128 = vunpack.c.l.b16 %v1096
        %v1129 = vunpack.c.l.b16 %v1097
        %v1130 = vunpack.c.l.b16 %v1098
        %v1131 = vunpack.c.l.b16 %v1099
        %v1132 = vpack.c.b16 %v1117, %v1116
        %v1133 = vpack.c.b16 %v1119, %v1118
        %v1134 = vpack.c.b16 %v1121, %v1120
        %v1135 = vpack.c.b16 %v1123, %v1122
        %v1136 = vpack.c.b16 %v1125, %v1124
        %v1137 = vpack.c.b16 %v1127, %v1126
        %v1138 = vpack.c.b16 %v1129, %v1128
        %v1139 = vpack.c.b16 %v1131, %v1130
        %1148 = vmatprep.subr.bf16.mxu0 0
        %1149 = vmatpush1.bf16.msra.mxu0 %v1132
        %1150 = vmatprep.subr.bf16.mxu0 0
        %1151 = vmatpush1.bf16.msra.mxu0 %v1133
        %1152 = vmatprep.subr.bf16.mxu0 0
        %1153 = vmatpush1.bf16.msra.mxu0 %v1134
        %1154 = vmatprep.subr.bf16.mxu0 0
        %1155 = vmatpush1.bf16.msra.mxu0 %v1135
        %1156 = vmatprep.subr.bf16.mxu0 0
        %1157 = vmatpush1.bf16.msra.mxu0 %v1136
        %1158 = vmatprep.subr.bf16.mxu0 0
        %1159 = vmatpush1.bf16.msra.mxu0 %v1137
        %1160 = vmatprep.subr.bf16.mxu0 0
        %1161 = vmatpush1.bf16.msra.mxu0 %v1138
        %1162 = vmatprep.subr.bf16.mxu0 0
        %1163 = vmatpush1.bf16.msra.mxu0 %v1139
        %1164 = vmatprep.subr.bf16.mxu0 0
        %1165 = vmatpush1.bf16.msra.mxu0 0
        %1166 = vmatprep.subr.bf16.mxu0 0
        %1167 = vmatpush1.bf16.msra.mxu0 0
        %1168 = vmatprep.subr.bf16.mxu0 0
        %1169 = vmatpush1.bf16.msra.mxu0 0
        %1170 = vmatprep.subr.bf16.mxu0 0
        %1171 = vmatpush1.bf16.msra.mxu0 0
        %1172 = vmatprep.subr.bf16.mxu0 0
        %1173 = vmatpush1.bf16.msra.mxu0 0
        %1174 = vmatprep.subr.bf16.mxu0 0
        %1175 = vmatpush1.bf16.msra.mxu0 0
        %1176 = vmatprep.subr.bf16.mxu0 0
        %1177 = vmatpush1.bf16.msra.mxu0 0
        %1178 = vmatprep.subr.bf16.mxu0 0
        %1179 = vmatpush1.bf16.msra.mxu0 0
        %1180 = vmatprep.mubr.bf16.mxu0 0
        %1181 = vmatmul.mubr.bf16.gmra.mrb[0].mxu0 %v1075
        %v1182 = vpop.f32.mrb[0].mxu0
        %v1183 = vadd.f32 0.0, %v1182
        %v1184 = vpop.f32.mrb[0].mxu0
        %v1185 = vpop.f32.mrb[0].mxu0
        %v1186 = vadd.f32 0.0, %v1185
        %v1187 = vpop.f32.mrb[0].mxu0
        %1188 = vmatprep.mubr.bf16.mxu0 0
        %1189 = vmatmul.mubr.bf16.gmra.mrb[0].mxu0 %v1076
        %v1190 = vpop.f32.mrb[0].mxu0
        %v1191 = vadd.f32 0.0, %v1190
        %v1192 = vpop.f32.mrb[0].mxu0
        %v1193 = vpop.f32.mrb[0].mxu0
        %v1194 = vadd.f32 0.0, %v1193
        %v1195 = vpop.f32.mrb[0].mxu0
        %1196 = vmatprep.mubr.bf16.mxu0 0
        %1197 = vmatmul.mubr.bf16.gmra.mrb[0].mxu0 %v1077
        %v1198 = vpop.f32.mrb[0].mxu0
        %v1199 = vadd.f32 0.0, %v1198
        %v1200 = vpop.f32.mrb[0].mxu0
        %v1201 = vpop.f32.mrb[0].mxu0
        %v1202 = vadd.f32 0.0, %v1201
        %v1203 = vpop.f32.mrb[0].mxu0
        %1204 = vmatprep.mubr.bf16.mxu0 0
        %1205 = vmatmul.mubr.bf16.gmra.mrb[0].mxu0 %v1078
        %v1206 = vpop.f32.mrb[0].mxu0
        %v1207 = vadd.f32 0.0, %v1206
        %v1208 = vpop.f32.mrb[0].mxu0
        %v1209 = vpop.f32.mrb[0].mxu0
        %v1210 = vadd.f32 0.0, %v1209
        %v1211 = vpop.f32.mrb[0].mxu0
        %1212 = vmatprep.mubr.bf16.mxu0 0
        %1213 = vmatmul.mubr.bf16.gmra.mrb[0].mxu0 %v1079
        %v1214 = vpop.f32.mrb[0].mxu0
        %v1215 = vadd.f32 0.0, %v1214
        %v1216 = vpop.f32.mrb[0].mxu0
        %v1217 = vpop.f32.mrb[0].mxu0
        %v1218 = vadd.f32 0.0, %v1217
        %v1219 = vpop.f32.mrb[0].mxu0
        %1220 = vmatprep.mubr.bf16.mxu0 0
        %1221 = vmatmul.mubr.bf16.gmra.mrb[0].mxu0 %v1080
        %v1222 = vpop.f32.mrb[0].mxu0
        %v1223 = vadd.f32 0.0, %v1222
        %v1224 = vpop.f32.mrb[0].mxu0
        %v1225 = vpop.f32.mrb[0].mxu0
        %v1226 = vadd.f32 0.0, %v1225
        %v1227 = vpop.f32.mrb[0].mxu0
        %1228 = vmatprep.mubr.bf16.mxu0 0
        %1229 = vmatmul.mubr.bf16.gmra.mrb[0].mxu0 %v1081
        %v1230 = vpop.f32.mrb[0].mxu0
        %v1231 = vadd.f32 0.0, %v1230
        %v1232 = vpop.f32.mrb[0].mxu0
        %v1233 = vpop.f32.mrb[0].mxu0
        %v1234 = vadd.f32 0.0, %v1233
        %v1235 = vpop.f32.mrb[0].mxu0
        %1236 = vmatprep.mubr.bf16.mxu0 0
        %1237 = vmatmul.mubr.bf16.gmra.mrb[0].mxu0 %v1082
        %v1238 = vpop.f32.mrb[0].mxu0
        %v1239 = vadd.f32 0.0, %v1238
        %v1240 = vpop.f32.mrb[0].mxu0
        %v1241 = vpop.f32.mrb[0].mxu0
        %v1242 = vadd.f32 0.0, %v1241
        %v1243 = vpop.f32.mrb[0].mxu0
        %1244 = vdwg.mxu0
        %v1245 = vadd.f32 %v1043, %v1183
        %v1246 = vadd.f32 %v1044, %v1186
        %v1247 = vadd.f32 %v1045, %v1191
        %v1248 = vadd.f32 %v1046, %v1194
        %v1249 = vadd.f32 %v1047, %v1199
        %v1250 = vadd.f32 %v1048, %v1202
        %v1251 = vadd.f32 %v1049, %v1207
        %v1252 = vadd.f32 %v1050, %v1210
        %v1253 = vadd.f32 %v1051, %v1215
        %v1254 = vadd.f32 %v1052, %v1218
        %v1255 = vadd.f32 %v1053, %v1223
        %v1256 = vadd.f32 %v1054, %v1226
        %v1257 = vadd.f32 %v1055, %v1231
        %v1258 = vadd.f32 %v1056, %v1234
        %v1259 = vadd.f32 %v1057, %v1239
        %v1260 = vadd.f32 %v1058, %v1242
        %v1261 = vld [vmem:[%s856 + $0x2] sm:$0xff]
        %v1262 = vld [vmem:[%s856 + $0xa] sm:$0xff]
        %v1263 = vld [vmem:[%s856 + $0x1a] sm:$0xff]
        %v1264 = vld [vmem:[%s856 + $0x22] sm:$0xff]
        %v1265 = vld [vmem:[%s856 + $0x32] sm:$0xff]
        %v1266 = vld [vmem:[%s856 + $0x3a] sm:$0xff]
        %v1267 = vld [vmem:[%s856 + $0x4a] sm:$0xff]
        %v1268 = vld [vmem:[%s856 + $0x52] sm:$0xff]
        %v1269 = vld [vmem:[%s856 + $0x62] sm:$0xff]
        %v1270 = vld [vmem:[%s856 + $0x6a] sm:$0xff]
        %v1271 = vld [vmem:[%s856 + $0x7a] sm:$0xff]
        %v1272 = vld [vmem:[%s856 + $0x82] sm:$0xff]
        %v1273 = vld [vmem:[%s856 + $0x92] sm:$0xff]
        %v1274 = vld [vmem:[%s856 + $0x9a] sm:$0xff]
        %v1275 = vld [vmem:[%s856 + $0xaa] sm:$0xff]
        %v1276 = vld [vmem:[%s856 + $0xb2] sm:$0xff]
        %v1277 = vpack.c.bf16 %v1262, %v1261
        %v1278 = vpack.c.bf16 %v1264, %v1263
        %v1279 = vpack.c.bf16 %v1266, %v1265
        %v1280 = vpack.c.bf16 %v1268, %v1267
        %v1281 = vpack.c.bf16 %v1270, %v1269
        %v1282 = vpack.c.bf16 %v1272, %v1271
        %v1283 = vpack.c.bf16 %v1274, %v1273
        %v1284 = vpack.c.bf16 %v1276, %v1275
        %s1285 = scalar_lea.vmem %s1, 320
        %v1286 = vld [vmem:[%s1285] sm:$0xf]
        %v1287 = vld [vmem:[%s1285 + $0x4] sm:$0xf]
        %v1288 = vld [vmem:[%s1285 + $0x8] sm:$0xf]
        %v1289 = vld [vmem:[%s1285 + $0xc] sm:$0xf]
        %v1290 = vld [vmem:[%s1285 + $0x10] sm:$0xf]
        %v1291 = vld [vmem:[%s1285 + $0x14] sm:$0xf]
        %v1292 = vld [vmem:[%s1285 + $0x18] sm:$0xf]
        %v1293 = vld [vmem:[%s1285 + $0x1c] sm:$0xf]
        %v1294 = vld [vmem:[%s1285 + $0x20] sm:$0xf]
        %v1295 = vld [vmem:[%s1285 + $0x24] sm:$0xf]
        %v1296 = vld [vmem:[%s1285 + $0x28] sm:$0xf]
        %v1297 = vld [vmem:[%s1285 + $0x2c] sm:$0xf]
        %v1298 = vld [vmem:[%s1285 + $0x30] sm:$0xf]
        %v1299 = vld [vmem:[%s1285 + $0x34] sm:$0xf]
        %v1300 = vld [vmem:[%s1285 + $0x38] sm:$0xf]
        %v1301 = vld [vmem:[%s1285 + $0x3c] sm:$0xf]
        %v1318 = vunpack.c.l.b16 %v1286
        %v1319 = vunpack.c.l.b16 %v1287
        %v1320 = vunpack.c.l.b16 %v1288
        %v1321 = vunpack.c.l.b16 %v1289
        %v1322 = vunpack.c.l.b16 %v1290
        %v1323 = vunpack.c.l.b16 %v1291
        %v1324 = vunpack.c.l.b16 %v1292
        %v1325 = vunpack.c.l.b16 %v1293
        %v1326 = vunpack.c.l.b16 %v1294
        %v1327 = vunpack.c.l.b16 %v1295
        %v1328 = vunpack.c.l.b16 %v1296
        %v1329 = vunpack.c.l.b16 %v1297
        %v1330 = vunpack.c.l.b16 %v1298
        %v1331 = vunpack.c.l.b16 %v1299
        %v1332 = vunpack.c.l.b16 %v1300
        %v1333 = vunpack.c.l.b16 %v1301
        %v1334 = vpack.c.b16 %v1319, %v1318
        %v1335 = vpack.c.b16 %v1321, %v1320
        %v1336 = vpack.c.b16 %v1323, %v1322
        %v1337 = vpack.c.b16 %v1325, %v1324
        %v1338 = vpack.c.b16 %v1327, %v1326
        %v1339 = vpack.c.b16 %v1329, %v1328
        %v1340 = vpack.c.b16 %v1331, %v1330
        %v1341 = vpack.c.b16 %v1333, %v1332
        %1350 = vmatprep.subr.bf16.mxu0 0
        %1351 = vmatpush1.bf16.msra.mxu0 %v1334
        %1352 = vmatprep.subr.bf16.mxu0 0
        %1353 = vmatpush1.bf16.msra.mxu0 %v1335
        %1354 = vmatprep.subr.bf16.mxu0 0
        %1355 = vmatpush1.bf16.msra.mxu0 %v1336
        %1356 = vmatprep.subr.bf16.mxu0 0
        %1357 = vmatpush1.bf16.msra.mxu0 %v1337
        %1358 = vmatprep.subr.bf16.mxu0 0
        %1359 = vmatpush1.bf16.msra.mxu0 %v1338
        %1360 = vmatprep.subr.bf16.mxu0 0
        %1361 = vmatpush1.bf16.msra.mxu0 %v1339
        %1362 = vmatprep.subr.bf16.mxu0 0
        %1363 = vmatpush1.bf16.msra.mxu0 %v1340
        %1364 = vmatprep.subr.bf16.mxu0 0
        %1365 = vmatpush1.bf16.msra.mxu0 %v1341
        %1366 = vmatprep.subr.bf16.mxu0 0
        %1367 = vmatpush1.bf16.msra.mxu0 0
        %1368 = vmatprep.subr.bf16.mxu0 0
        %1369 = vmatpush1.bf16.msra.mxu0 0
        %1370 = vmatprep.subr.bf16.mxu0 0
        %1371 = vmatpush1.bf16.msra.mxu0 0
        %1372 = vmatprep.subr.bf16.mxu0 0
        %1373 = vmatpush1.bf16.msra.mxu0 0
        %1374 = vmatprep.subr.bf16.mxu0 0
        %1375 = vmatpush1.bf16.msra.mxu0 0
        %1376 = vmatprep.subr.bf16.mxu0 0
        %1377 = vmatpush1.bf16.msra.mxu0 0
        %1378 = vmatprep.subr.bf16.mxu0 0
        %1379 = vmatpush1.bf16.msra.mxu0 0
        %1380 = vmatprep.subr.bf16.mxu0 0
        %1381 = vmatpush1.bf16.msra.mxu0 0
        %1382 = vmatprep.mubr.bf16.mxu0 0
        %1383 = vmatmul.mubr.bf16.gmra.mrb[0].mxu0 %v1277
        %v1384 = vpop.f32.mrb[0].mxu0
        %v1385 = vadd.f32 0.0, %v1384
        %v1386 = vpop.f32.mrb[0].mxu0
        %v1387 = vpop.f32.mrb[0].mxu0
        %v1388 = vadd.f32 0.0, %v1387
        %v1389 = vpop.f32.mrb[0].mxu0
        %1390 = vmatprep.mubr.bf16.mxu0 0
        %1391 = vmatmul.mubr.bf16.gmra.mrb[0].mxu0 %v1278
        %v1392 = vpop.f32.mrb[0].mxu0
        %v1393 = vadd.f32 0.0, %v1392
        %v1394 = vpop.f32.mrb[0].mxu0
        %v1395 = vpop.f32.mrb[0].mxu0
        %v1396 = vadd.f32 0.0, %v1395
        %v1397 = vpop.f32.mrb[0].mxu0
        %1398 = vmatprep.mubr.bf16.mxu0 0
        %1399 = vmatmul.mubr.bf16.gmra.mrb[0].mxu0 %v1279
        %v1400 = vpop.f32.mrb[0].mxu0
        %v1401 = vadd.f32 0.0, %v1400
        %v1402 = vpop.f32.mrb[0].mxu0
        %v1403 = vpop.f32.mrb[0].mxu0
        %v1404 = vadd.f32 0.0, %v1403
        %v1405 = vpop.f32.mrb[0].mxu0
        %1406 = vmatprep.mubr.bf16.mxu0 0
        %1407 = vmatmul.mubr.bf16.gmra.mrb[0].mxu0 %v1280
        %v1408 = vpop.f32.mrb[0].mxu0
        %v1409 = vadd.f32 0.0, %v1408
        %v1410 = vpop.f32.mrb[0].mxu0
        %v1411 = vpop.f32.mrb[0].mxu0
        %v1412 = vadd.f32 0.0, %v1411
        %v1413 = vpop.f32.mrb[0].mxu0
        %1414 = vmatprep.mubr.bf16.mxu0 0
        %1415 = vmatmul.mubr.bf16.gmra.mrb[0].mxu0 %v1281
        %v1416 = vpop.f32.mrb[0].mxu0
        %v1417 = vadd.f32 0.0, %v1416
        %v1418 = vpop.f32.mrb[0].mxu0
        %v1419 = vpop.f32.mrb[0].mxu0
        %v1420 = vadd.f32 0.0, %v1419
        %v1421 = vpop.f32.mrb[0].mxu0
        %1422 = vmatprep.mubr.bf16.mxu0 0
        %1423 = vmatmul.mubr.bf16.gmra.mrb[0].mxu0 %v1282
        %v1424 = vpop.f32.mrb[0].mxu0
        %v1425 = vadd.f32 0.0, %v1424
        %v1426 = vpop.f32.mrb[0].mxu0
        %v1427 = vpop.f32.mrb[0].mxu0
        %v1428 = vadd.f32 0.0, %v1427
        %v1429 = vpop.f32.mrb[0].mxu0
        %1430 = vmatprep.mubr.bf16.mxu0 0
        %1431 = vmatmul.mubr.bf16.gmra.mrb[0].mxu0 %v1283
        %v1432 = vpop.f32.mrb[0].mxu0
        %v1433 = vadd.f32 0.0, %v1432
        %v1434 = vpop.f32.mrb[0].mxu0
        %v1435 = vpop.f32.mrb[0].mxu0
        %v1436 = vadd.f32 0.0, %v1435
        %v1437 = vpop.f32.mrb[0].mxu0
        %1438 = vmatprep.mubr.bf16.mxu0 0
        %1439 = vmatmul.mubr.bf16.gmra.mrb[0].mxu0 %v1284
        %v1440 = vpop.f32.mrb[0].mxu0
        %v1441 = vadd.f32 0.0, %v1440
        %v1442 = vpop.f32.mrb[0].mxu0
        %v1443 = vpop.f32.mrb[0].mxu0
        %v1444 = vadd.f32 0.0, %v1443
        %v1445 = vpop.f32.mrb[0].mxu0
        %1446 = vdwg.mxu0
        %v1447 = vadd.f32 %v1245, %v1385
        %v1448 = vadd.f32 %v1246, %v1388
        %v1449 = vadd.f32 %v1247, %v1393
        %v1450 = vadd.f32 %v1248, %v1396
        %v1451 = vadd.f32 %v1249, %v1401
        %v1452 = vadd.f32 %v1250, %v1404
        %v1453 = vadd.f32 %v1251, %v1409
        %v1454 = vadd.f32 %v1252, %v1412
        %v1455 = vadd.f32 %v1253, %v1417
        %v1456 = vadd.f32 %v1254, %v1420
        %v1457 = vadd.f32 %v1255, %v1425
        %v1458 = vadd.f32 %v1256, %v1428
        %v1459 = vadd.f32 %v1257, %v1433
        %v1460 = vadd.f32 %v1258, %v1436
        %v1461 = vadd.f32 %v1259, %v1441
        %v1462 = vadd.f32 %v1260, %v1444
        %s1463 = sadd.s32 %s278, 2
        %s1464 = smul.u32 %s1463, 24
        %s1465 = scalar_lea.vmem %s264, %s1464
        %v1466 = vld [vmem:[%s1465] sm:$0xff]
        %v1467 = vld [vmem:[%s1465 + $0x8] sm:$0xff]
        %v1468 = vld [vmem:[%s1465 + $0x18] sm:$0xff]
        %v1469 = vld [vmem:[%s1465 + $0x20] sm:$0xff]
        %v1470 = vld [vmem:[%s1465 + $0x30] sm:$0xff]
        %v1471 = vld [vmem:[%s1465 + $0x38] sm:$0xff]
        %v1472 = vld [vmem:[%s1465 + $0x48] sm:$0xff]
        %v1473 = vld [vmem:[%s1465 + $0x50] sm:$0xff]
        %v1474 = vld [vmem:[%s1465 + $0x60] sm:$0xff]
        %v1475 = vld [vmem:[%s1465 + $0x68] sm:$0xff]
        %v1476 = vld [vmem:[%s1465 + $0x78] sm:$0xff]
        %v1477 = vld [vmem:[%s1465 + $0x80] sm:$0xff]
        %v1478 = vld [vmem:[%s1465 + $0x90] sm:$0xff]
        %v1479 = vld [vmem:[%s1465 + $0x98] sm:$0xff]
        %v1480 = vld [vmem:[%s1465 + $0xa8] sm:$0xff]
        %v1481 = vld [vmem:[%s1465 + $0xb0] sm:$0xff]
        %v1482 = vpack.c.bf16 %v1467, %v1466
        %v1483 = vpack.c.bf16 %v1469, %v1468
        %v1484 = vpack.c.bf16 %v1471, %v1470
        %v1485 = vpack.c.bf16 %v1473, %v1472
        %v1486 = vpack.c.bf16 %v1475, %v1474
        %v1487 = vpack.c.bf16 %v1477, %v1476
        %v1488 = vpack.c.bf16 %v1479, %v1478
        %v1489 = vpack.c.bf16 %v1481, %v1480
        %s1490 = scalar_lea.vmem %s1, 384
        %v1491 = vld [vmem:[%s1490] sm:$0xf]
        %v1492 = vld [vmem:[%s1490 + $0x4] sm:$0xf]
        %v1493 = vld [vmem:[%s1490 + $0x8] sm:$0xf]
        %v1494 = vld [vmem:[%s1490 + $0xc] sm:$0xf]
        %v1495 = vld [vmem:[%s1490 + $0x10] sm:$0xf]
        %v1496 = vld [vmem:[%s1490 + $0x14] sm:$0xf]
        %v1497 = vld [vmem:[%s1490 + $0x18] sm:$0xf]
        %v1498 = vld [vmem:[%s1490 + $0x1c] sm:$0xf]
        %v1499 = vld [vmem:[%s1490 + $0x20] sm:$0xf]
        %v1500 = vld [vmem:[%s1490 + $0x24] sm:$0xf]
        %v1501 = vld [vmem:[%s1490 + $0x28] sm:$0xf]
        %v1502 = vld [vmem:[%s1490 + $0x2c] sm:$0xf]
        %v1503 = vld [vmem:[%s1490 + $0x30] sm:$0xf]
        %v1504 = vld [vmem:[%s1490 + $0x34] sm:$0xf]
        %v1505 = vld [vmem:[%s1490 + $0x38] sm:$0xf]
        %v1506 = vld [vmem:[%s1490 + $0x3c] sm:$0xf]
        %v1523 = vunpack.c.l.b16 %v1491
        %v1524 = vunpack.c.l.b16 %v1492
        %v1525 = vunpack.c.l.b16 %v1493
        %v1526 = vunpack.c.l.b16 %v1494
        %v1527 = vunpack.c.l.b16 %v1495
        %v1528 = vunpack.c.l.b16 %v1496
        %v1529 = vunpack.c.l.b16 %v1497
        %v1530 = vunpack.c.l.b16 %v1498
        %v1531 = vunpack.c.l.b16 %v1499
        %v1532 = vunpack.c.l.b16 %v1500
        %v1533 = vunpack.c.l.b16 %v1501
        %v1534 = vunpack.c.l.b16 %v1502
        %v1535 = vunpack.c.l.b16 %v1503
        %v1536 = vunpack.c.l.b16 %v1504
        %v1537 = vunpack.c.l.b16 %v1505
        %v1538 = vunpack.c.l.b16 %v1506
        %v1539 = vpack.c.b16 %v1524, %v1523
        %v1540 = vpack.c.b16 %v1526, %v1525
        %v1541 = vpack.c.b16 %v1528, %v1527
        %v1542 = vpack.c.b16 %v1530, %v1529
        %v1543 = vpack.c.b16 %v1532, %v1531
        %v1544 = vpack.c.b16 %v1534, %v1533
        %v1545 = vpack.c.b16 %v1536, %v1535
        %v1546 = vpack.c.b16 %v1538, %v1537
        %1555 = vmatprep.subr.bf16.mxu0 0
        %1556 = vmatpush1.bf16.msra.mxu0 %v1539
        %1557 = vmatprep.subr.bf16.mxu0 0
        %1558 = vmatpush1.bf16.msra.mxu0 %v1540
        %1559 = vmatprep.subr.bf16.mxu0 0
        %1560 = vmatpush1.bf16.msra.mxu0 %v1541
        %1561 = vmatprep.subr.bf16.mxu0 0
        %1562 = vmatpush1.bf16.msra.mxu0 %v1542
        %1563 = vmatprep.subr.bf16.mxu0 0
        %1564 = vmatpush1.bf16.msra.mxu0 %v1543
        %1565 = vmatprep.subr.bf16.mxu0 0
        %1566 = vmatpush1.bf16.msra.mxu0 %v1544
        %1567 = vmatprep.subr.bf16.mxu0 0
        %1568 = vmatpush1.bf16.msra.mxu0 %v1545
        %1569 = vmatprep.subr.bf16.mxu0 0
        %1570 = vmatpush1.bf16.msra.mxu0 %v1546
        %1571 = vmatprep.subr.bf16.mxu0 0
        %1572 = vmatpush1.bf16.msra.mxu0 0
        %1573 = vmatprep.subr.bf16.mxu0 0
        %1574 = vmatpush1.bf16.msra.mxu0 0
        %1575 = vmatprep.subr.bf16.mxu0 0
        %1576 = vmatpush1.bf16.msra.mxu0 0
        %1577 = vmatprep.subr.bf16.mxu0 0
        %1578 = vmatpush1.bf16.msra.mxu0 0
        %1579 = vmatprep.subr.bf16.mxu0 0
        %1580 = vmatpush1.bf16.msra.mxu0 0
        %1581 = vmatprep.subr.bf16.mxu0 0
        %1582 = vmatpush1.bf16.msra.mxu0 0
        %1583 = vmatprep.subr.bf16.mxu0 0
        %1584 = vmatpush1.bf16.msra.mxu0 0
        %1585 = vmatprep.subr.bf16.mxu0 0
        %1586 = vmatpush1.bf16.msra.mxu0 0
        %1587 = vmatprep.mubr.bf16.mxu0 0
        %1588 = vmatmul.mubr.bf16.gmra.mrb[0].mxu0 %v1482
        %v1589 = vpop.f32.mrb[0].mxu0
        %v1590 = vadd.f32 0.0, %v1589
        %v1591 = vpop.f32.mrb[0].mxu0
        %v1592 = vpop.f32.mrb[0].mxu0
        %v1593 = vadd.f32 0.0, %v1592
        %v1594 = vpop.f32.mrb[0].mxu0
        %1595 = vmatprep.mubr.bf16.mxu0 0
        %1596 = vmatmul.mubr.bf16.gmra.mrb[0].mxu0 %v1483
        %v1597 = vpop.f32.mrb[0].mxu0
        %v1598 = vadd.f32 0.0, %v1597
        %v1599 = vpop.f32.mrb[0].mxu0
        %v1600 = vpop.f32.mrb[0].mxu0
        %v1601 = vadd.f32 0.0, %v1600
        %v1602 = vpop.f32.mrb[0].mxu0
        %1603 = vmatprep.mubr.bf16.mxu0 0
        %1604 = vmatmul.mubr.bf16.gmra.mrb[0].mxu0 %v1484
        %v1605 = vpop.f32.mrb[0].mxu0
        %v1606 = vadd.f32 0.0, %v1605
        %v1607 = vpop.f32.mrb[0].mxu0
        %v1608 = vpop.f32.mrb[0].mxu0
        %v1609 = vadd.f32 0.0, %v1608
        %v1610 = vpop.f32.mrb[0].mxu0
        %1611 = vmatprep.mubr.bf16.mxu0 0
        %1612 = vmatmul.mubr.bf16.gmra.mrb[0].mxu0 %v1485
        %v1613 = vpop.f32.mrb[0].mxu0
        %v1614 = vadd.f32 0.0, %v1613
        %v1615 = vpop.f32.mrb[0].mxu0
        %v1616 = vpop.f32.mrb[0].mxu0
        %v1617 = vadd.f32 0.0, %v1616
        %v1618 = vpop.f32.mrb[0].mxu0
        %1619 = vmatprep.mubr.bf16.mxu0 0
        %1620 = vmatmul.mubr.bf16.gmra.mrb[0].mxu0 %v1486
        %v1621 = vpop.f32.mrb[0].mxu0
        %v1622 = vadd.f32 0.0, %v1621
        %v1623 = vpop.f32.mrb[0].mxu0
        %v1624 = vpop.f32.mrb[0].mxu0
        %v1625 = vadd.f32 0.0, %v1624
        %v1626 = vpop.f32.mrb[0].mxu0
        %1627 = vmatprep.mubr.bf16.mxu0 0
        %1628 = vmatmul.mubr.bf16.gmra.mrb[0].mxu0 %v1487
        %v1629 = vpop.f32.mrb[0].mxu0
        %v1630 = vadd.f32 0.0, %v1629
        %v1631 = vpop.f32.mrb[0].mxu0
        %v1632 = vpop.f32.mrb[0].mxu0
        %v1633 = vadd.f32 0.0, %v1632
        %v1634 = vpop.f32.mrb[0].mxu0
        %1635 = vmatprep.mubr.bf16.mxu0 0
        %1636 = vmatmul.mubr.bf16.gmra.mrb[0].mxu0 %v1488
        %v1637 = vpop.f32.mrb[0].mxu0
        %v1638 = vadd.f32 0.0, %v1637
        %v1639 = vpop.f32.mrb[0].mxu0
        %v1640 = vpop.f32.mrb[0].mxu0
        %v1641 = vadd.f32 0.0, %v1640
        %v1642 = vpop.f32.mrb[0].mxu0
        %1643 = vmatprep.mubr.bf16.mxu0 0
        %1644 = vmatmul.mubr.bf16.gmra.mrb[0].mxu0 %v1489
        %v1645 = vpop.f32.mrb[0].mxu0
        %v1646 = vadd.f32 0.0, %v1645
        %v1647 = vpop.f32.mrb[0].mxu0
        %v1648 = vpop.f32.mrb[0].mxu0
        %v1649 = vadd.f32 0.0, %v1648
        %v1650 = vpop.f32.mrb[0].mxu0
        %1651 = vdwg.mxu0
        %v1652 = vadd.f32 %v1447, %v1590
        %v1653 = vadd.f32 %v1448, %v1593
        %v1654 = vadd.f32 %v1449, %v1598
        %v1655 = vadd.f32 %v1450, %v1601
        %v1656 = vadd.f32 %v1451, %v1606
        %v1657 = vadd.f32 %v1452, %v1609
        %v1658 = vadd.f32 %v1453, %v1614
        %v1659 = vadd.f32 %v1454, %v1617
        %v1660 = vadd.f32 %v1455, %v1622
        %v1661 = vadd.f32 %v1456, %v1625
        %v1662 = vadd.f32 %v1457, %v1630
        %v1663 = vadd.f32 %v1458, %v1633
        %v1664 = vadd.f32 %v1459, %v1638
        %v1665 = vadd.f32 %v1460, %v1641
        %v1666 = vadd.f32 %v1461, %v1646
        %v1667 = vadd.f32 %v1462, %v1649
        %v1668 = vld [vmem:[%s1465 + $0x1] sm:$0xff]
        %v1669 = vld [vmem:[%s1465 + $0x9] sm:$0xff]
        %v1670 = vld [vmem:[%s1465 + $0x19] sm:$0xff]
        %v1671 = vld [vmem:[%s1465 + $0x21] sm:$0xff]
        %v1672 = vld [vmem:[%s1465 + $0x31] sm:$0xff]
        %v1673 = vld [vmem:[%s1465 + $0x39] sm:$0xff]
        %v1674 = vld [vmem:[%s1465 + $0x49] sm:$0xff]
        %v1675 = vld [vmem:[%s1465 + $0x51] sm:$0xff]
        %v1676 = vld [vmem:[%s1465 + $0x61] sm:$0xff]
        %v1677 = vld [vmem:[%s1465 + $0x69] sm:$0xff]
        %v1678 = vld [vmem:[%s1465 + $0x79] sm:$0xff]
        %v1679 = vld [vmem:[%s1465 + $0x81] sm:$0xff]
        %v1680 = vld [vmem:[%s1465 + $0x91] sm:$0xff]
        %v1681 = vld [vmem:[%s1465 + $0x99] sm:$0xff]
        %v1682 = vld [vmem:[%s1465 + $0xa9] sm:$0xff]
        %v1683 = vld [vmem:[%s1465 + $0xb1] sm:$0xff]
        %v1684 = vpack.c.bf16 %v1669, %v1668
        %v1685 = vpack.c.bf16 %v1671, %v1670
        %v1686 = vpack.c.bf16 %v1673, %v1672
        %v1687 = vpack.c.bf16 %v1675, %v1674
        %v1688 = vpack.c.bf16 %v1677, %v1676
        %v1689 = vpack.c.bf16 %v1679, %v1678
        %v1690 = vpack.c.bf16 %v1681, %v1680
        %v1691 = vpack.c.bf16 %v1683, %v1682
        %s1692 = scalar_lea.vmem %s1, 448
        %v1693 = vld [vmem:[%s1692] sm:$0xf]
        %v1694 = vld [vmem:[%s1692 + $0x4] sm:$0xf]
        %v1695 = vld [vmem:[%s1692 + $0x8] sm:$0xf]
        %v1696 = vld [vmem:[%s1692 + $0xc] sm:$0xf]
        %v1697 = vld [vmem:[%s1692 + $0x10] sm:$0xf]
        %v1698 = vld [vmem:[%s1692 + $0x14] sm:$0xf]
        %v1699 = vld [vmem:[%s1692 + $0x18] sm:$0xf]
        %v1700 = vld [vmem:[%s1692 + $0x1c] sm:$0xf]
        %v1701 = vld [vmem:[%s1692 + $0x20] sm:$0xf]
        %v1702 = vld [vmem:[%s1692 + $0x24] sm:$0xf]
        %v1703 = vld [vmem:[%s1692 + $0x28] sm:$0xf]
        %v1704 = vld [vmem:[%s1692 + $0x2c] sm:$0xf]
        %v1705 = vld [vmem:[%s1692 + $0x30] sm:$0xf]
        %v1706 = vld [vmem:[%s1692 + $0x34] sm:$0xf]
        %v1707 = vld [vmem:[%s1692 + $0x38] sm:$0xf]
        %v1708 = vld [vmem:[%s1692 + $0x3c] sm:$0xf]
        %v1725 = vunpack.c.l.b16 %v1693
        %v1726 = vunpack.c.l.b16 %v1694
        %v1727 = vunpack.c.l.b16 %v1695
        %v1728 = vunpack.c.l.b16 %v1696
        %v1729 = vunpack.c.l.b16 %v1697
        %v1730 = vunpack.c.l.b16 %v1698
        %v1731 = vunpack.c.l.b16 %v1699
        %v1732 = vunpack.c.l.b16 %v1700
        %v1733 = vunpack.c.l.b16 %v1701
        %v1734 = vunpack.c.l.b16 %v1702
        %v1735 = vunpack.c.l.b16 %v1703
        %v1736 = vunpack.c.l.b16 %v1704
        %v1737 = vunpack.c.l.b16 %v1705
        %v1738 = vunpack.c.l.b16 %v1706
        %v1739 = vunpack.c.l.b16 %v1707
        %v1740 = vunpack.c.l.b16 %v1708
        %v1741 = vpack.c.b16 %v1726, %v1725
        %v1742 = vpack.c.b16 %v1728, %v1727
        %v1743 = vpack.c.b16 %v1730, %v1729
        %v1744 = vpack.c.b16 %v1732, %v1731
        %v1745 = vpack.c.b16 %v1734, %v1733
        %v1746 = vpack.c.b16 %v1736, %v1735
        %v1747 = vpack.c.b16 %v1738, %v1737
        %v1748 = vpack.c.b16 %v1740, %v1739
        %1757 = vmatprep.subr.bf16.mxu0 0
        %1758 = vmatpush1.bf16.msra.mxu0 %v1741
        %1759 = vmatprep.subr.bf16.mxu0 0
        %1760 = vmatpush1.bf16.msra.mxu0 %v1742
        %1761 = vmatprep.subr.bf16.mxu0 0
        %1762 = vmatpush1.bf16.msra.mxu0 %v1743
        %1763 = vmatprep.subr.bf16.mxu0 0
        %1764 = vmatpush1.bf16.msra.mxu0 %v1744
        %1765 = vmatprep.subr.bf16.mxu0 0
        %1766 = vmatpush1.bf16.msra.mxu0 %v1745
        %1767 = vmatprep.subr.bf16.mxu0 0
        %1768 = vmatpush1.bf16.msra.mxu0 %v1746
        %1769 = vmatprep.subr.bf16.mxu0 0
        %1770 = vmatpush1.bf16.msra.mxu0 %v1747
        %1771 = vmatprep.subr.bf16.mxu0 0
        %1772 = vmatpush1.bf16.msra.mxu0 %v1748
        %1773 = vmatprep.subr.bf16.mxu0 0
        %1774 = vmatpush1.bf16.msra.mxu0 0
        %1775 = vmatprep.subr.bf16.mxu0 0
        %1776 = vmatpush1.bf16.msra.mxu0 0
        %1777 = vmatprep.subr.bf16.mxu0 0
        %1778 = vmatpush1.bf16.msra.mxu0 0
        %1779 = vmatprep.subr.bf16.mxu0 0
        %1780 = vmatpush1.bf16.msra.mxu0 0
        %1781 = vmatprep.subr.bf16.mxu0 0
        %1782 = vmatpush1.bf16.msra.mxu0 0
        %1783 = vmatprep.subr.bf16.mxu0 0
        %1784 = vmatpush1.bf16.msra.mxu0 0
        %1785 = vmatprep.subr.bf16.mxu0 0
        %1786 = vmatpush1.bf16.msra.mxu0 0
        %1787 = vmatprep.subr.bf16.mxu0 0
        %1788 = vmatpush1.bf16.msra.mxu0 0
        %1789 = vmatprep.mubr.bf16.mxu0 0
        %1790 = vmatmul.mubr.bf16.gmra.mrb[0].mxu0 %v1684
        %v1791 = vpop.f32.mrb[0].mxu0
        %v1792 = vadd.f32 0.0, %v1791
        %v1793 = vpop.f32.mrb[0].mxu0
        %v1794 = vpop.f32.mrb[0].mxu0
        %v1795 = vadd.f32 0.0, %v1794
        %v1796 = vpop.f32.mrb[0].mxu0
        %1797 = vmatprep.mubr.bf16.mxu0 0
        %1798 = vmatmul.mubr.bf16.gmra.mrb[0].mxu0 %v1685
        %v1799 = vpop.f32.mrb[0].mxu0
        %v1800 = vadd.f32 0.0, %v1799
        %v1801 = vpop.f32.mrb[0].mxu0
        %v1802 = vpop.f32.mrb[0].mxu0
        %v1803 = vadd.f32 0.0, %v1802
        %v1804 = vpop.f32.mrb[0].mxu0
        %1805 = vmatprep.mubr.bf16.mxu0 0
        %1806 = vmatmul.mubr.bf16.gmra.mrb[0].mxu0 %v1686
        %v1807 = vpop.f32.mrb[0].mxu0
        %v1808 = vadd.f32 0.0, %v1807
        %v1809 = vpop.f32.mrb[0].mxu0
        %v1810 = vpop.f32.mrb[0].mxu0
        %v1811 = vadd.f32 0.0, %v1810
        %v1812 = vpop.f32.mrb[0].mxu0
        %1813 = vmatprep.mubr.bf16.mxu0 0
        %1814 = vmatmul.mubr.bf16.gmra.mrb[0].mxu0 %v1687
        %v1815 = vpop.f32.mrb[0].mxu0
        %v1816 = vadd.f32 0.0, %v1815
        %v1817 = vpop.f32.mrb[0].mxu0
        %v1818 = vpop.f32.mrb[0].mxu0
        %v1819 = vadd.f32 0.0, %v1818
        %v1820 = vpop.f32.mrb[0].mxu0
        %1821 = vmatprep.mubr.bf16.mxu0 0
        %1822 = vmatmul.mubr.bf16.gmra.mrb[0].mxu0 %v1688
        %v1823 = vpop.f32.mrb[0].mxu0
        %v1824 = vadd.f32 0.0, %v1823
        %v1825 = vpop.f32.mrb[0].mxu0
        %v1826 = vpop.f32.mrb[0].mxu0
        %v1827 = vadd.f32 0.0, %v1826
        %v1828 = vpop.f32.mrb[0].mxu0
        %1829 = vmatprep.mubr.bf16.mxu0 0
        %1830 = vmatmul.mubr.bf16.gmra.mrb[0].mxu0 %v1689
        %v1831 = vpop.f32.mrb[0].mxu0
        %v1832 = vadd.f32 0.0, %v1831
        %v1833 = vpop.f32.mrb[0].mxu0
        %v1834 = vpop.f32.mrb[0].mxu0
        %v1835 = vadd.f32 0.0, %v1834
        %v1836 = vpop.f32.mrb[0].mxu0
        %1837 = vmatprep.mubr.bf16.mxu0 0
        %1838 = vmatmul.mubr.bf16.gmra.mrb[0].mxu0 %v1690
        %v1839 = vpop.f32.mrb[0].mxu0
        %v1840 = vadd.f32 0.0, %v1839
        %v1841 = vpop.f32.mrb[0].mxu0
        %v1842 = vpop.f32.mrb[0].mxu0
        %v1843 = vadd.f32 0.0, %v1842
        %v1844 = vpop.f32.mrb[0].mxu0
        %1845 = vmatprep.mubr.bf16.mxu0 0
        %1846 = vmatmul.mubr.bf16.gmra.mrb[0].mxu0 %v1691
        %v1847 = vpop.f32.mrb[0].mxu0
        %v1848 = vadd.f32 0.0, %v1847
        %v1849 = vpop.f32.mrb[0].mxu0
        %v1850 = vpop.f32.mrb[0].mxu0
        %v1851 = vadd.f32 0.0, %v1850
        %v1852 = vpop.f32.mrb[0].mxu0
        %1853 = vdwg.mxu0
        %v1854 = vadd.f32 %v1652, %v1792
        %v1855 = vadd.f32 %v1653, %v1795
        %v1856 = vadd.f32 %v1654, %v1800
        %v1857 = vadd.f32 %v1655, %v1803
        %v1858 = vadd.f32 %v1656, %v1808
        %v1859 = vadd.f32 %v1657, %v1811
        %v1860 = vadd.f32 %v1658, %v1816
        %v1861 = vadd.f32 %v1659, %v1819
        %v1862 = vadd.f32 %v1660, %v1824
        %v1863 = vadd.f32 %v1661, %v1827
        %v1864 = vadd.f32 %v1662, %v1832
        %v1865 = vadd.f32 %v1663, %v1835
        %v1866 = vadd.f32 %v1664, %v1840
        %v1867 = vadd.f32 %v1665, %v1843
        %v1868 = vadd.f32 %v1666, %v1848
        %v1869 = vadd.f32 %v1667, %v1851
        %v1870 = vld [vmem:[%s1465 + $0x2] sm:$0xff]
        %v1871 = vld [vmem:[%s1465 + $0xa] sm:$0xff]
        %v1872 = vld [vmem:[%s1465 + $0x1a] sm:$0xff]
        %v1873 = vld [vmem:[%s1465 + $0x22] sm:$0xff]
        %v1874 = vld [vmem:[%s1465 + $0x32] sm:$0xff]
        %v1875 = vld [vmem:[%s1465 + $0x3a] sm:$0xff]
        %v1876 = vld [vmem:[%s1465 + $0x4a] sm:$0xff]
        %v1877 = vld [vmem:[%s1465 + $0x52] sm:$0xff]
        %v1878 = vld [vmem:[%s1465 + $0x62] sm:$0xff]
        %v1879 = vld [vmem:[%s1465 + $0x6a] sm:$0xff]
        %v1880 = vld [vmem:[%s1465 + $0x7a] sm:$0xff]
        %v1881 = vld [vmem:[%s1465 + $0x82] sm:$0xff]
        %v1882 = vld [vmem:[%s1465 + $0x92] sm:$0xff]
        %v1883 = vld [vmem:[%s1465 + $0x9a] sm:$0xff]
        %v1884 = vld [vmem:[%s1465 + $0xaa] sm:$0xff]
        %v1885 = vld [vmem:[%s1465 + $0xb2] sm:$0xff]
        %v1886 = vpack.c.bf16 %v1871, %v1870
        %v1887 = vpack.c.bf16 %v1873, %v1872
        %v1888 = vpack.c.bf16 %v1875, %v1874
        %v1889 = vpack.c.bf16 %v1877, %v1876
        %v1890 = vpack.c.bf16 %v1879, %v1878
        %v1891 = vpack.c.bf16 %v1881, %v1880
        %v1892 = vpack.c.bf16 %v1883, %v1882
        %v1893 = vpack.c.bf16 %v1885, %v1884
        %s1894 = scalar_lea.vmem %s1, 512
        %v1895 = vld [vmem:[%s1894] sm:$0xf]
        %v1896 = vld [vmem:[%s1894 + $0x4] sm:$0xf]
        %v1897 = vld [vmem:[%s1894 + $0x8] sm:$0xf]
        %v1898 = vld [vmem:[%s1894 + $0xc] sm:$0xf]
        %v1899 = vld [vmem:[%s1894 + $0x10] sm:$0xf]
        %v1900 = vld [vmem:[%s1894 + $0x14] sm:$0xf]
        %v1901 = vld [vmem:[%s1894 + $0x18] sm:$0xf]
        %v1902 = vld [vmem:[%s1894 + $0x1c] sm:$0xf]
        %v1903 = vld [vmem:[%s1894 + $0x20] sm:$0xf]
        %v1904 = vld [vmem:[%s1894 + $0x24] sm:$0xf]
        %v1905 = vld [vmem:[%s1894 + $0x28] sm:$0xf]
        %v1906 = vld [vmem:[%s1894 + $0x2c] sm:$0xf]
        %v1907 = vld [vmem:[%s1894 + $0x30] sm:$0xf]
        %v1908 = vld [vmem:[%s1894 + $0x34] sm:$0xf]
        %v1909 = vld [vmem:[%s1894 + $0x38] sm:$0xf]
        %v1910 = vld [vmem:[%s1894 + $0x3c] sm:$0xf]
        %v1927 = vunpack.c.l.b16 %v1895
        %v1928 = vunpack.c.l.b16 %v1896
        %v1929 = vunpack.c.l.b16 %v1897
        %v1930 = vunpack.c.l.b16 %v1898
        %v1931 = vunpack.c.l.b16 %v1899
        %v1932 = vunpack.c.l.b16 %v1900
        %v1933 = vunpack.c.l.b16 %v1901
        %v1934 = vunpack.c.l.b16 %v1902
        %v1935 = vunpack.c.l.b16 %v1903
        %v1936 = vunpack.c.l.b16 %v1904
        %v1937 = vunpack.c.l.b16 %v1905
        %v1938 = vunpack.c.l.b16 %v1906
        %v1939 = vunpack.c.l.b16 %v1907
        %v1940 = vunpack.c.l.b16 %v1908
        %v1941 = vunpack.c.l.b16 %v1909
        %v1942 = vunpack.c.l.b16 %v1910
        %v1943 = vpack.c.b16 %v1928, %v1927
        %v1944 = vpack.c.b16 %v1930, %v1929
        %v1945 = vpack.c.b16 %v1932, %v1931
        %v1946 = vpack.c.b16 %v1934, %v1933
        %v1947 = vpack.c.b16 %v1936, %v1935
        %v1948 = vpack.c.b16 %v1938, %v1937
        %v1949 = vpack.c.b16 %v1940, %v1939
        %v1950 = vpack.c.b16 %v1942, %v1941
        %1959 = vmatprep.subr.bf16.mxu0 0
        %1960 = vmatpush1.bf16.msra.mxu0 %v1943
        %1961 = vmatprep.subr.bf16.mxu0 0
        %1962 = vmatpush1.bf16.msra.mxu0 %v1944
        %1963 = vmatprep.subr.bf16.mxu0 0
        %1964 = vmatpush1.bf16.msra.mxu0 %v1945
        %1965 = vmatprep.subr.bf16.mxu0 0
        %1966 = vmatpush1.bf16.msra.mxu0 %v1946
        %1967 = vmatprep.subr.bf16.mxu0 0
        %1968 = vmatpush1.bf16.msra.mxu0 %v1947
        %1969 = vmatprep.subr.bf16.mxu0 0
        %1970 = vmatpush1.bf16.msra.mxu0 %v1948
        %1971 = vmatprep.subr.bf16.mxu0 0
        %1972 = vmatpush1.bf16.msra.mxu0 %v1949
        %1973 = vmatprep.subr.bf16.mxu0 0
        %1974 = vmatpush1.bf16.msra.mxu0 %v1950
        %1975 = vmatprep.subr.bf16.mxu0 0
        %1976 = vmatpush1.bf16.msra.mxu0 0
        %1977 = vmatprep.subr.bf16.mxu0 0
        %1978 = vmatpush1.bf16.msra.mxu0 0
        %1979 = vmatprep.subr.bf16.mxu0 0
        %1980 = vmatpush1.bf16.msra.mxu0 0
        %1981 = vmatprep.subr.bf16.mxu0 0
        %1982 = vmatpush1.bf16.msra.mxu0 0
        %1983 = vmatprep.subr.bf16.mxu0 0
        %1984 = vmatpush1.bf16.msra.mxu0 0
        %1985 = vmatprep.subr.bf16.mxu0 0
        %1986 = vmatpush1.bf16.msra.mxu0 0
        %1987 = vmatprep.subr.bf16.mxu0 0
        %1988 = vmatpush1.bf16.msra.mxu0 0
        %1989 = vmatprep.subr.bf16.mxu0 0
        %1990 = vmatpush1.bf16.msra.mxu0 0
        %1991 = vmatprep.mubr.bf16.mxu0 0
        %1992 = vmatmul.mubr.bf16.gmra.mrb[0].mxu0 %v1886
        %v1993 = vpop.f32.mrb[0].mxu0
        %v1994 = vadd.f32 0.0, %v1993
        %v1995 = vpop.f32.mrb[0].mxu0
        %v1996 = vpop.f32.mrb[0].mxu0
        %v1997 = vadd.f32 0.0, %v1996
        %v1998 = vpop.f32.mrb[0].mxu0
        %1999 = vmatprep.mubr.bf16.mxu0 0
        %2000 = vmatmul.mubr.bf16.gmra.mrb[0].mxu0 %v1887
        %v2001 = vpop.f32.mrb[0].mxu0
        %v2002 = vadd.f32 0.0, %v2001
        %v2003 = vpop.f32.mrb[0].mxu0
        %v2004 = vpop.f32.mrb[0].mxu0
        %v2005 = vadd.f32 0.0, %v2004
        %v2006 = vpop.f32.mrb[0].mxu0
        %2007 = vmatprep.mubr.bf16.mxu0 0
        %2008 = vmatmul.mubr.bf16.gmra.mrb[0].mxu0 %v1888
        %v2009 = vpop.f32.mrb[0].mxu0
        %v2010 = vadd.f32 0.0, %v2009
        %v2011 = vpop.f32.mrb[0].mxu0
        %v2012 = vpop.f32.mrb[0].mxu0
        %v2013 = vadd.f32 0.0, %v2012
        %v2014 = vpop.f32.mrb[0].mxu0
        %2015 = vmatprep.mubr.bf16.mxu0 0
        %2016 = vmatmul.mubr.bf16.gmra.mrb[0].mxu0 %v1889
        %v2017 = vpop.f32.mrb[0].mxu0
        %v2018 = vadd.f32 0.0, %v2017
        %v2019 = vpop.f32.mrb[0].mxu0
        %v2020 = vpop.f32.mrb[0].mxu0
        %v2021 = vadd.f32 0.0, %v2020
        %v2022 = vpop.f32.mrb[0].mxu0
        %2023 = vmatprep.mubr.bf16.mxu0 0
        %2024 = vmatmul.mubr.bf16.gmra.mrb[0].mxu0 %v1890
        %v2025 = vpop.f32.mrb[0].mxu0
        %v2026 = vadd.f32 0.0, %v2025
        %v2027 = vpop.f32.mrb[0].mxu0
        %v2028 = vpop.f32.mrb[0].mxu0
        %v2029 = vadd.f32 0.0, %v2028
        %v2030 = vpop.f32.mrb[0].mxu0
        %2031 = vmatprep.mubr.bf16.mxu0 0
        %2032 = vmatmul.mubr.bf16.gmra.mrb[0].mxu0 %v1891
        %v2033 = vpop.f32.mrb[0].mxu0
        %v2034 = vadd.f32 0.0, %v2033
        %v2035 = vpop.f32.mrb[0].mxu0
        %v2036 = vpop.f32.mrb[0].mxu0
        %v2037 = vadd.f32 0.0, %v2036
        %v2038 = vpop.f32.mrb[0].mxu0
        %2039 = vmatprep.mubr.bf16.mxu0 0
        %2040 = vmatmul.mubr.bf16.gmra.mrb[0].mxu0 %v1892
        %v2041 = vpop.f32.mrb[0].mxu0
        %v2042 = vadd.f32 0.0, %v2041
        %v2043 = vpop.f32.mrb[0].mxu0
        %v2044 = vpop.f32.mrb[0].mxu0
        %v2045 = vadd.f32 0.0, %v2044
        %v2046 = vpop.f32.mrb[0].mxu0
        %2047 = vmatprep.mubr.bf16.mxu0 0
        %2048 = vmatmul.mubr.bf16.gmra.mrb[0].mxu0 %v1893
        %v2049 = vpop.f32.mrb[0].mxu0
        %v2050 = vadd.f32 0.0, %v2049
        %v2051 = vpop.f32.mrb[0].mxu0
        %v2052 = vpop.f32.mrb[0].mxu0
        %v2053 = vadd.f32 0.0, %v2052
        %v2054 = vpop.f32.mrb[0].mxu0
        %2055 = vdwg.mxu0
        %v2056 = vadd.f32 %v1854, %v1994
        %v2057 = vadd.f32 %v1855, %v1997
        %v2058 = vadd.f32 %v1856, %v2002
        %v2059 = vadd.f32 %v1857, %v2005
        %v2060 = vadd.f32 %v1858, %v2010
        %v2061 = vadd.f32 %v1859, %v2013
        %v2062 = vadd.f32 %v1860, %v2018
        %v2063 = vadd.f32 %v1861, %v2021
        %v2064 = vadd.f32 %v1862, %v2026
        %v2065 = vadd.f32 %v1863, %v2029
        %v2066 = vadd.f32 %v1864, %v2034
        %v2067 = vadd.f32 %v1865, %v2037
        %v2068 = vadd.f32 %v1866, %v2042
        %v2069 = vadd.f32 %v1867, %v2045
        %v2070 = vadd.f32 %v1868, %v2050
        %v2071 = vadd.f32 %v1869, %v2053
        %v2072 = vld [vmem:[%s2] sm:$0x1]
        %v2074 = vlaneseq
        %v2075 = vshrl.u32 %v2074, 7
        %v2076 = vsub.s32 0, %v2075
        %v2077 = vrot.slane %v2072, %v2076
        %v2079 = vmul.f32 %v2056, %v2077
        %v2080 = vmul.f32 %v2057, %v2077
        %v2081 = vmul.f32 %v2058, %v2077
        %v2082 = vmul.f32 %v2059, %v2077
        %v2083 = vmul.f32 %v2060, %v2077
        %v2084 = vmul.f32 %v2061, %v2077
        %v2085 = vmul.f32 %v2062, %v2077
        %v2086 = vmul.f32 %v2063, %v2077
        %v2087 = vmul.f32 %v2064, %v2077
        %v2088 = vmul.f32 %v2065, %v2077
        %v2089 = vmul.f32 %v2066, %v2077
        %v2090 = vmul.f32 %v2067, %v2077
        %v2091 = vmul.f32 %v2068, %v2077
        %v2092 = vmul.f32 %v2069, %v2077
        %v2093 = vmul.f32 %v2070, %v2077
        %v2094 = vmul.f32 %v2071, %v2077
        %v2095 = vld [vmem:[%s3] sm:$0x1]
        %v2097 = vlaneseq
        %v2098 = vshrl.u32 %v2097, 7
        %v2099 = vsub.s32 0, %v2098
        %v2100 = vrot.slane %v2095, %v2099
        %v2102 = vadd.f32 %v2079, %v2100
        %v2103 = vadd.f32 %v2080, %v2100
        %v2104 = vadd.f32 %v2081, %v2100
        %v2105 = vadd.f32 %v2082, %v2100
        %v2106 = vadd.f32 %v2083, %v2100
        %v2107 = vadd.f32 %v2084, %v2100
        %v2108 = vadd.f32 %v2085, %v2100
        %v2109 = vadd.f32 %v2086, %v2100
        %v2110 = vadd.f32 %v2087, %v2100
        %v2111 = vadd.f32 %v2088, %v2100
        %v2112 = vadd.f32 %v2089, %v2100
        %v2113 = vadd.f32 %v2090, %v2100
        %v2114 = vadd.f32 %v2091, %v2100
        %v2115 = vadd.f32 %v2092, %v2100
        %v2116 = vadd.f32 %v2093, %v2100
        %v2117 = vadd.f32 %v2094, %v2100
        %v2118 = vld [vmem:[%s274] sm:$0xff]
        %v2119 = vld [vmem:[%s274 + $0x8] sm:$0xff]
        %v2120 = vld [vmem:[%s274 + $0x10] sm:$0xff]
        %v2121 = vld [vmem:[%s274 + $0x18] sm:$0xff]
        %v2122 = vld [vmem:[%s274 + $0x20] sm:$0xff]
        %v2123 = vld [vmem:[%s274 + $0x28] sm:$0xff]
        %v2124 = vld [vmem:[%s274 + $0x30] sm:$0xff]
        %v2125 = vld [vmem:[%s274 + $0x38] sm:$0xff]
        %v2126 = vld [vmem:[%s274 + $0x40] sm:$0xff]
        %v2127 = vld [vmem:[%s274 + $0x48] sm:$0xff]
        %v2128 = vld [vmem:[%s274 + $0x50] sm:$0xff]
        %v2129 = vld [vmem:[%s274 + $0x58] sm:$0xff]
        %v2130 = vld [vmem:[%s274 + $0x60] sm:$0xff]
        %v2131 = vld [vmem:[%s274 + $0x68] sm:$0xff]
        %v2132 = vld [vmem:[%s274 + $0x70] sm:$0xff]
        %v2133 = vld [vmem:[%s274 + $0x78] sm:$0xff]
        %v2134 = vadd.f32 %v2102, %v2118
        %v2135 = vadd.f32 %v2103, %v2119
        %v2136 = vadd.f32 %v2104, %v2120
        %v2137 = vadd.f32 %v2105, %v2121
        %v2138 = vadd.f32 %v2106, %v2122
        %v2139 = vadd.f32 %v2107, %v2123
        %v2140 = vadd.f32 %v2108, %v2124
        %v2141 = vadd.f32 %v2109, %v2125
        %v2142 = vadd.f32 %v2110, %v2126
        %v2143 = vadd.f32 %v2111, %v2127
        %v2144 = vadd.f32 %v2112, %v2128
        %v2145 = vadd.f32 %v2113, %v2129
        %v2146 = vadd.f32 %v2114, %v2130
        %v2147 = vadd.f32 %v2115, %v2131
        %v2148 = vadd.f32 %v2116, %v2132
        %v2149 = vadd.f32 %v2117, %v2133
        %v2150 = vmax.f32 %v2134, 0.0
        %v2151 = vmax.f32 %v2135, 0.0
        %v2152 = vmax.f32 %v2136, 0.0
        %v2153 = vmax.f32 %v2137, 0.0
        %v2154 = vmax.f32 %v2138, 0.0
        %v2155 = vmax.f32 %v2139, 0.0
        %v2156 = vmax.f32 %v2140, 0.0
        %v2157 = vmax.f32 %v2141, 0.0
        %v2158 = vmax.f32 %v2142, 0.0
        %v2159 = vmax.f32 %v2143, 0.0
        %v2160 = vmax.f32 %v2144, 0.0
        %v2161 = vmax.f32 %v2145, 0.0
        %v2162 = vmax.f32 %v2146, 0.0
        %v2163 = vmax.f32 %v2147, 0.0
        %v2164 = vmax.f32 %v2148, 0.0
        %v2165 = vmax.f32 %v2149, 0.0
        %2166 = vst [vmem:[%s259] sm:$0xff] %v2150
        %2167 = vst [vmem:[%s259 + $0x8] sm:$0xff] %v2151
        %2168 = vst [vmem:[%s259 + $0x10] sm:$0xff] %v2152
        %2169 = vst [vmem:[%s259 + $0x18] sm:$0xff] %v2153
        %2170 = vst [vmem:[%s259 + $0x20] sm:$0xff] %v2154
        %2171 = vst [vmem:[%s259 + $0x28] sm:$0xff] %v2155
        %2172 = vst [vmem:[%s259 + $0x30] sm:$0xff] %v2156
        %2173 = vst [vmem:[%s259 + $0x38] sm:$0xff] %v2157
        %2174 = vst [vmem:[%s259 + $0x40] sm:$0xff] %v2158
        %2175 = vst [vmem:[%s259 + $0x48] sm:$0xff] %v2159
        %2176 = vst [vmem:[%s259 + $0x50] sm:$0xff] %v2160
        %2177 = vst [vmem:[%s259 + $0x58] sm:$0xff] %v2161
        %2178 = vst [vmem:[%s259 + $0x60] sm:$0xff] %v2162
        %2179 = vst [vmem:[%s259 + $0x68] sm:$0xff] %v2163
        %2180 = vst [vmem:[%s259 + $0x70] sm:$0xff] %v2164
        %2181 = vst [vmem:[%s259 + $0x78] sm:$0xff] %v2165
        %s2182 = sand.u32 %s158, 1
        %s2183 = scalar_lea.sflag [#allocation3], %s2182
        %s2184 = sand.u32 %s158, 1
        %s2185 = smul.addr %s2184, 128
        %s2186 = scalar_lea.vmem [#allocation2], %s2185
        // Predicated region
        $region41: #{residual_block_forward.3} parent=39 // pred_check
          %p2187 = pneg %p168
        $region42: #{residual_block_forward.3} parent=39 // pred_check_branch
          %2189 = sbr.rel (%p2187) target = $region44
        $region43: #{residual_block_forward.3} parent=39 // pred_region
          %s2190 = smul.u32 8, %s24
          %s2192 = ssub.s32 2048, 2048
          %2193 = vsyncadd %s2183, %s2192
          %s2194 = smul.addr %s2190, 2
          %s2195 = smul.addr %s23, 32
          %s2196 = sadd.s32 %s2194, %s2195
          %s2197 = smul.addr %s2196, 128
          %s2198 = scalar_lea.hbm %s5, %s2197
          %s2199 = sshll.u32 %s2186, 4
          %s2200 = int_to_ptr.vmem [resolvable:$true] %s2199
          %2205 = dma.vmem_to_hbm [thread:$0]  %s2200, 2048, %s2198, %s2183, 128, 128, 8
        $region44: #{residual_block_forward.3} parent=39 // pred_fallthru
          _
      $region40: #{residual_block_forward.3} parent=5 // pred_fallthru
        _
      %p2206 = scmp.le.s32.totalorder 2, %s14
      // Predicated region
      $region45: #{residual_block_forward.3} parent=5 // pred_check
        %p2207 = pneg %p2206
      $region46: #{residual_block_forward.3} parent=5 // pred_check_branch
        %2209 = sbr.rel (%p2207) target = $region48
      $region47: #{residual_block_forward.3} parent=5 // pred_region
        %s2210 = ssub.s32 %s14, 2
        // Predicated region
        $region49: #{residual_block_forward.3} parent=47 // pred_check
          %p2211 = pneg %p174
        $region50: #{residual_block_forward.3} parent=47 // pred_check_branch
          %2213 = sbr.rel (%p2211) target = $region52
        $region51: #{residual_block_forward.3} parent=47 // pred_region
          %s2214 = sand.u32 %s159, 1
          %s2215 = scalar_lea.sflag [#allocation3], %s2214
          %s2216 = sand.u32 %s159, 1
          %s2217 = smul.addr %s2216, 128
          %s2218 = scalar_lea.vmem [#allocation2], %s2217
          %2219 = dma.done %s2215, 2048
        $region52: #{residual_block_forward.3} parent=47 // pred_fallthru
          _
      $region48: #{residual_block_forward.3} parent=5 // pred_fallthru
        _
    $region6: #{residual_block_forward.3} parent=1 // loop_footer
      %s18 = sadd.s32 1, %s14
    $region7: #{residual_block_forward.3} parent=1 // loop_footer_branch
      %13 = sbr.rel target = $region3
    $region8: #{residual_block_forward.3} parent=1 // loop_exit
      _
    %2220 = vsyncpa [#allocation3], 1
    %s2221 = scalar_lea.sflag [#allocation3], 1
    %2222 = vsyncpa %s2221, 1

// kernel: residual_block_forward.2
$region0: #{residual_block_forward.2}
  #allocation0 [shape = 'u32[]', space=smem, size = 0x4, offset = 0x4, fixed_abs, tag = 'smem constant byte address 0x4 - core index']
  #allocation1 [shape = 'u32[144,128]{1,0:T(1,128)}', space=vmem, size = 0x12000, scoped, tag = 'internal scratch']
  %s0 = inlined_call_operand.vmem [shape: f32[2,18,18,128], index: 0, kind: input, shape index: {}]
  %s1 = inlined_call_operand.vmem [shape: bf16[9,128,128], index: 1, kind: input, shape index: {}]
  %s2 = inlined_call_operand.vmem [shape: f32[1,128], index: 2, kind: input, shape index: {}]
  %s3 = inlined_call_operand.vmem [shape: f32[1,128], index: 3, kind: input, shape index: {}]
  %s4 = inlined_call_operand.vmem [shape: f32[2,16,16,128], index: 4, kind: output, shape index: {}]
  %s5 = sld [smem:[#allocation0]]
  $region49: #{residual_block_forward.2} parent=0
    _
  %s7 = ssub.s32 1, %s5
  %s8 = scalar_select 0, %s7, %s5
  loop: start=0, step=1, limit=6
  $region2: #{residual_block_forward.2} parent=0 // loop_pre_header
    _
  $region3: #{residual_block_forward.2} parent=0 // loop_header
    %s10 = sphi 0, %s14
    %p11 = scmp.ge.s32.totalorder %s10, 6
    %s17 = sphi 0, %s29
    %s18 = sphi 0, %s25
    %s19 = sphi 0, %s17
    %s20 = sphi 0, %s18
    %s21 = sphi 0, %s19
    %s22 = sphi 0, %s20
    %s32 = sphi 0, %s34
    %s35 = sphi 0, %s32
    %s36 = sphi 0, %s35
    %s52 = sphi 0, %s36
    %s56 = sphi 0, %s56
    %s58 = sphi 0, %s56
    %s59 = sphi 0, %s58
    %s73 = sphi 0, %s59
    %s77 = sphi 0, %s77
    %s79 = sphi 0, %s77
    %s80 = sphi 0, %s79
    %s94 = sphi 0, %s80
    %s98 = sphi 0, %s98
    %s100 = sphi 0, %s98
    %s101 = sphi 0, %s100
    %s115 = sphi 0, %s101
    %s123 = sphi 0, %s125
    %s126 = sphi 0, %s123
    %s127 = sphi 0, %s126
    %s143 = sphi 0, %s127
  $region4: #{residual_block_forward.2} parent=0 // loop_header_branch
    %13 = sbr.rel (%p11) target = $region8
  $region5: #{residual_block_forward.2} parent=0 // loop_body
    %s15 = ssub.s32 %s10, 1
    %s16 = ssub.s32 %s10, 2
    %s23 = sadd.s32 1, %s18
    %p24 = scmp.ge.s32.totalorder %s23, 2
    %s25 = scalar_select %p24, 0, %s23
    %s26 = sadd.s32 1, %s17
    %s27 = scalar_select %p24, %s26, %s17
    %p28 = scmp.ge.s32.totalorder %s27, 2
    %s29 = scalar_select %p28, 0, %s27
    %s30 = ssub.s32 %s17, %s29
    %p31 = scmp.eq.s32.totalorder %s30, 0
    %s33 = sadd.s32 %s32, 1
    %s34 = scalar_select %p31, %s32, %s33
    %p37 = pneg %p31
    %p38 = scmp.eq.s32.totalorder %s10, 3
    %p39 = por %p37, %p38
    %p40 = scmp.ne.s32.totalorder %s32, %s35
    %p41 = scmp.eq.s32.totalorder %s10, 0
    %p42 = por %p40, %p41
    %p43 = scmp.ne.s32.totalorder %s32, %s35
    %p44 = scmp.eq.s32.totalorder %s15, 3
    %p45 = por %p43, %p44
    %p46 = scmp.ne.s32.totalorder %s35, %s36
    %p47 = scmp.eq.s32.totalorder %s15, 0
    %p48 = por %p46, %p47
    %p49 = scmp.ne.s32.totalorder %s35, %s36
    %p50 = scmp.eq.s32.totalorder %s16, 3
    %p51 = por %p49, %p50
    %p53 = scmp.ne.s32.totalorder %s36, %s52
    %p54 = scmp.eq.s32.totalorder %s16, 0
    %p55 = por %p53, %p54
    %s57 = sadd.s32 %s56, 1
    %p60 = scmp.eq.s32.totalorder %s10, 3
    %p61 = scmp.ne.s32.totalorder %s56, %s58
    %p62 = scmp.eq.s32.totalorder %s10, 0
    %p63 = por %p61, %p62
    %p64 = scmp.ne.s32.totalorder %s56, %s58
    %p65 = scmp.eq.s32.totalorder %s15, 3
    %p66 = por %p64, %p65
    %p67 = scmp.ne.s32.totalorder %s58, %s59
    %p68 = scmp.eq.s32.totalorder %s15, 0
    %p69 = por %p67, %p68
    %p70 = scmp.ne.s32.totalorder %s58, %s59
    %p71 = scmp.eq.s32.totalorder %s16, 3
    %p72 = por %p70, %p71
    %p74 = scmp.ne.s32.totalorder %s59, %s73
    %p75 = scmp.eq.s32.totalorder %s16, 0
    %p76 = por %p74, %p75
    %s78 = sadd.s32 %s77, 1
    %p81 = scmp.eq.s32.totalorder %s10, 3
    %p82 = scmp.ne.s32.totalorder %s77, %s79
    %p83 = scmp.eq.s32.totalorder %s10, 0
    %p84 = por %p82, %p83
    %p85 = scmp.ne.s32.totalorder %s77, %s79
    %p86 = scmp.eq.s32.totalorder %s15, 3
    %p87 = por %p85, %p86
    %p88 = scmp.ne.s32.totalorder %s79, %s80
    %p89 = scmp.eq.s32.totalorder %s15, 0
    %p90 = por %p88, %p89
    %p91 = scmp.ne.s32.totalorder %s79, %s80
    %p92 = scmp.eq.s32.totalorder %s16, 3
    %p93 = por %p91, %p92
    %p95 = scmp.ne.s32.totalorder %s80, %s94
    %p96 = scmp.eq.s32.totalorder %s16, 0
    %p97 = por %p95, %p96
    %s99 = sadd.s32 %s98, 1
    %p102 = scmp.eq.s32.totalorder %s10, 3
    %p103 = scmp.ne.s32.totalorder %s98, %s100
    %p104 = scmp.eq.s32.totalorder %s10, 0
    %p105 = por %p103, %p104
    %p106 = scmp.ne.s32.totalorder %s98, %s100
    %p107 = scmp.eq.s32.totalorder %s15, 3
    %p108 = por %p106, %p107
    %p109 = scmp.ne.s32.totalorder %s100, %s101
    %p110 = scmp.eq.s32.totalorder %s15, 0
    %p111 = por %p109, %p110
    %p112 = scmp.ne.s32.totalorder %s100, %s101
    %p113 = scmp.eq.s32.totalorder %s16, 3
    %p114 = por %p112, %p113
    %p116 = scmp.ne.s32.totalorder %s101, %s115
    %p117 = scmp.eq.s32.totalorder %s16, 0
    %p118 = por %p116, %p117
    %s119 = ssub.s32 %s17, %s29
    %s120 = ssub.s32 %s18, %s25
    %s121 = sor.u32 %s119, %s120
    %p122 = scmp.eq.s32.totalorder %s121, 0
    %s124 = sadd.s32 %s123, 1
    %s125 = scalar_select %p122, %s123, %s124
    %p128 = pneg %p122
    %p129 = scmp.eq.s32.totalorder %s10, 3
    %p130 = por %p128, %p129
    %p131 = scmp.ne.s32.totalorder %s123, %s126
    %p132 = scmp.eq.s32.totalorder %s10, 0
    %p133 = por %p131, %p132
    %p134 = scmp.ne.s32.totalorder %s123, %s126
    %p135 = scmp.eq.s32.totalorder %s15, 3
    %p136 = por %p134, %p135
    %p137 = scmp.ne.s32.totalorder %s126, %s127
    %p138 = scmp.eq.s32.totalorder %s15, 0
    %p139 = por %p137, %p138
    %p140 = scmp.ne.s32.totalorder %s126, %s127
    %p141 = scmp.eq.s32.totalorder %s16, 3
    %p142 = por %p140, %p141
    %p144 = scmp.ne.s32.totalorder %s127, %s143
    %p145 = scmp.eq.s32.totalorder %s16, 0
    %p146 = por %p144, %p145
    %p147 = scmp.le.s32.totalorder 1, %s10
    %p148 = scmp.lt.s32.totalorder %s10, 5
    %p149 = pnand %p147, %p148
    %p150 = pneg %p149
    // Predicated region
    $region9: #{residual_block_forward.2} parent=5 // pred_check
      _
    $region10: #{residual_block_forward.2} parent=5 // pred_check_branch
      %152 = sbr.rel (%p149) target = $region12
    $region11: #{residual_block_forward.2} parent=5 // pred_region
      %s153 = ssub.s32 %s10, 1
      // Predicated region
      $region13: #{residual_block_forward.2} parent=11 // pred_check
        %p154 = pneg %p69
      $region14: #{residual_block_forward.2} parent=11 // pred_check_branch
        %156 = sbr.rel (%p154) target = $region16
      $region15: #{residual_block_forward.2} parent=11 // pred_region
        _
      $region16: #{residual_block_forward.2} parent=11 // pred_fallthru
        _
      // Predicated region
      $region17: #{residual_block_forward.2} parent=11 // pred_check
        %p157 = pneg %p90
      $region18: #{residual_block_forward.2} parent=11 // pred_check_branch
        %159 = sbr.rel (%p157) target = $region20
      $region19: #{residual_block_forward.2} parent=11 // pred_region
        _
      $region20: #{residual_block_forward.2} parent=11 // pred_fallthru
        _
      // Predicated region
      $region21: #{residual_block_forward.2} parent=11 // pred_check
        %p160 = pneg %p111
      $region22: #{residual_block_forward.2} parent=11 // pred_check_branch
        %162 = sbr.rel (%p160) target = $region24
      $region23: #{residual_block_forward.2} parent=11 // pred_region
        _
      $region24: #{residual_block_forward.2} parent=11 // pred_fallthru
        _
    $region12: #{residual_block_forward.2} parent=5 // pred_fallthru
      _
    %p163 = scmp.lt.s32.totalorder %s10, 4
    // Predicated region
    $region25: #{residual_block_forward.2} parent=5 // pred_check
      %p164 = pneg %p163
    $region26: #{residual_block_forward.2} parent=5 // pred_check_branch
      %166 = sbr.rel (%p164) target = $region28
    $region27: #{residual_block_forward.2} parent=5 // pred_region
      // Predicated region
      $region29: #{residual_block_forward.2} parent=27 // pred_check
        %p167 = pneg %p42
      $region30: #{residual_block_forward.2} parent=27 // pred_check_branch
        %169 = sbr.rel (%p167) target = $region32
      $region31: #{residual_block_forward.2} parent=27 // pred_region
        %p170 = scmp.lt.s32.totalorder %s17, 1
        %s171 = scalar_select %p170, %s17, 1
        %s172 = smul.addr %s171, 54
        %s173 = smul.addr %s172, 8
        %s174 = scalar_lea.vmem %s0, %s173
      $region32: #{residual_block_forward.2} parent=27 // pred_fallthru
        _
    $region28: #{residual_block_forward.2} parent=5 // pred_fallthru
      _
    %p175 = scmp.le.s32.totalorder 1, %s10
    %p176 = scmp.lt.s32.totalorder %s10, 5
    %p177 = pnand %p175, %p176
    %p178 = pneg %p177
    // Predicated region
    $region33: #{residual_block_forward.2} parent=5 // pred_check
      _
    $region34: #{residual_block_forward.2} parent=5 // pred_check_branch
      %180 = sbr.rel (%p177) target = $region36
    $region35: #{residual_block_forward.2} parent=5 // pred_region
      %s181 = ssub.s32 %s10, 1
      %p182 = scmp.lt.s32.totalorder %s19, 1
      %s183 = scalar_select %p182, %s19, 1
      %s184 = smul.addr %s183, 54
      %s185 = smul.addr %s184, 8
      %s186 = scalar_lea.vmem %s0, %s185
      %p187 = pneg %p48
      %p188 = pneg %p45
      %p189 = pneg %p69
      %p190 = pneg %p66
      %p191 = pneg %p90
      %p192 = pneg %p87
      %p193 = pneg %p111
      %p194 = pneg %p108
      %p195 = pneg %p139
      %p196 = pneg %p136
      %s197 = smul.u32 8, %s20
      %p198 = scmp.lt.s32.totalorder %s19, 1
      %s199 = scalar_select %p198, %s19, 1
      %p200 = scmp.lt.s32.totalorder %s197, 15
      %s201 = scalar_select %p200, %s197, 15
      %s202 = smul.addr %s201, 2
      %s203 = smul.addr %s199, 32
      %s204 = sadd.s32 %s202, %s203
      %s205 = smul.addr %s204, 8
      %s206 = scalar_lea.vmem %s4, %s205
      %p207 = scmp.lt.s32.totalorder %s19, 1
      %s208 = scalar_select %p207, %s19, 1
      %s209 = smul.addr %s208, 54
      %s210 = smul.addr %s209, 8
      %s211 = scalar_lea.vmem %s0, %s210
      %s212 = smul.u32 8, %s20
      %p213 = scmp.lt.s32.totalorder %s19, 1
      %s214 = scalar_select %p213, %s19, 1
      %p215 = scmp.lt.s32.totalorder %s212, 15
      %s216 = scalar_select %p215, %s212, 15
      %s217 = smul.addr %s216, 2
      %s218 = smul.addr %s214, 32
      %s219 = sadd.s32 %s217, %s218
      %s220 = smul.addr %s219, 8
      %s221 = scalar_lea.vmem %s4, %s220
      %s222 = smul.u32 8, %s20
      %s224 = smul.u32 %s20, 8
      %s225 = smul.u32 %s224, 24
      %s226 = scalar_lea.vmem %s211, %s225
      %v227 = vld [vmem:[%s226] sm:$0xff]
      %v228 = vld [vmem:[%s226 + $0x8] sm:$0xff]
      %v229 = vld [vmem:[%s226 + $0x18] sm:$0xff]
      %v230 = vld [vmem:[%s226 + $0x20] sm:$0xff]
      %v231 = vld [vmem:[%s226 + $0x30] sm:$0xff]
      %v232 = vld [vmem:[%s226 + $0x38] sm:$0xff]
      %v233 = vld [vmem:[%s226 + $0x48] sm:$0xff]
      %v234 = vld [vmem:[%s226 + $0x50] sm:$0xff]
      %v235 = vld [vmem:[%s226 + $0x60] sm:$0xff]
      %v236 = vld [vmem:[%s226 + $0x68] sm:$0xff]
      %v237 = vld [vmem:[%s226 + $0x78] sm:$0xff]
      %v238 = vld [vmem:[%s226 + $0x80] sm:$0xff]
      %v239 = vld [vmem:[%s226 + $0x90] sm:$0xff]
      %v240 = vld [vmem:[%s226 + $0x98] sm:$0xff]
      %v241 = vld [vmem:[%s226 + $0xa8] sm:$0xff]
      %v242 = vld [vmem:[%s226 + $0xb0] sm:$0xff]
      %v243 = vpack.c.bf16 %v228, %v227
      %v244 = vpack.c.bf16 %v230, %v229
      %v245 = vpack.c.bf16 %v232, %v231
      %v246 = vpack.c.bf16 %v234, %v233
      %v247 = vpack.c.bf16 %v236, %v235
      %v248 = vpack.c.bf16 %v238, %v237
      %v249 = vpack.c.bf16 %v240, %v239
      %v250 = vpack.c.bf16 %v242, %v241
      %v251 = vld [vmem:[%s1] sm:$0xf]
      %v252 = vld [vmem:[%s1 + $0x4] sm:$0xf]
      %v253 = vld [vmem:[%s1 + $0x8] sm:$0xf]
      %v254 = vld [vmem:[%s1 + $0xc] sm:$0xf]
      %v255 = vld [vmem:[%s1 + $0x10] sm:$0xf]
      %v256 = vld [vmem:[%s1 + $0x14] sm:$0xf]
      %v257 = vld [vmem:[%s1 + $0x18] sm:$0xf]
      %v258 = vld [vmem:[%s1 + $0x1c] sm:$0xf]
      %v259 = vld [vmem:[%s1 + $0x20] sm:$0xf]
      %v260 = vld [vmem:[%s1 + $0x24] sm:$0xf]
      %v261 = vld [vmem:[%s1 + $0x28] sm:$0xf]
      %v262 = vld [vmem:[%s1 + $0x2c] sm:$0xf]
      %v263 = vld [vmem:[%s1 + $0x30] sm:$0xf]
      %v264 = vld [vmem:[%s1 + $0x34] sm:$0xf]
      %v265 = vld [vmem:[%s1 + $0x38] sm:$0xf]
      %v266 = vld [vmem:[%s1 + $0x3c] sm:$0xf]
      %v267 = vld [vmem:[%s226 + $0x1] sm:$0xff]
      %v268 = vld [vmem:[%s226 + $0x9] sm:$0xff]
      %v269 = vld [vmem:[%s226 + $0x19] sm:$0xff]
      %v270 = vld [vmem:[%s226 + $0x21] sm:$0xff]
      %v271 = vld [vmem:[%s226 + $0x31] sm:$0xff]
      %v272 = vld [vmem:[%s226 + $0x39] sm:$0xff]
      %v273 = vld [vmem:[%s226 + $0x49] sm:$0xff]
      %v274 = vld [vmem:[%s226 + $0x51] sm:$0xff]
      %v275 = vld [vmem:[%s226 + $0x61] sm:$0xff]
      %v276 = vld [vmem:[%s226 + $0x69] sm:$0xff]
      %v277 = vld [vmem:[%s226 + $0x79] sm:$0xff]
      %v278 = vld [vmem:[%s226 + $0x81] sm:$0xff]
      %v279 = vld [vmem:[%s226 + $0x91] sm:$0xff]
      %v280 = vld [vmem:[%s226 + $0x99] sm:$0xff]
      %v281 = vld [vmem:[%s226 + $0xa9] sm:$0xff]
      %v282 = vld [vmem:[%s226 + $0xb1] sm:$0xff]
      %v283 = vpack.c.bf16 %v268, %v267
      %v284 = vpack.c.bf16 %v270, %v269
      %v285 = vpack.c.bf16 %v272, %v271
      %v286 = vpack.c.bf16 %v274, %v273
      %v287 = vpack.c.bf16 %v276, %v275
      %v288 = vpack.c.bf16 %v278, %v277
      %v289 = vpack.c.bf16 %v280, %v279
      %v290 = vpack.c.bf16 %v282, %v281
      %s291 = scalar_lea.vmem %s1, 64
      %v292 = vld [vmem:[%s291] sm:$0xf]
      %v293 = vld [vmem:[%s291 + $0x4] sm:$0xf]
      %v294 = vld [vmem:[%s291 + $0x8] sm:$0xf]
      %v295 = vld [vmem:[%s291 + $0xc] sm:$0xf]
      %v296 = vld [vmem:[%s291 + $0x10] sm:$0xf]
      %v297 = vld [vmem:[%s291 + $0x14] sm:$0xf]
      %v298 = vld [vmem:[%s291 + $0x18] sm:$0xf]
      %v299 = vld [vmem:[%s291 + $0x1c] sm:$0xf]
      %v300 = vld [vmem:[%s291 + $0x20] sm:$0xf]
      %v301 = vld [vmem:[%s291 + $0x24] sm:$0xf]
      %v302 = vld [vmem:[%s291 + $0x28] sm:$0xf]
      %v303 = vld [vmem:[%s291 + $0x2c] sm:$0xf]
      %v304 = vld [vmem:[%s291 + $0x30] sm:$0xf]
      %v305 = vld [vmem:[%s291 + $0x34] sm:$0xf]
      %v306 = vld [vmem:[%s291 + $0x38] sm:$0xf]
      %v307 = vld [vmem:[%s291 + $0x3c] sm:$0xf]
      %v324 = vunpack.c.l.b16 %v292
      %v325 = vunpack.c.l.b16 %v293
      %v326 = vunpack.c.l.b16 %v294
      %v327 = vunpack.c.l.b16 %v295
      %v328 = vunpack.c.l.b16 %v296
      %v329 = vunpack.c.l.b16 %v297
      %v330 = vunpack.c.l.b16 %v298
      %v331 = vunpack.c.l.b16 %v299
      %v332 = vunpack.c.l.b16 %v300
      %v333 = vunpack.c.l.b16 %v301
      %v334 = vunpack.c.l.b16 %v302
      %v335 = vunpack.c.l.b16 %v303
      %v336 = vunpack.c.l.b16 %v304
      %v337 = vunpack.c.l.b16 %v305
      %v338 = vunpack.c.l.b16 %v306
      %v339 = vunpack.c.l.b16 %v307
      %v340 = vpack.c.b16 %v325, %v324
      %v341 = vpack.c.b16 %v327, %v326
      %v342 = vpack.c.b16 %v329, %v328
      %v343 = vpack.c.b16 %v331, %v330
      %v344 = vpack.c.b16 %v333, %v332
      %v345 = vpack.c.b16 %v335, %v334
      %v346 = vpack.c.b16 %v337, %v336
      %v347 = vpack.c.b16 %v339, %v338
      %356 = vmatprep.subr.bf16.mxu0 0
      %357 = vmatpush1.bf16.msra.mxu0 %v340
      %358 = vmatprep.subr.bf16.mxu0 0
      %359 = vmatpush1.bf16.msra.mxu0 %v341
      %360 = vmatprep.subr.bf16.mxu0 0
      %361 = vmatpush1.bf16.msra.mxu0 %v342
      %362 = vmatprep.subr.bf16.mxu0 0
      %363 = vmatpush1.bf16.msra.mxu0 %v343
      %364 = vmatprep.subr.bf16.mxu0 0
      %365 = vmatpush1.bf16.msra.mxu0 %v344
      %366 = vmatprep.subr.bf16.mxu0 0
      %367 = vmatpush1.bf16.msra.mxu0 %v345
      %368 = vmatprep.subr.bf16.mxu0 0
      %369 = vmatpush1.bf16.msra.mxu0 %v346
      %370 = vmatprep.subr.bf16.mxu0 0
      %371 = vmatpush1.bf16.msra.mxu0 %v347
      %372 = vmatprep.subr.bf16.mxu0 0
      %373 = vmatpush1.bf16.msra.mxu0 0
      %374 = vmatprep.subr.bf16.mxu0 0
      %375 = vmatpush1.bf16.msra.mxu0 0
      %376 = vmatprep.subr.bf16.mxu0 0
      %377 = vmatpush1.bf16.msra.mxu0 0
      %378 = vmatprep.subr.bf16.mxu0 0
      %379 = vmatpush1.bf16.msra.mxu0 0
      %380 = vmatprep.subr.bf16.mxu0 0
      %381 = vmatpush1.bf16.msra.mxu0 0
      %382 = vmatprep.subr.bf16.mxu0 0
      %383 = vmatpush1.bf16.msra.mxu0 0
      %384 = vmatprep.subr.bf16.mxu0 0
      %385 = vmatpush1.bf16.msra.mxu0 0
      %386 = vmatprep.subr.bf16.mxu0 0
      %387 = vmatpush1.bf16.msra.mxu0 0
      %388 = vmatprep.mubr.bf16.mxu0 0
      %389 = vmatmul.mubr.bf16.gmra.mrb[0].mxu0 %v283
      %v390 = vpop.f32.mrb[0].mxu0
      %v391 = vadd.f32 0.0, %v390
      %v392 = vpop.f32.mrb[0].mxu0
      %v393 = vpop.f32.mrb[0].mxu0
      %v394 = vadd.f32 0.0, %v393
      %v395 = vpop.f32.mrb[0].mxu0
      %396 = vmatprep.mubr.bf16.mxu0 0
      %397 = vmatmul.mubr.bf16.gmra.mrb[0].mxu0 %v284
      %v398 = vpop.f32.mrb[0].mxu0
      %v399 = vadd.f32 0.0, %v398
      %v400 = vpop.f32.mrb[0].mxu0
      %v401 = vpop.f32.mrb[0].mxu0
      %v402 = vadd.f32 0.0, %v401
      %v403 = vpop.f32.mrb[0].mxu0
      %404 = vmatprep.mubr.bf16.mxu0 0
      %405 = vmatmul.mubr.bf16.gmra.mrb[0].mxu0 %v285
      %v406 = vpop.f32.mrb[0].mxu0
      %v407 = vadd.f32 0.0, %v406
      %v408 = vpop.f32.mrb[0].mxu0
      %v409 = vpop.f32.mrb[0].mxu0
      %v410 = vadd.f32 0.0, %v409
      %v411 = vpop.f32.mrb[0].mxu0
      %412 = vmatprep.mubr.bf16.mxu0 0
      %413 = vmatmul.mubr.bf16.gmra.mrb[0].mxu0 %v286
      %v414 = vpop.f32.mrb[0].mxu0
      %v415 = vadd.f32 0.0, %v414
      %v416 = vpop.f32.mrb[0].mxu0
      %v417 = vpop.f32.mrb[0].mxu0
      %v418 = vadd.f32 0.0, %v417
      %v419 = vpop.f32.mrb[0].mxu0
      %420 = vmatprep.mubr.bf16.mxu0 0
      %421 = vmatmul.mubr.bf16.gmra.mrb[0].mxu0 %v287
      %v422 = vpop.f32.mrb[0].mxu0
      %v423 = vadd.f32 0.0, %v422
      %v424 = vpop.f32.mrb[0].mxu0
      %v425 = vpop.f32.mrb[0].mxu0
      %v426 = vadd.f32 0.0, %v425
      %v427 = vpop.f32.mrb[0].mxu0
      %428 = vmatprep.mubr.bf16.mxu0 0
      %429 = vmatmul.mubr.bf16.gmra.mrb[0].mxu0 %v288
      %v430 = vpop.f32.mrb[0].mxu0
      %v431 = vadd.f32 0.0, %v430
      %v432 = vpop.f32.mrb[0].mxu0
      %v433 = vpop.f32.mrb[0].mxu0
      %v434 = vadd.f32 0.0, %v433
      %v435 = vpop.f32.mrb[0].mxu0
      %436 = vmatprep.mubr.bf16.mxu0 0
      %437 = vmatmul.mubr.bf16.gmra.mrb[0].mxu0 %v289
      %v438 = vpop.f32.mrb[0].mxu0
      %v439 = vadd.f32 0.0, %v438
      %v440 = vpop.f32.mrb[0].mxu0
      %v441 = vpop.f32.mrb[0].mxu0
      %v442 = vadd.f32 0.0, %v441
      %v443 = vpop.f32.mrb[0].mxu0
      %444 = vmatprep.mubr.bf16.mxu0 0
      %445 = vmatmul.mubr.bf16.gmra.mrb[0].mxu0 %v290
      %v446 = vpop.f32.mrb[0].mxu0
      %v447 = vadd.f32 0.0, %v446
      %v448 = vpop.f32.mrb[0].mxu0
      %v449 = vpop.f32.mrb[0].mxu0
      %v450 = vadd.f32 0.0, %v449
      %v451 = vpop.f32.mrb[0].mxu0
      %452 = vdwg.mxu0
      %v469 = vunpack.c.l.b16 %v251
      %v470 = vunpack.c.l.b16 %v252
      %v471 = vunpack.c.l.b16 %v253
      %v472 = vunpack.c.l.b16 %v254
      %v473 = vunpack.c.l.b16 %v255
      %v474 = vunpack.c.l.b16 %v256
      %v475 = vunpack.c.l.b16 %v257
      %v476 = vunpack.c.l.b16 %v258
      %v477 = vunpack.c.l.b16 %v259
      %v478 = vunpack.c.l.b16 %v260
      %v479 = vunpack.c.l.b16 %v261
      %v480 = vunpack.c.l.b16 %v262
      %v481 = vunpack.c.l.b16 %v263
      %v482 = vunpack.c.l.b16 %v264
      %v483 = vunpack.c.l.b16 %v265
      %v484 = vunpack.c.l.b16 %v266
      %v485 = vpack.c.b16 %v470, %v469
      %v486 = vpack.c.b16 %v472, %v471
      %v487 = vpack.c.b16 %v474, %v473
      %v488 = vpack.c.b16 %v476, %v475
      %v489 = vpack.c.b16 %v478, %v477
      %v490 = vpack.c.b16 %v480, %v479
      %v491 = vpack.c.b16 %v482, %v481
      %v492 = vpack.c.b16 %v484, %v483
      %501 = vmatprep.subr.bf16.mxu0 0
      %502 = vmatpush1.bf16.msra.mxu0 %v485
      %503 = vmatprep.subr.bf16.mxu0 0
      %504 = vmatpush1.bf16.msra.mxu0 %v486
      %505 = vmatprep.subr.bf16.mxu0 0
      %506 = vmatpush1.bf16.msra.mxu0 %v487
      %507 = vmatprep.subr.bf16.mxu0 0
      %508 = vmatpush1.bf16.msra.mxu0 %v488
      %509 = vmatprep.subr.bf16.mxu0 0
      %510 = vmatpush1.bf16.msra.mxu0 %v489
      %511 = vmatprep.subr.bf16.mxu0 0
      %512 = vmatpush1.bf16.msra.mxu0 %v490
      %513 = vmatprep.subr.bf16.mxu0 0
      %514 = vmatpush1.bf16.msra.mxu0 %v491
      %515 = vmatprep.subr.bf16.mxu0 0
      %516 = vmatpush1.bf16.msra.mxu0 %v492
      %517 = vmatprep.subr.bf16.mxu0 0
      %518 = vmatpush1.bf16.msra.mxu0 0
      %519 = vmatprep.subr.bf16.mxu0 0
      %520 = vmatpush1.bf16.msra.mxu0 0
      %521 = vmatprep.subr.bf16.mxu0 0
      %522 = vmatpush1.bf16.msra.mxu0 0
      %523 = vmatprep.subr.bf16.mxu0 0
      %524 = vmatpush1.bf16.msra.mxu0 0
      %525 = vmatprep.subr.bf16.mxu0 0
      %526 = vmatpush1.bf16.msra.mxu0 0
      %527 = vmatprep.subr.bf16.mxu0 0
      %528 = vmatpush1.bf16.msra.mxu0 0
      %529 = vmatprep.subr.bf16.mxu0 0
      %530 = vmatpush1.bf16.msra.mxu0 0
      %531 = vmatprep.subr.bf16.mxu0 0
      %532 = vmatpush1.bf16.msra.mxu0 0
      %533 = vmatprep.mubr.bf16.mxu0 0
      %534 = vmatmul.mubr.bf16.gmra.mrb[0].mxu0 %v243
      %v535 = vpop.f32.mrb[0].mxu0
      %v536 = vadd.f32 %v391, %v535
      %v537 = vpop.f32.mrb[0].mxu0
      %v538 = vpop.f32.mrb[0].mxu0
      %v539 = vadd.f32 %v394, %v538
      %v540 = vpop.f32.mrb[0].mxu0
      %541 = vmatprep.mubr.bf16.mxu0 0
      %542 = vmatmul.mubr.bf16.gmra.mrb[0].mxu0 %v244
      %v543 = vpop.f32.mrb[0].mxu0
      %v544 = vadd.f32 %v399, %v543
      %v545 = vpop.f32.mrb[0].mxu0
      %v546 = vpop.f32.mrb[0].mxu0
      %v547 = vadd.f32 %v402, %v546
      %v548 = vpop.f32.mrb[0].mxu0
      %549 = vmatprep.mubr.bf16.mxu0 0
      %550 = vmatmul.mubr.bf16.gmra.mrb[0].mxu0 %v245
      %v551 = vpop.f32.mrb[0].mxu0
      %v552 = vadd.f32 %v407, %v551
      %v553 = vpop.f32.mrb[0].mxu0
      %v554 = vpop.f32.mrb[0].mxu0
      %v555 = vadd.f32 %v410, %v554
      %v556 = vpop.f32.mrb[0].mxu0
      %557 = vmatprep.mubr.bf16.mxu0 0
      %558 = vmatmul.mubr.bf16.gmra.mrb[0].mxu0 %v246
      %v559 = vpop.f32.mrb[0].mxu0
      %v560 = vadd.f32 %v415, %v559
      %v561 = vpop.f32.mrb[0].mxu0
      %v562 = vpop.f32.mrb[0].mxu0
      %v563 = vadd.f32 %v418, %v562
      %v564 = vpop.f32.mrb[0].mxu0
      %565 = vmatprep.mubr.bf16.mxu0 0
      %566 = vmatmul.mubr.bf16.gmra.mrb[0].mxu0 %v247
      %v567 = vpop.f32.mrb[0].mxu0
      %v568 = vadd.f32 %v423, %v567
      %v569 = vpop.f32.mrb[0].mxu0
      %v570 = vpop.f32.mrb[0].mxu0
      %v571 = vadd.f32 %v426, %v570
      %v572 = vpop.f32.mrb[0].mxu0
      %573 = vmatprep.mubr.bf16.mxu0 0
      %574 = vmatmul.mubr.bf16.gmra.mrb[0].mxu0 %v248
      %v575 = vpop.f32.mrb[0].mxu0
      %v576 = vadd.f32 %v431, %v575
      %v577 = vpop.f32.mrb[0].mxu0
      %v578 = vpop.f32.mrb[0].mxu0
      %v579 = vadd.f32 %v434, %v578
      %v580 = vpop.f32.mrb[0].mxu0
      %581 = vmatprep.mubr.bf16.mxu0 0
      %582 = vmatmul.mubr.bf16.gmra.mrb[0].mxu0 %v249
      %v583 = vpop.f32.mrb[0].mxu0
      %v584 = vadd.f32 %v439, %v583
      %v585 = vpop.f32.mrb[0].mxu0
      %v586 = vpop.f32.mrb[0].mxu0
      %v587 = vadd.f32 %v442, %v586
      %v588 = vpop.f32.mrb[0].mxu0
      %589 = vmatprep.mubr.bf16.mxu0 0
      %590 = vmatmul.mubr.bf16.gmra.mrb[0].mxu0 %v250
      %v591 = vpop.f32.mrb[0].mxu0
      %v592 = vadd.f32 %v447, %v591
      %v593 = vpop.f32.mrb[0].mxu0
      %v594 = vpop.f32.mrb[0].mxu0
      %v595 = vadd.f32 %v450, %v594
      %v596 = vpop.f32.mrb[0].mxu0
      %597 = vdwg.mxu0
      %v598 = vld [vmem:[%s226 + $0x2] sm:$0xff]
      %v599 = vld [vmem:[%s226 + $0xa] sm:$0xff]
      %v600 = vld [vmem:[%s226 + $0x1a] sm:$0xff]
      %v601 = vld [vmem:[%s226 + $0x22] sm:$0xff]
      %v602 = vld [vmem:[%s226 + $0x32] sm:$0xff]
      %v603 = vld [vmem:[%s226 + $0x3a] sm:$0xff]
      %v604 = vld [vmem:[%s226 + $0x4a] sm:$0xff]
      %v605 = vld [vmem:[%s226 + $0x52] sm:$0xff]
      %v606 = vld [vmem:[%s226 + $0x62] sm:$0xff]
      %v607 = vld [vmem:[%s226 + $0x6a] sm:$0xff]
      %v608 = vld [vmem:[%s226 + $0x7a] sm:$0xff]
      %v609 = vld [vmem:[%s226 + $0x82] sm:$0xff]
      %v610 = vld [vmem:[%s226 + $0x92] sm:$0xff]
      %v611 = vld [vmem:[%s226 + $0x9a] sm:$0xff]
      %v612 = vld [vmem:[%s226 + $0xaa] sm:$0xff]
      %v613 = vld [vmem:[%s226 + $0xb2] sm:$0xff]
      %v614 = vpack.c.bf16 %v599, %v598
      %v615 = vpack.c.bf16 %v601, %v600
      %v616 = vpack.c.bf16 %v603, %v602
      %v617 = vpack.c.bf16 %v605, %v604
      %v618 = vpack.c.bf16 %v607, %v606
      %v619 = vpack.c.bf16 %v609, %v608
      %v620 = vpack.c.bf16 %v611, %v610
      %v621 = vpack.c.bf16 %v613, %v612
      %s622 = scalar_lea.vmem %s1, 128
      %v623 = vld [vmem:[%s622] sm:$0xf]
      %v624 = vld [vmem:[%s622 + $0x4] sm:$0xf]
      %v625 = vld [vmem:[%s622 + $0x8] sm:$0xf]
      %v626 = vld [vmem:[%s622 + $0xc] sm:$0xf]
      %v627 = vld [vmem:[%s622 + $0x10] sm:$0xf]
      %v628 = vld [vmem:[%s622 + $0x14] sm:$0xf]
      %v629 = vld [vmem:[%s622 + $0x18] sm:$0xf]
      %v630 = vld [vmem:[%s622 + $0x1c] sm:$0xf]
      %v631 = vld [vmem:[%s622 + $0x20] sm:$0xf]
      %v632 = vld [vmem:[%s622 + $0x24] sm:$0xf]
      %v633 = vld [vmem:[%s622 + $0x28] sm:$0xf]
      %v634 = vld [vmem:[%s622 + $0x2c] sm:$0xf]
      %v635 = vld [vmem:[%s622 + $0x30] sm:$0xf]
      %v636 = vld [vmem:[%s622 + $0x34] sm:$0xf]
      %v637 = vld [vmem:[%s622 + $0x38] sm:$0xf]
      %v638 = vld [vmem:[%s622 + $0x3c] sm:$0xf]
      %v655 = vunpack.c.l.b16 %v623
      %v656 = vunpack.c.l.b16 %v624
      %v657 = vunpack.c.l.b16 %v625
      %v658 = vunpack.c.l.b16 %v626
      %v659 = vunpack.c.l.b16 %v627
      %v660 = vunpack.c.l.b16 %v628
      %v661 = vunpack.c.l.b16 %v629
      %v662 = vunpack.c.l.b16 %v630
      %v663 = vunpack.c.l.b16 %v631
      %v664 = vunpack.c.l.b16 %v632
      %v665 = vunpack.c.l.b16 %v633
      %v666 = vunpack.c.l.b16 %v634
      %v667 = vunpack.c.l.b16 %v635
      %v668 = vunpack.c.l.b16 %v636
      %v669 = vunpack.c.l.b16 %v637
      %v670 = vunpack.c.l.b16 %v638
      %v671 = vpack.c.b16 %v656, %v655
      %v672 = vpack.c.b16 %v658, %v657
      %v673 = vpack.c.b16 %v660, %v659
      %v674 = vpack.c.b16 %v662, %v661
      %v675 = vpack.c.b16 %v664, %v663
      %v676 = vpack.c.b16 %v666, %v665
      %v677 = vpack.c.b16 %v668, %v667
      %v678 = vpack.c.b16 %v670, %v669
      %687 = vmatprep.subr.bf16.mxu0 0
      %688 = vmatpush1.bf16.msra.mxu0 %v671
      %689 = vmatprep.subr.bf16.mxu0 0
      %690 = vmatpush1.bf16.msra.mxu0 %v672
      %691 = vmatprep.subr.bf16.mxu0 0
      %692 = vmatpush1.bf16.msra.mxu0 %v673
      %693 = vmatprep.subr.bf16.mxu0 0
      %694 = vmatpush1.bf16.msra.mxu0 %v674
      %695 = vmatprep.subr.bf16.mxu0 0
      %696 = vmatpush1.bf16.msra.mxu0 %v675
      %697 = vmatprep.subr.bf16.mxu0 0
      %698 = vmatpush1.bf16.msra.mxu0 %v676
      %699 = vmatprep.subr.bf16.mxu0 0
      %700 = vmatpush1.bf16.msra.mxu0 %v677
      %701 = vmatprep.subr.bf16.mxu0 0
      %702 = vmatpush1.bf16.msra.mxu0 %v678
      %703 = vmatprep.subr.bf16.mxu0 0
      %704 = vmatpush1.bf16.msra.mxu0 0
      %705 = vmatprep.subr.bf16.mxu0 0
      %706 = vmatpush1.bf16.msra.mxu0 0
      %707 = vmatprep.subr.bf16.mxu0 0
      %708 = vmatpush1.bf16.msra.mxu0 0
      %709 = vmatprep.subr.bf16.mxu0 0
      %710 = vmatpush1.bf16.msra.mxu0 0
      %711 = vmatprep.subr.bf16.mxu0 0
      %712 = vmatpush1.bf16.msra.mxu0 0
      %713 = vmatprep.subr.bf16.mxu0 0
      %714 = vmatpush1.bf16.msra.mxu0 0
      %715 = vmatprep.subr.bf16.mxu0 0
      %716 = vmatpush1.bf16.msra.mxu0 0
      %717 = vmatprep.subr.bf16.mxu0 0
      %718 = vmatpush1.bf16.msra.mxu0 0
      %719 = vmatprep.mubr.bf16.mxu0 0
      %720 = vmatmul.mubr.bf16.gmra.mrb[0].mxu0 %v614
      %v721 = vpop.f32.mrb[0].mxu0
      %v722 = vadd.f32 0.0, %v721
      %v723 = vpop.f32.mrb[0].mxu0
      %v724 = vpop.f32.mrb[0].mxu0
      %v725 = vadd.f32 0.0, %v724
      %v726 = vpop.f32.mrb[0].mxu0
      %727 = vmatprep.mubr.bf16.mxu0 0
      %728 = vmatmul.mubr.bf16.gmra.mrb[0].mxu0 %v615
      %v729 = vpop.f32.mrb[0].mxu0
      %v730 = vadd.f32 0.0, %v729
      %v731 = vpop.f32.mrb[0].mxu0
      %v732 = vpop.f32.mrb[0].mxu0
      %v733 = vadd.f32 0.0, %v732
      %v734 = vpop.f32.mrb[0].mxu0
      %735 = vmatprep.mubr.bf16.mxu0 0
      %736 = vmatmul.mubr.bf16.gmra.mrb[0].mxu0 %v616
      %v737 = vpop.f32.mrb[0].mxu0
      %v738 = vadd.f32 0.0, %v737
      %v739 = vpop.f32.mrb[0].mxu0
      %v740 = vpop.f32.mrb[0].mxu0
      %v741 = vadd.f32 0.0, %v740
      %v742 = vpop.f32.mrb[0].mxu0
      %743 = vmatprep.mubr.bf16.mxu0 0
      %744 = vmatmul.mubr.bf16.gmra.mrb[0].mxu0 %v617
      %v745 = vpop.f32.mrb[0].mxu0
      %v746 = vadd.f32 0.0, %v745
      %v747 = vpop.f32.mrb[0].mxu0
      %v748 = vpop.f32.mrb[0].mxu0
      %v749 = vadd.f32 0.0, %v748
      %v750 = vpop.f32.mrb[0].mxu0
      %751 = vmatprep.mubr.bf16.mxu0 0
      %752 = vmatmul.mubr.bf16.gmra.mrb[0].mxu0 %v618
      %v753 = vpop.f32.mrb[0].mxu0
      %v754 = vadd.f32 0.0, %v753
      %v755 = vpop.f32.mrb[0].mxu0
      %v756 = vpop.f32.mrb[0].mxu0
      %v757 = vadd.f32 0.0, %v756
      %v758 = vpop.f32.mrb[0].mxu0
      %759 = vmatprep.mubr.bf16.mxu0 0
      %760 = vmatmul.mubr.bf16.gmra.mrb[0].mxu0 %v619
      %v761 = vpop.f32.mrb[0].mxu0
      %v762 = vadd.f32 0.0, %v761
      %v763 = vpop.f32.mrb[0].mxu0
      %v764 = vpop.f32.mrb[0].mxu0
      %v765 = vadd.f32 0.0, %v764
      %v766 = vpop.f32.mrb[0].mxu0
      %767 = vmatprep.mubr.bf16.mxu0 0
      %768 = vmatmul.mubr.bf16.gmra.mrb[0].mxu0 %v620
      %v769 = vpop.f32.mrb[0].mxu0
      %v770 = vadd.f32 0.0, %v769
      %v771 = vpop.f32.mrb[0].mxu0
      %v772 = vpop.f32.mrb[0].mxu0
      %v773 = vadd.f32 0.0, %v772
      %v774 = vpop.f32.mrb[0].mxu0
      %775 = vmatprep.mubr.bf16.mxu0 0
      %776 = vmatmul.mubr.bf16.gmra.mrb[0].mxu0 %v621
      %v777 = vpop.f32.mrb[0].mxu0
      %v778 = vadd.f32 0.0, %v777
      %v779 = vpop.f32.mrb[0].mxu0
      %v780 = vpop.f32.mrb[0].mxu0
      %v781 = vadd.f32 0.0, %v780
      %v782 = vpop.f32.mrb[0].mxu0
      %783 = vdwg.mxu0
      %v784 = vadd.f32 %v536, %v722
      %v785 = vadd.f32 %v539, %v725
      %v786 = vadd.f32 %v544, %v730
      %v787 = vadd.f32 %v547, %v733
      %v788 = vadd.f32 %v552, %v738
      %v789 = vadd.f32 %v555, %v741
      %v790 = vadd.f32 %v560, %v746
      %v791 = vadd.f32 %v563, %v749
      %v792 = vadd.f32 %v568, %v754
      %v793 = vadd.f32 %v571, %v757
      %v794 = vadd.f32 %v576, %v762
      %v795 = vadd.f32 %v579, %v765
      %v796 = vadd.f32 %v584, %v770
      %v797 = vadd.f32 %v587, %v773
      %v798 = vadd.f32 %v592, %v778
      %v799 = vadd.f32 %v595, %v781
      %s800 = sadd.s32 %s224, 1
      %s801 = smul.u32 %s800, 24
      %s802 = scalar_lea.vmem %s211, %s801
      %v803 = vld [vmem:[%s802] sm:$0xff]
      %v804 = vld [vmem:[%s802 + $0x8] sm:$0xff]
      %v805 = vld [vmem:[%s802 + $0x18] sm:$0xff]
      %v806 = vld [vmem:[%s802 + $0x20] sm:$0xff]
      %v807 = vld [vmem:[%s802 + $0x30] sm:$0xff]
      %v808 = vld [vmem:[%s802 + $0x38] sm:$0xff]
      %v809 = vld [vmem:[%s802 + $0x48] sm:$0xff]
      %v810 = vld [vmem:[%s802 + $0x50] sm:$0xff]
      %v811 = vld [vmem:[%s802 + $0x60] sm:$0xff]
      %v812 = vld [vmem:[%s802 + $0x68] sm:$0xff]
      %v813 = vld [vmem:[%s802 + $0x78] sm:$0xff]
      %v814 = vld [vmem:[%s802 + $0x80] sm:$0xff]
      %v815 = vld [vmem:[%s802 + $0x90] sm:$0xff]
      %v816 = vld [vmem:[%s802 + $0x98] sm:$0xff]
      %v817 = vld [vmem:[%s802 + $0xa8] sm:$0xff]
      %v818 = vld [vmem:[%s802 + $0xb0] sm:$0xff]
      %v819 = vpack.c.bf16 %v804, %v803
      %v820 = vpack.c.bf16 %v806, %v805
      %v821 = vpack.c.bf16 %v808, %v807
      %v822 = vpack.c.bf16 %v810, %v809
      %v823 = vpack.c.bf16 %v812, %v811
      %v824 = vpack.c.bf16 %v814, %v813
      %v825 = vpack.c.bf16 %v816, %v815
      %v826 = vpack.c.bf16 %v818, %v817
      %s827 = scalar_lea.vmem %s1, 192
      %v828 = vld [vmem:[%s827] sm:$0xf]
      %v829 = vld [vmem:[%s827 + $0x4] sm:$0xf]
      %v830 = vld [vmem:[%s827 + $0x8] sm:$0xf]
      %v831 = vld [vmem:[%s827 + $0xc] sm:$0xf]
      %v832 = vld [vmem:[%s827 + $0x10] sm:$0xf]
      %v833 = vld [vmem:[%s827 + $0x14] sm:$0xf]
      %v834 = vld [vmem:[%s827 + $0x18] sm:$0xf]
      %v835 = vld [vmem:[%s827 + $0x1c] sm:$0xf]
      %v836 = vld [vmem:[%s827 + $0x20] sm:$0xf]
      %v837 = vld [vmem:[%s827 + $0x24] sm:$0xf]
      %v838 = vld [vmem:[%s827 + $0x28] sm:$0xf]
      %v839 = vld [vmem:[%s827 + $0x2c] sm:$0xf]
      %v840 = vld [vmem:[%s827 + $0x30] sm:$0xf]
      %v841 = vld [vmem:[%s827 + $0x34] sm:$0xf]
      %v842 = vld [vmem:[%s827 + $0x38] sm:$0xf]
      %v843 = vld [vmem:[%s827 + $0x3c] sm:$0xf]
      %v860 = vunpack.c.l.b16 %v828
      %v861 = vunpack.c.l.b16 %v829
      %v862 = vunpack.c.l.b16 %v830
      %v863 = vunpack.c.l.b16 %v831
      %v864 = vunpack.c.l.b16 %v832
      %v865 = vunpack.c.l.b16 %v833
      %v866 = vunpack.c.l.b16 %v834
      %v867 = vunpack.c.l.b16 %v835
      %v868 = vunpack.c.l.b16 %v836
      %v869 = vunpack.c.l.b16 %v837
      %v870 = vunpack.c.l.b16 %v838
      %v871 = vunpack.c.l.b16 %v839
      %v872 = vunpack.c.l.b16 %v840
      %v873 = vunpack.c.l.b16 %v841
      %v874 = vunpack.c.l.b16 %v842
      %v875 = vunpack.c.l.b16 %v843
      %v876 = vpack.c.b16 %v861, %v860
      %v877 = vpack.c.b16 %v863, %v862
      %v878 = vpack.c.b16 %v865, %v864
      %v879 = vpack.c.b16 %v867, %v866
      %v880 = vpack.c.b16 %v869, %v868
      %v881 = vpack.c.b16 %v871, %v870
      %v882 = vpack.c.b16 %v873, %v872
      %v883 = vpack.c.b16 %v875, %v874
      %892 = vmatprep.subr.bf16.mxu0 0
      %893 = vmatpush1.bf16.msra.mxu0 %v876
      %894 = vmatprep.subr.bf16.mxu0 0
      %895 = vmatpush1.bf16.msra.mxu0 %v877
      %896 = vmatprep.subr.bf16.mxu0 0
      %897 = vmatpush1.bf16.msra.mxu0 %v878
      %898 = vmatprep.subr.bf16.mxu0 0
      %899 = vmatpush1.bf16.msra.mxu0 %v879
      %900 = vmatprep.subr.bf16.mxu0 0
      %901 = vmatpush1.bf16.msra.mxu0 %v880
      %902 = vmatprep.subr.bf16.mxu0 0
      %903 = vmatpush1.bf16.msra.mxu0 %v881
      %904 = vmatprep.subr.bf16.mxu0 0
      %905 = vmatpush1.bf16.msra.mxu0 %v882
      %906 = vmatprep.subr.bf16.mxu0 0
      %907 = vmatpush1.bf16.msra.mxu0 %v883
      %908 = vmatprep.subr.bf16.mxu0 0
      %909 = vmatpush1.bf16.msra.mxu0 0
      %910 = vmatprep.subr.bf16.mxu0 0
      %911 = vmatpush1.bf16.msra.mxu0 0
      %912 = vmatprep.subr.bf16.mxu0 0
      %913 = vmatpush1.bf16.msra.mxu0 0
      %914 = vmatprep.subr.bf16.mxu0 0
      %915 = vmatpush1.bf16.msra.mxu0 0
      %916 = vmatprep.subr.bf16.mxu0 0
      %917 = vmatpush1.bf16.msra.mxu0 0
      %918 = vmatprep.subr.bf16.mxu0 0
      %919 = vmatpush1.bf16.msra.mxu0 0
      %920 = vmatprep.subr.bf16.mxu0 0
      %921 = vmatpush1.bf16.msra.mxu0 0
      %922 = vmatprep.subr.bf16.mxu0 0
      %923 = vmatpush1.bf16.msra.mxu0 0
      %924 = vmatprep.mubr.bf16.mxu0 0
      %925 = vmatmul.mubr.bf16.gmra.mrb[0].mxu0 %v819
      %v926 = vpop.f32.mrb[0].mxu0
      %v927 = vadd.f32 0.0, %v926
      %v928 = vpop.f32.mrb[0].mxu0
      %v929 = vpop.f32.mrb[0].mxu0
      %v930 = vadd.f32 0.0, %v929
      %v931 = vpop.f32.mrb[0].mxu0
      %932 = vmatprep.mubr.bf16.mxu0 0
      %933 = vmatmul.mubr.bf16.gmra.mrb[0].mxu0 %v820
      %v934 = vpop.f32.mrb[0].mxu0
      %v935 = vadd.f32 0.0, %v934
      %v936 = vpop.f32.mrb[0].mxu0
      %v937 = vpop.f32.mrb[0].mxu0
      %v938 = vadd.f32 0.0, %v937
      %v939 = vpop.f32.mrb[0].mxu0
      %940 = vmatprep.mubr.bf16.mxu0 0
      %941 = vmatmul.mubr.bf16.gmra.mrb[0].mxu0 %v821
      %v942 = vpop.f32.mrb[0].mxu0
      %v943 = vadd.f32 0.0, %v942
      %v944 = vpop.f32.mrb[0].mxu0
      %v945 = vpop.f32.mrb[0].mxu0
      %v946 = vadd.f32 0.0, %v945
      %v947 = vpop.f32.mrb[0].mxu0
      %948 = vmatprep.mubr.bf16.mxu0 0
      %949 = vmatmul.mubr.bf16.gmra.mrb[0].mxu0 %v822
      %v950 = vpop.f32.mrb[0].mxu0
      %v951 = vadd.f32 0.0, %v950
      %v952 = vpop.f32.mrb[0].mxu0
      %v953 = vpop.f32.mrb[0].mxu0
      %v954 = vadd.f32 0.0, %v953
      %v955 = vpop.f32.mrb[0].mxu0
      %956 = vmatprep.mubr.bf16.mxu0 0
      %957 = vmatmul.mubr.bf16.gmra.mrb[0].mxu0 %v823
      %v958 = vpop.f32.mrb[0].mxu0
      %v959 = vadd.f32 0.0, %v958
      %v960 = vpop.f32.mrb[0].mxu0
      %v961 = vpop.f32.mrb[0].mxu0
      %v962 = vadd.f32 0.0, %v961
      %v963 = vpop.f32.mrb[0].mxu0
      %964 = vmatprep.mubr.bf16.mxu0 0
      %965 = vmatmul.mubr.bf16.gmra.mrb[0].mxu0 %v824
      %v966 = vpop.f32.mrb[0].mxu0
      %v967 = vadd.f32 0.0, %v966
      %v968 = vpop.f32.mrb[0].mxu0
      %v969 = vpop.f32.mrb[0].mxu0
      %v970 = vadd.f32 0.0, %v969
      %v971 = vpop.f32.mrb[0].mxu0
      %972 = vmatprep.mubr.bf16.mxu0 0
      %973 = vmatmul.mubr.bf16.gmra.mrb[0].mxu0 %v825
      %v974 = vpop.f32.mrb[0].mxu0
      %v975 = vadd.f32 0.0, %v974
      %v976 = vpop.f32.mrb[0].mxu0
      %v977 = vpop.f32.mrb[0].mxu0
      %v978 = vadd.f32 0.0, %v977
      %v979 = vpop.f32.mrb[0].mxu0
      %980 = vmatprep.mubr.bf16.mxu0 0
      %981 = vmatmul.mubr.bf16.gmra.mrb[0].mxu0 %v826
      %v982 = vpop.f32.mrb[0].mxu0
      %v983 = vadd.f32 0.0, %v982
      %v984 = vpop.f32.mrb[0].mxu0
      %v985 = vpop.f32.mrb[0].mxu0
      %v986 = vadd.f32 0.0, %v985
      %v987 = vpop.f32.mrb[0].mxu0
      %988 = vdwg.mxu0
      %v989 = vadd.f32 %v784, %v927
      %v990 = vadd.f32 %v785, %v930
      %v991 = vadd.f32 %v786, %v935
      %v992 = vadd.f32 %v787, %v938
      %v993 = vadd.f32 %v788, %v943
      %v994 = vadd.f32 %v789, %v946
      %v995 = vadd.f32 %v790, %v951
      %v996 = vadd.f32 %v791, %v954
      %v997 = vadd.f32 %v792, %v959
      %v998 = vadd.f32 %v793, %v962
      %v999 = vadd.f32 %v794, %v967
      %v1000 = vadd.f32 %v795, %v970
      %v1001 = vadd.f32 %v796, %v975
      %v1002 = vadd.f32 %v797, %v978
      %v1003 = vadd.f32 %v798, %v983
      %v1004 = vadd.f32 %v799, %v986
      %v1005 = vld [vmem:[%s802 + $0x1] sm:$0xff]
      %v1006 = vld [vmem:[%s802 + $0x9] sm:$0xff]
      %v1007 = vld [vmem:[%s802 + $0x19] sm:$0xff]
      %v1008 = vld [vmem:[%s802 + $0x21] sm:$0xff]
      %v1009 = vld [vmem:[%s802 + $0x31] sm:$0xff]
      %v1010 = vld [vmem:[%s802 + $0x39] sm:$0xff]
      %v1011 = vld [vmem:[%s802 + $0x49] sm:$0xff]
      %v1012 = vld [vmem:[%s802 + $0x51] sm:$0xff]
      %v1013 = vld [vmem:[%s802 + $0x61] sm:$0xff]
      %v1014 = vld [vmem:[%s802 + $0x69] sm:$0xff]
      %v1015 = vld [vmem:[%s802 + $0x79] sm:$0xff]
      %v1016 = vld [vmem:[%s802 + $0x81] sm:$0xff]
      %v1017 = vld [vmem:[%s802 + $0x91] sm:$0xff]
      %v1018 = vld [vmem:[%s802 + $0x99] sm:$0xff]
      %v1019 = vld [vmem:[%s802 + $0xa9] sm:$0xff]
      %v1020 = vld [vmem:[%s802 + $0xb1] sm:$0xff]
      %v1021 = vpack.c.bf16 %v1006, %v1005
      %v1022 = vpack.c.bf16 %v1008, %v1007
      %v1023 = vpack.c.bf16 %v1010, %v1009
      %v1024 = vpack.c.bf16 %v1012, %v1011
      %v1025 = vpack.c.bf16 %v1014, %v1013
      %v1026 = vpack.c.bf16 %v1016, %v1015
      %v1027 = vpack.c.bf16 %v1018, %v1017
      %v1028 = vpack.c.bf16 %v1020, %v1019
      %s1029 = scalar_lea.vmem %s1, 256
      %v1030 = vld [vmem:[%s1029] sm:$0xf]
      %v1031 = vld [vmem:[%s1029 + $0x4] sm:$0xf]
      %v1032 = vld [vmem:[%s1029 + $0x8] sm:$0xf]
      %v1033 = vld [vmem:[%s1029 + $0xc] sm:$0xf]
      %v1034 = vld [vmem:[%s1029 + $0x10] sm:$0xf]
      %v1035 = vld [vmem:[%s1029 + $0x14] sm:$0xf]
      %v1036 = vld [vmem:[%s1029 + $0x18] sm:$0xf]
      %v1037 = vld [vmem:[%s1029 + $0x1c] sm:$0xf]
      %v1038 = vld [vmem:[%s1029 + $0x20] sm:$0xf]
      %v1039 = vld [vmem:[%s1029 + $0x24] sm:$0xf]
      %v1040 = vld [vmem:[%s1029 + $0x28] sm:$0xf]
      %v1041 = vld [vmem:[%s1029 + $0x2c] sm:$0xf]
      %v1042 = vld [vmem:[%s1029 + $0x30] sm:$0xf]
      %v1043 = vld [vmem:[%s1029 + $0x34] sm:$0xf]
      %v1044 = vld [vmem:[%s1029 + $0x38] sm:$0xf]
      %v1045 = vld [vmem:[%s1029 + $0x3c] sm:$0xf]
      %v1062 = vunpack.c.l.b16 %v1030
      %v1063 = vunpack.c.l.b16 %v1031
      %v1064 = vunpack.c.l.b16 %v1032
      %v1065 = vunpack.c.l.b16 %v1033
      %v1066 = vunpack.c.l.b16 %v1034
      %v1067 = vunpack.c.l.b16 %v1035
      %v1068 = vunpack.c.l.b16 %v1036
      %v1069 = vunpack.c.l.b16 %v1037
      %v1070 = vunpack.c.l.b16 %v1038
      %v1071 = vunpack.c.l.b16 %v1039
      %v1072 = vunpack.c.l.b16 %v1040
      %v1073 = vunpack.c.l.b16 %v1041
      %v1074 = vunpack.c.l.b16 %v1042
      %v1075 = vunpack.c.l.b16 %v1043
      %v1076 = vunpack.c.l.b16 %v1044
      %v1077 = vunpack.c.l.b16 %v1045
      %v1078 = vpack.c.b16 %v1063, %v1062
      %v1079 = vpack.c.b16 %v1065, %v1064
      %v1080 = vpack.c.b16 %v1067, %v1066
      %v1081 = vpack.c.b16 %v1069, %v1068
      %v1082 = vpack.c.b16 %v1071, %v1070
      %v1083 = vpack.c.b16 %v1073, %v1072
      %v1084 = vpack.c.b16 %v1075, %v1074
      %v1085 = vpack.c.b16 %v1077, %v1076
      %1094 = vmatprep.subr.bf16.mxu0 0
      %1095 = vmatpush1.bf16.msra.mxu0 %v1078
      %1096 = vmatprep.subr.bf16.mxu0 0
      %1097 = vmatpush1.bf16.msra.mxu0 %v1079
      %1098 = vmatprep.subr.bf16.mxu0 0
      %1099 = vmatpush1.bf16.msra.mxu0 %v1080
      %1100 = vmatprep.subr.bf16.mxu0 0
      %1101 = vmatpush1.bf16.msra.mxu0 %v1081
      %1102 = vmatprep.subr.bf16.mxu0 0
      %1103 = vmatpush1.bf16.msra.mxu0 %v1082
      %1104 = vmatprep.subr.bf16.mxu0 0
      %1105 = vmatpush1.bf16.msra.mxu0 %v1083
      %1106 = vmatprep.subr.bf16.mxu0 0
      %1107 = vmatpush1.bf16.msra.mxu0 %v1084
      %1108 = vmatprep.subr.bf16.mxu0 0
      %1109 = vmatpush1.bf16.msra.mxu0 %v1085
      %1110 = vmatprep.subr.bf16.mxu0 0
      %1111 = vmatpush1.bf16.msra.mxu0 0
      %1112 = vmatprep.subr.bf16.mxu0 0
      %1113 = vmatpush1.bf16.msra.mxu0 0
      %1114 = vmatprep.subr.bf16.mxu0 0
      %1115 = vmatpush1.bf16.msra.mxu0 0
      %1116 = vmatprep.subr.bf16.mxu0 0
      %1117 = vmatpush1.bf16.msra.mxu0 0
      %1118 = vmatprep.subr.bf16.mxu0 0
      %1119 = vmatpush1.bf16.msra.mxu0 0
      %1120 = vmatprep.subr.bf16.mxu0 0
      %1121 = vmatpush1.bf16.msra.mxu0 0
      %1122 = vmatprep.subr.bf16.mxu0 0
      %1123 = vmatpush1.bf16.msra.mxu0 0
      %1124 = vmatprep.subr.bf16.mxu0 0
      %1125 = vmatpush1.bf16.msra.mxu0 0
      %1126 = vmatprep.mubr.bf16.mxu0 0
      %1127 = vmatmul.mubr.bf16.gmra.mrb[0].mxu0 %v1021
      %v1128 = vpop.f32.mrb[0].mxu0
      %v1129 = vadd.f32 0.0, %v1128
      %v1130 = vpop.f32.mrb[0].mxu0
      %v1131 = vpop.f32.mrb[0].mxu0
      %v1132 = vadd.f32 0.0, %v1131
      %v1133 = vpop.f32.mrb[0].mxu0
      %1134 = vmatprep.mubr.bf16.mxu0 0
      %1135 = vmatmul.mubr.bf16.gmra.mrb[0].mxu0 %v1022
      %v1136 = vpop.f32.mrb[0].mxu0
      %v1137 = vadd.f32 0.0, %v1136
      %v1138 = vpop.f32.mrb[0].mxu0
      %v1139 = vpop.f32.mrb[0].mxu0
      %v1140 = vadd.f32 0.0, %v1139
      %v1141 = vpop.f32.mrb[0].mxu0
      %1142 = vmatprep.mubr.bf16.mxu0 0
      %1143 = vmatmul.mubr.bf16.gmra.mrb[0].mxu0 %v1023
      %v1144 = vpop.f32.mrb[0].mxu0
      %v1145 = vadd.f32 0.0, %v1144
      %v1146 = vpop.f32.mrb[0].mxu0
      %v1147 = vpop.f32.mrb[0].mxu0
      %v1148 = vadd.f32 0.0, %v1147
      %v1149 = vpop.f32.mrb[0].mxu0
      %1150 = vmatprep.mubr.bf16.mxu0 0
      %1151 = vmatmul.mubr.bf16.gmra.mrb[0].mxu0 %v1024
      %v1152 = vpop.f32.mrb[0].mxu0
      %v1153 = vadd.f32 0.0, %v1152
      %v1154 = vpop.f32.mrb[0].mxu0
      %v1155 = vpop.f32.mrb[0].mxu0
      %v1156 = vadd.f32 0.0, %v1155
      %v1157 = vpop.f32.mrb[0].mxu0
      %1158 = vmatprep.mubr.bf16.mxu0 0
      %1159 = vmatmul.mubr.bf16.gmra.mrb[0].mxu0 %v1025
      %v1160 = vpop.f32.mrb[0].mxu0
      %v1161 = vadd.f32 0.0, %v1160
      %v1162 = vpop.f32.mrb[0].mxu0
      %v1163 = vpop.f32.mrb[0].mxu0
      %v1164 = vadd.f32 0.0, %v1163
      %v1165 = vpop.f32.mrb[0].mxu0
      %1166 = vmatprep.mubr.bf16.mxu0 0
      %1167 = vmatmul.mubr.bf16.gmra.mrb[0].mxu0 %v1026
      %v1168 = vpop.f32.mrb[0].mxu0
      %v1169 = vadd.f32 0.0, %v1168
      %v1170 = vpop.f32.mrb[0].mxu0
      %v1171 = vpop.f32.mrb[0].mxu0
      %v1172 = vadd.f32 0.0, %v1171
      %v1173 = vpop.f32.mrb[0].mxu0
      %1174 = vmatprep.mubr.bf16.mxu0 0
      %1175 = vmatmul.mubr.bf16.gmra.mrb[0].mxu0 %v1027
      %v1176 = vpop.f32.mrb[0].mxu0
      %v1177 = vadd.f32 0.0, %v1176
      %v1178 = vpop.f32.mrb[0].mxu0
      %v1179 = vpop.f32.mrb[0].mxu0
      %v1180 = vadd.f32 0.0, %v1179
      %v1181 = vpop.f32.mrb[0].mxu0
      %1182 = vmatprep.mubr.bf16.mxu0 0
      %1183 = vmatmul.mubr.bf16.gmra.mrb[0].mxu0 %v1028
      %v1184 = vpop.f32.mrb[0].mxu0
      %v1185 = vadd.f32 0.0, %v1184
      %v1186 = vpop.f32.mrb[0].mxu0
      %v1187 = vpop.f32.mrb[0].mxu0
      %v1188 = vadd.f32 0.0, %v1187
      %v1189 = vpop.f32.mrb[0].mxu0
      %1190 = vdwg.mxu0
      %v1191 = vadd.f32 %v989, %v1129
      %v1192 = vadd.f32 %v990, %v1132
      %v1193 = vadd.f32 %v991, %v1137
      %v1194 = vadd.f32 %v992, %v1140
      %v1195 = vadd.f32 %v993, %v1145
      %v1196 = vadd.f32 %v994, %v1148
      %v1197 = vadd.f32 %v995, %v1153
      %v1198 = vadd.f32 %v996, %v1156
      %v1199 = vadd.f32 %v997, %v1161
      %v1200 = vadd.f32 %v998, %v1164
      %v1201 = vadd.f32 %v999, %v1169
      %v1202 = vadd.f32 %v1000, %v1172
      %v1203 = vadd.f32 %v1001, %v1177
      %v1204 = vadd.f32 %v1002, %v1180
      %v1205 = vadd.f32 %v1003, %v1185
      %v1206 = vadd.f32 %v1004, %v1188
      %v1207 = vld [vmem:[%s802 + $0x2] sm:$0xff]
      %v1208 = vld [vmem:[%s802 + $0xa] sm:$0xff]
      %v1209 = vld [vmem:[%s802 + $0x1a] sm:$0xff]
      %v1210 = vld [vmem:[%s802 + $0x22] sm:$0xff]
      %v1211 = vld [vmem:[%s802 + $0x32] sm:$0xff]
      %v1212 = vld [vmem:[%s802 + $0x3a] sm:$0xff]
      %v1213 = vld [vmem:[%s802 + $0x4a] sm:$0xff]
      %v1214 = vld [vmem:[%s802 + $0x52] sm:$0xff]
      %v1215 = vld [vmem:[%s802 + $0x62] sm:$0xff]
      %v1216 = vld [vmem:[%s802 + $0x6a] sm:$0xff]
      %v1217 = vld [vmem:[%s802 + $0x7a] sm:$0xff]
      %v1218 = vld [vmem:[%s802 + $0x82] sm:$0xff]
      %v1219 = vld [vmem:[%s802 + $0x92] sm:$0xff]
      %v1220 = vld [vmem:[%s802 + $0x9a] sm:$0xff]
      %v1221 = vld [vmem:[%s802 + $0xaa] sm:$0xff]
      %v1222 = vld [vmem:[%s802 + $0xb2] sm:$0xff]
      %v1223 = vpack.c.bf16 %v1208, %v1207
      %v1224 = vpack.c.bf16 %v1210, %v1209
      %v1225 = vpack.c.bf16 %v1212, %v1211
      %v1226 = vpack.c.bf16 %v1214, %v1213
      %v1227 = vpack.c.bf16 %v1216, %v1215
      %v1228 = vpack.c.bf16 %v1218, %v1217
      %v1229 = vpack.c.bf16 %v1220, %v1219
      %v1230 = vpack.c.bf16 %v1222, %v1221
      %s1231 = scalar_lea.vmem %s1, 320
      %v1232 = vld [vmem:[%s1231] sm:$0xf]
      %v1233 = vld [vmem:[%s1231 + $0x4] sm:$0xf]
      %v1234 = vld [vmem:[%s1231 + $0x8] sm:$0xf]
      %v1235 = vld [vmem:[%s1231 + $0xc] sm:$0xf]
      %v1236 = vld [vmem:[%s1231 + $0x10] sm:$0xf]
      %v1237 = vld [vmem:[%s1231 + $0x14] sm:$0xf]
      %v1238 = vld [vmem:[%s1231 + $0x18] sm:$0xf]
      %v1239 = vld [vmem:[%s1231 + $0x1c] sm:$0xf]
      %v1240 = vld [vmem:[%s1231 + $0x20] sm:$0xf]
      %v1241 = vld [vmem:[%s1231 + $0x24] sm:$0xf]
      %v1242 = vld [vmem:[%s1231 + $0x28] sm:$0xf]
      %v1243 = vld [vmem:[%s1231 + $0x2c] sm:$0xf]
      %v1244 = vld [vmem:[%s1231 + $0x30] sm:$0xf]
      %v1245 = vld [vmem:[%s1231 + $0x34] sm:$0xf]
      %v1246 = vld [vmem:[%s1231 + $0x38] sm:$0xf]
      %v1247 = vld [vmem:[%s1231 + $0x3c] sm:$0xf]
      %v1264 = vunpack.c.l.b16 %v1232
      %v1265 = vunpack.c.l.b16 %v1233
      %v1266 = vunpack.c.l.b16 %v1234
      %v1267 = vunpack.c.l.b16 %v1235
      %v1268 = vunpack.c.l.b16 %v1236
      %v1269 = vunpack.c.l.b16 %v1237
      %v1270 = vunpack.c.l.b16 %v1238
      %v1271 = vunpack.c.l.b16 %v1239
      %v1272 = vunpack.c.l.b16 %v1240
      %v1273 = vunpack.c.l.b16 %v1241
      %v1274 = vunpack.c.l.b16 %v1242
      %v1275 = vunpack.c.l.b16 %v1243
      %v1276 = vunpack.c.l.b16 %v1244
      %v1277 = vunpack.c.l.b16 %v1245
      %v1278 = vunpack.c.l.b16 %v1246
      %v1279 = vunpack.c.l.b16 %v1247
      %v1280 = vpack.c.b16 %v1265, %v1264
      %v1281 = vpack.c.b16 %v1267, %v1266
      %v1282 = vpack.c.b16 %v1269, %v1268
      %v1283 = vpack.c.b16 %v1271, %v1270
      %v1284 = vpack.c.b16 %v1273, %v1272
      %v1285 = vpack.c.b16 %v1275, %v1274
      %v1286 = vpack.c.b16 %v1277, %v1276
      %v1287 = vpack.c.b16 %v1279, %v1278
      %1296 = vmatprep.subr.bf16.mxu0 0
      %1297 = vmatpush1.bf16.msra.mxu0 %v1280
      %1298 = vmatprep.subr.bf16.mxu0 0
      %1299 = vmatpush1.bf16.msra.mxu0 %v1281
      %1300 = vmatprep.subr.bf16.mxu0 0
      %1301 = vmatpush1.bf16.msra.mxu0 %v1282
      %1302 = vmatprep.subr.bf16.mxu0 0
      %1303 = vmatpush1.bf16.msra.mxu0 %v1283
      %1304 = vmatprep.subr.bf16.mxu0 0
      %1305 = vmatpush1.bf16.msra.mxu0 %v1284
      %1306 = vmatprep.subr.bf16.mxu0 0
      %1307 = vmatpush1.bf16.msra.mxu0 %v1285
      %1308 = vmatprep.subr.bf16.mxu0 0
      %1309 = vmatpush1.bf16.msra.mxu0 %v1286
      %1310 = vmatprep.subr.bf16.mxu0 0
      %1311 = vmatpush1.bf16.msra.mxu0 %v1287
      %1312 = vmatprep.subr.bf16.mxu0 0
      %1313 = vmatpush1.bf16.msra.mxu0 0
      %1314 = vmatprep.subr.bf16.mxu0 0
      %1315 = vmatpush1.bf16.msra.mxu0 0
      %1316 = vmatprep.subr.bf16.mxu0 0
      %1317 = vmatpush1.bf16.msra.mxu0 0
      %1318 = vmatprep.subr.bf16.mxu0 0
      %1319 = vmatpush1.bf16.msra.mxu0 0
      %1320 = vmatprep.subr.bf16.mxu0 0
      %1321 = vmatpush1.bf16.msra.mxu0 0
      %1322 = vmatprep.subr.bf16.mxu0 0
      %1323 = vmatpush1.bf16.msra.mxu0 0
      %1324 = vmatprep.subr.bf16.mxu0 0
      %1325 = vmatpush1.bf16.msra.mxu0 0
      %1326 = vmatprep.subr.bf16.mxu0 0
      %1327 = vmatpush1.bf16.msra.mxu0 0
      %1328 = vmatprep.mubr.bf16.mxu0 0
      %1329 = vmatmul.mubr.bf16.gmra.mrb[0].mxu0 %v1223
      %v1330 = vpop.f32.mrb[0].mxu0
      %v1331 = vadd.f32 0.0, %v1330
      %v1332 = vpop.f32.mrb[0].mxu0
      %v1333 = vpop.f32.mrb[0].mxu0
      %v1334 = vadd.f32 0.0, %v1333
      %v1335 = vpop.f32.mrb[0].mxu0
      %1336 = vmatprep.mubr.bf16.mxu0 0
      %1337 = vmatmul.mubr.bf16.gmra.mrb[0].mxu0 %v1224
      %v1338 = vpop.f32.mrb[0].mxu0
      %v1339 = vadd.f32 0.0, %v1338
      %v1340 = vpop.f32.mrb[0].mxu0
      %v1341 = vpop.f32.mrb[0].mxu0
      %v1342 = vadd.f32 0.0, %v1341
      %v1343 = vpop.f32.mrb[0].mxu0
      %1344 = vmatprep.mubr.bf16.mxu0 0
      %1345 = vmatmul.mubr.bf16.gmra.mrb[0].mxu0 %v1225
      %v1346 = vpop.f32.mrb[0].mxu0
      %v1347 = vadd.f32 0.0, %v1346
      %v1348 = vpop.f32.mrb[0].mxu0
      %v1349 = vpop.f32.mrb[0].mxu0
      %v1350 = vadd.f32 0.0, %v1349
      %v1351 = vpop.f32.mrb[0].mxu0
      %1352 = vmatprep.mubr.bf16.mxu0 0
      %1353 = vmatmul.mubr.bf16.gmra.mrb[0].mxu0 %v1226
      %v1354 = vpop.f32.mrb[0].mxu0
      %v1355 = vadd.f32 0.0, %v1354
      %v1356 = vpop.f32.mrb[0].mxu0
      %v1357 = vpop.f32.mrb[0].mxu0
      %v1358 = vadd.f32 0.0, %v1357
      %v1359 = vpop.f32.mrb[0].mxu0
      %1360 = vmatprep.mubr.bf16.mxu0 0
      %1361 = vmatmul.mubr.bf16.gmra.mrb[0].mxu0 %v1227
      %v1362 = vpop.f32.mrb[0].mxu0
      %v1363 = vadd.f32 0.0, %v1362
      %v1364 = vpop.f32.mrb[0].mxu0
      %v1365 = vpop.f32.mrb[0].mxu0
      %v1366 = vadd.f32 0.0, %v1365
      %v1367 = vpop.f32.mrb[0].mxu0
      %1368 = vmatprep.mubr.bf16.mxu0 0
      %1369 = vmatmul.mubr.bf16.gmra.mrb[0].mxu0 %v1228
      %v1370 = vpop.f32.mrb[0].mxu0
      %v1371 = vadd.f32 0.0, %v1370
      %v1372 = vpop.f32.mrb[0].mxu0
      %v1373 = vpop.f32.mrb[0].mxu0
      %v1374 = vadd.f32 0.0, %v1373
      %v1375 = vpop.f32.mrb[0].mxu0
      %1376 = vmatprep.mubr.bf16.mxu0 0
      %1377 = vmatmul.mubr.bf16.gmra.mrb[0].mxu0 %v1229
      %v1378 = vpop.f32.mrb[0].mxu0
      %v1379 = vadd.f32 0.0, %v1378
      %v1380 = vpop.f32.mrb[0].mxu0
      %v1381 = vpop.f32.mrb[0].mxu0
      %v1382 = vadd.f32 0.0, %v1381
      %v1383 = vpop.f32.mrb[0].mxu0
      %1384 = vmatprep.mubr.bf16.mxu0 0
      %1385 = vmatmul.mubr.bf16.gmra.mrb[0].mxu0 %v1230
      %v1386 = vpop.f32.mrb[0].mxu0
      %v1387 = vadd.f32 0.0, %v1386
      %v1388 = vpop.f32.mrb[0].mxu0
      %v1389 = vpop.f32.mrb[0].mxu0
      %v1390 = vadd.f32 0.0, %v1389
      %v1391 = vpop.f32.mrb[0].mxu0
      %1392 = vdwg.mxu0
      %v1393 = vadd.f32 %v1191, %v1331
      %v1394 = vadd.f32 %v1192, %v1334
      %v1395 = vadd.f32 %v1193, %v1339
      %v1396 = vadd.f32 %v1194, %v1342
      %v1397 = vadd.f32 %v1195, %v1347
      %v1398 = vadd.f32 %v1196, %v1350
      %v1399 = vadd.f32 %v1197, %v1355
      %v1400 = vadd.f32 %v1198, %v1358
      %v1401 = vadd.f32 %v1199, %v1363
      %v1402 = vadd.f32 %v1200, %v1366
      %v1403 = vadd.f32 %v1201, %v1371
      %v1404 = vadd.f32 %v1202, %v1374
      %v1405 = vadd.f32 %v1203, %v1379
      %v1406 = vadd.f32 %v1204, %v1382
      %v1407 = vadd.f32 %v1205, %v1387
      %v1408 = vadd.f32 %v1206, %v1390
      %s1409 = sadd.s32 %s224, 2
      %s1410 = smul.u32 %s1409, 24
      %s1411 = scalar_lea.vmem %s211, %s1410
      %v1412 = vld [vmem:[%s1411] sm:$0xff]
      %v1413 = vld [vmem:[%s1411 + $0x8] sm:$0xff]
      %v1414 = vld [vmem:[%s1411 + $0x18] sm:$0xff]
      %v1415 = vld [vmem:[%s1411 + $0x20] sm:$0xff]
      %v1416 = vld [vmem:[%s1411 + $0x30] sm:$0xff]
      %v1417 = vld [vmem:[%s1411 + $0x38] sm:$0xff]
      %v1418 = vld [vmem:[%s1411 + $0x48] sm:$0xff]
      %v1419 = vld [vmem:[%s1411 + $0x50] sm:$0xff]
      %v1420 = vld [vmem:[%s1411 + $0x60] sm:$0xff]
      %v1421 = vld [vmem:[%s1411 + $0x68] sm:$0xff]
      %v1422 = vld [vmem:[%s1411 + $0x78] sm:$0xff]
      %v1423 = vld [vmem:[%s1411 + $0x80] sm:$0xff]
      %v1424 = vld [vmem:[%s1411 + $0x90] sm:$0xff]
      %v1425 = vld [vmem:[%s1411 + $0x98] sm:$0xff]
      %v1426 = vld [vmem:[%s1411 + $0xa8] sm:$0xff]
      %v1427 = vld [vmem:[%s1411 + $0xb0] sm:$0xff]
      %v1428 = vpack.c.bf16 %v1413, %v1412
      %v1429 = vpack.c.bf16 %v1415, %v1414
      %v1430 = vpack.c.bf16 %v1417, %v1416
      %v1431 = vpack.c.bf16 %v1419, %v1418
      %v1432 = vpack.c.bf16 %v1421, %v1420
      %v1433 = vpack.c.bf16 %v1423, %v1422
      %v1434 = vpack.c.bf16 %v1425, %v1424
      %v1435 = vpack.c.bf16 %v1427, %v1426
      %s1436 = scalar_lea.vmem %s1, 384
      %v1437 = vld [vmem:[%s1436] sm:$0xf]
      %v1438 = vld [vmem:[%s1436 + $0x4] sm:$0xf]
      %v1439 = vld [vmem:[%s1436 + $0x8] sm:$0xf]
      %v1440 = vld [vmem:[%s1436 + $0xc] sm:$0xf]
      %v1441 = vld [vmem:[%s1436 + $0x10] sm:$0xf]
      %v1442 = vld [vmem:[%s1436 + $0x14] sm:$0xf]
      %v1443 = vld [vmem:[%s1436 + $0x18] sm:$0xf]
      %v1444 = vld [vmem:[%s1436 + $0x1c] sm:$0xf]
      %v1445 = vld [vmem:[%s1436 + $0x20] sm:$0xf]
      %v1446 = vld [vmem:[%s1436 + $0x24] sm:$0xf]
      %v1447 = vld [vmem:[%s1436 + $0x28] sm:$0xf]
      %v1448 = vld [vmem:[%s1436 + $0x2c] sm:$0xf]
      %v1449 = vld [vmem:[%s1436 + $0x30] sm:$0xf]
      %v1450 = vld [vmem:[%s1436 + $0x34] sm:$0xf]
      %v1451 = vld [vmem:[%s1436 + $0x38] sm:$0xf]
      %v1452 = vld [vmem:[%s1436 + $0x3c] sm:$0xf]
      %v1469 = vunpack.c.l.b16 %v1437
      %v1470 = vunpack.c.l.b16 %v1438
      %v1471 = vunpack.c.l.b16 %v1439
      %v1472 = vunpack.c.l.b16 %v1440
      %v1473 = vunpack.c.l.b16 %v1441
      %v1474 = vunpack.c.l.b16 %v1442
      %v1475 = vunpack.c.l.b16 %v1443
      %v1476 = vunpack.c.l.b16 %v1444
      %v1477 = vunpack.c.l.b16 %v1445
      %v1478 = vunpack.c.l.b16 %v1446
      %v1479 = vunpack.c.l.b16 %v1447
      %v1480 = vunpack.c.l.b16 %v1448
      %v1481 = vunpack.c.l.b16 %v1449
      %v1482 = vunpack.c.l.b16 %v1450
      %v1483 = vunpack.c.l.b16 %v1451
      %v1484 = vunpack.c.l.b16 %v1452
      %v1485 = vpack.c.b16 %v1470, %v1469
      %v1486 = vpack.c.b16 %v1472, %v1471
      %v1487 = vpack.c.b16 %v1474, %v1473
      %v1488 = vpack.c.b16 %v1476, %v1475
      %v1489 = vpack.c.b16 %v1478, %v1477
      %v1490 = vpack.c.b16 %v1480, %v1479
      %v1491 = vpack.c.b16 %v1482, %v1481
      %v1492 = vpack.c.b16 %v1484, %v1483
      %1501 = vmatprep.subr.bf16.mxu0 0
      %1502 = vmatpush1.bf16.msra.mxu0 %v1485
      %1503 = vmatprep.subr.bf16.mxu0 0
      %1504 = vmatpush1.bf16.msra.mxu0 %v1486
      %1505 = vmatprep.subr.bf16.mxu0 0
      %1506 = vmatpush1.bf16.msra.mxu0 %v1487
      %1507 = vmatprep.subr.bf16.mxu0 0
      %1508 = vmatpush1.bf16.msra.mxu0 %v1488
      %1509 = vmatprep.subr.bf16.mxu0 0
      %1510 = vmatpush1.bf16.msra.mxu0 %v1489
      %1511 = vmatprep.subr.bf16.mxu0 0
      %1512 = vmatpush1.bf16.msra.mxu0 %v1490
      %1513 = vmatprep.subr.bf16.mxu0 0
      %1514 = vmatpush1.bf16.msra.mxu0 %v1491
      %1515 = vmatprep.subr.bf16.mxu0 0
      %1516 = vmatpush1.bf16.msra.mxu0 %v1492
      %1517 = vmatprep.subr.bf16.mxu0 0
      %1518 = vmatpush1.bf16.msra.mxu0 0
      %1519 = vmatprep.subr.bf16.mxu0 0
      %1520 = vmatpush1.bf16.msra.mxu0 0
      %1521 = vmatprep.subr.bf16.mxu0 0
      %1522 = vmatpush1.bf16.msra.mxu0 0
      %1523 = vmatprep.subr.bf16.mxu0 0
      %1524 = vmatpush1.bf16.msra.mxu0 0
      %1525 = vmatprep.subr.bf16.mxu0 0
      %1526 = vmatpush1.bf16.msra.mxu0 0
      %1527 = vmatprep.subr.bf16.mxu0 0
      %1528 = vmatpush1.bf16.msra.mxu0 0
      %1529 = vmatprep.subr.bf16.mxu0 0
      %1530 = vmatpush1.bf16.msra.mxu0 0
      %1531 = vmatprep.subr.bf16.mxu0 0
      %1532 = vmatpush1.bf16.msra.mxu0 0
      %1533 = vmatprep.mubr.bf16.mxu0 0
      %1534 = vmatmul.mubr.bf16.gmra.mrb[0].mxu0 %v1428
      %v1535 = vpop.f32.mrb[0].mxu0
      %v1536 = vadd.f32 0.0, %v1535
      %v1537 = vpop.f32.mrb[0].mxu0
      %v1538 = vpop.f32.mrb[0].mxu0
      %v1539 = vadd.f32 0.0, %v1538
      %v1540 = vpop.f32.mrb[0].mxu0
      %1541 = vmatprep.mubr.bf16.mxu0 0
      %1542 = vmatmul.mubr.bf16.gmra.mrb[0].mxu0 %v1429
      %v1543 = vpop.f32.mrb[0].mxu0
      %v1544 = vadd.f32 0.0, %v1543
      %v1545 = vpop.f32.mrb[0].mxu0
      %v1546 = vpop.f32.mrb[0].mxu0
      %v1547 = vadd.f32 0.0, %v1546
      %v1548 = vpop.f32.mrb[0].mxu0
      %1549 = vmatprep.mubr.bf16.mxu0 0
      %1550 = vmatmul.mubr.bf16.gmra.mrb[0].mxu0 %v1430
      %v1551 = vpop.f32.mrb[0].mxu0
      %v1552 = vadd.f32 0.0, %v1551
      %v1553 = vpop.f32.mrb[0].mxu0
      %v1554 = vpop.f32.mrb[0].mxu0
      %v1555 = vadd.f32 0.0, %v1554
      %v1556 = vpop.f32.mrb[0].mxu0
      %1557 = vmatprep.mubr.bf16.mxu0 0
      %1558 = vmatmul.mubr.bf16.gmra.mrb[0].mxu0 %v1431
      %v1559 = vpop.f32.mrb[0].mxu0
      %v1560 = vadd.f32 0.0, %v1559
      %v1561 = vpop.f32.mrb[0].mxu0
      %v1562 = vpop.f32.mrb[0].mxu0
      %v1563 = vadd.f32 0.0, %v1562
      %v1564 = vpop.f32.mrb[0].mxu0
      %1565 = vmatprep.mubr.bf16.mxu0 0
      %1566 = vmatmul.mubr.bf16.gmra.mrb[0].mxu0 %v1432
      %v1567 = vpop.f32.mrb[0].mxu0
      %v1568 = vadd.f32 0.0, %v1567
      %v1569 = vpop.f32.mrb[0].mxu0
      %v1570 = vpop.f32.mrb[0].mxu0
      %v1571 = vadd.f32 0.0, %v1570
      %v1572 = vpop.f32.mrb[0].mxu0
      %1573 = vmatprep.mubr.bf16.mxu0 0
      %1574 = vmatmul.mubr.bf16.gmra.mrb[0].mxu0 %v1433
      %v1575 = vpop.f32.mrb[0].mxu0
      %v1576 = vadd.f32 0.0, %v1575
      %v1577 = vpop.f32.mrb[0].mxu0
      %v1578 = vpop.f32.mrb[0].mxu0
      %v1579 = vadd.f32 0.0, %v1578
      %v1580 = vpop.f32.mrb[0].mxu0
      %1581 = vmatprep.mubr.bf16.mxu0 0
      %1582 = vmatmul.mubr.bf16.gmra.mrb[0].mxu0 %v1434
      %v1583 = vpop.f32.mrb[0].mxu0
      %v1584 = vadd.f32 0.0, %v1583
      %v1585 = vpop.f32.mrb[0].mxu0
      %v1586 = vpop.f32.mrb[0].mxu0
      %v1587 = vadd.f32 0.0, %v1586
      %v1588 = vpop.f32.mrb[0].mxu0
      %1589 = vmatprep.mubr.bf16.mxu0 0
      %1590 = vmatmul.mubr.bf16.gmra.mrb[0].mxu0 %v1435
      %v1591 = vpop.f32.mrb[0].mxu0
      %v1592 = vadd.f32 0.0, %v1591
      %v1593 = vpop.f32.mrb[0].mxu0
      %v1594 = vpop.f32.mrb[0].mxu0
      %v1595 = vadd.f32 0.0, %v1594
      %v1596 = vpop.f32.mrb[0].mxu0
      %1597 = vdwg.mxu0
      %v1598 = vadd.f32 %v1393, %v1536
      %v1599 = vadd.f32 %v1394, %v1539
      %v1600 = vadd.f32 %v1395, %v1544
      %v1601 = vadd.f32 %v1396, %v1547
      %v1602 = vadd.f32 %v1397, %v1552
      %v1603 = vadd.f32 %v1398, %v1555
      %v1604 = vadd.f32 %v1399, %v1560
      %v1605 = vadd.f32 %v1400, %v1563
      %v1606 = vadd.f32 %v1401, %v1568
      %v1607 = vadd.f32 %v1402, %v1571
      %v1608 = vadd.f32 %v1403, %v1576
      %v1609 = vadd.f32 %v1404, %v1579
      %v1610 = vadd.f32 %v1405, %v1584
      %v1611 = vadd.f32 %v1406, %v1587
      %v1612 = vadd.f32 %v1407, %v1592
      %v1613 = vadd.f32 %v1408, %v1595
      %v1614 = vld [vmem:[%s1411 + $0x1] sm:$0xff]
      %v1615 = vld [vmem:[%s1411 + $0x9] sm:$0xff]
      %v1616 = vld [vmem:[%s1411 + $0x19] sm:$0xff]
      %v1617 = vld [vmem:[%s1411 + $0x21] sm:$0xff]
      %v1618 = vld [vmem:[%s1411 + $0x31] sm:$0xff]
      %v1619 = vld [vmem:[%s1411 + $0x39] sm:$0xff]
      %v1620 = vld [vmem:[%s1411 + $0x49] sm:$0xff]
      %v1621 = vld [vmem:[%s1411 + $0x51] sm:$0xff]
      %v1622 = vld [vmem:[%s1411 + $0x61] sm:$0xff]
      %v1623 = vld [vmem:[%s1411 + $0x69] sm:$0xff]
      %v1624 = vld [vmem:[%s1411 + $0x79] sm:$0xff]
      %v1625 = vld [vmem:[%s1411 + $0x81] sm:$0xff]
      %v1626 = vld [vmem:[%s1411 + $0x91] sm:$0xff]
      %v1627 = vld [vmem:[%s1411 + $0x99] sm:$0xff]
      %v1628 = vld [vmem:[%s1411 + $0xa9] sm:$0xff]
      %v1629 = vld [vmem:[%s1411 + $0xb1] sm:$0xff]
      %v1630 = vpack.c.bf16 %v1615, %v1614
      %v1631 = vpack.c.bf16 %v1617, %v1616
      %v1632 = vpack.c.bf16 %v1619, %v1618
      %v1633 = vpack.c.bf16 %v1621, %v1620
      %v1634 = vpack.c.bf16 %v1623, %v1622
      %v1635 = vpack.c.bf16 %v1625, %v1624
      %v1636 = vpack.c.bf16 %v1627, %v1626
      %v1637 = vpack.c.bf16 %v1629, %v1628
      %s1638 = scalar_lea.vmem %s1, 448
      %v1639 = vld [vmem:[%s1638] sm:$0xf]
      %v1640 = vld [vmem:[%s1638 + $0x4] sm:$0xf]
      %v1641 = vld [vmem:[%s1638 + $0x8] sm:$0xf]
      %v1642 = vld [vmem:[%s1638 + $0xc] sm:$0xf]
      %v1643 = vld [vmem:[%s1638 + $0x10] sm:$0xf]
      %v1644 = vld [vmem:[%s1638 + $0x14] sm:$0xf]
      %v1645 = vld [vmem:[%s1638 + $0x18] sm:$0xf]
      %v1646 = vld [vmem:[%s1638 + $0x1c] sm:$0xf]
      %v1647 = vld [vmem:[%s1638 + $0x20] sm:$0xf]
      %v1648 = vld [vmem:[%s1638 + $0x24] sm:$0xf]
      %v1649 = vld [vmem:[%s1638 + $0x28] sm:$0xf]
      %v1650 = vld [vmem:[%s1638 + $0x2c] sm:$0xf]
      %v1651 = vld [vmem:[%s1638 + $0x30] sm:$0xf]
      %v1652 = vld [vmem:[%s1638 + $0x34] sm:$0xf]
      %v1653 = vld [vmem:[%s1638 + $0x38] sm:$0xf]
      %v1654 = vld [vmem:[%s1638 + $0x3c] sm:$0xf]
      %v1671 = vunpack.c.l.b16 %v1639
      %v1672 = vunpack.c.l.b16 %v1640
      %v1673 = vunpack.c.l.b16 %v1641
      %v1674 = vunpack.c.l.b16 %v1642
      %v1675 = vunpack.c.l.b16 %v1643
      %v1676 = vunpack.c.l.b16 %v1644
      %v1677 = vunpack.c.l.b16 %v1645
      %v1678 = vunpack.c.l.b16 %v1646
      %v1679 = vunpack.c.l.b16 %v1647
      %v1680 = vunpack.c.l.b16 %v1648
      %v1681 = vunpack.c.l.b16 %v1649
      %v1682 = vunpack.c.l.b16 %v1650
      %v1683 = vunpack.c.l.b16 %v1651
      %v1684 = vunpack.c.l.b16 %v1652
      %v1685 = vunpack.c.l.b16 %v1653
      %v1686 = vunpack.c.l.b16 %v1654
      %v1687 = vpack.c.b16 %v1672, %v1671
      %v1688 = vpack.c.b16 %v1674, %v1673
      %v1689 = vpack.c.b16 %v1676, %v1675
      %v1690 = vpack.c.b16 %v1678, %v1677
      %v1691 = vpack.c.b16 %v1680, %v1679
      %v1692 = vpack.c.b16 %v1682, %v1681
      %v1693 = vpack.c.b16 %v1684, %v1683
      %v1694 = vpack.c.b16 %v1686, %v1685
      %1703 = vmatprep.subr.bf16.mxu0 0
      %1704 = vmatpush1.bf16.msra.mxu0 %v1687
      %1705 = vmatprep.subr.bf16.mxu0 0
      %1706 = vmatpush1.bf16.msra.mxu0 %v1688
      %1707 = vmatprep.subr.bf16.mxu0 0
      %1708 = vmatpush1.bf16.msra.mxu0 %v1689
      %1709 = vmatprep.subr.bf16.mxu0 0
      %1710 = vmatpush1.bf16.msra.mxu0 %v1690
      %1711 = vmatprep.subr.bf16.mxu0 0
      %1712 = vmatpush1.bf16.msra.mxu0 %v1691
      %1713 = vmatprep.subr.bf16.mxu0 0
      %1714 = vmatpush1.bf16.msra.mxu0 %v1692
      %1715 = vmatprep.subr.bf16.mxu0 0
      %1716 = vmatpush1.bf16.msra.mxu0 %v1693
      %1717 = vmatprep.subr.bf16.mxu0 0
      %1718 = vmatpush1.bf16.msra.mxu0 %v1694
      %1719 = vmatprep.subr.bf16.mxu0 0
      %1720 = vmatpush1.bf16.msra.mxu0 0
      %1721 = vmatprep.subr.bf16.mxu0 0
      %1722 = vmatpush1.bf16.msra.mxu0 0
      %1723 = vmatprep.subr.bf16.mxu0 0
      %1724 = vmatpush1.bf16.msra.mxu0 0
      %1725 = vmatprep.subr.bf16.mxu0 0
      %1726 = vmatpush1.bf16.msra.mxu0 0
      %1727 = vmatprep.subr.bf16.mxu0 0
      %1728 = vmatpush1.bf16.msra.mxu0 0
      %1729 = vmatprep.subr.bf16.mxu0 0
      %1730 = vmatpush1.bf16.msra.mxu0 0
      %1731 = vmatprep.subr.bf16.mxu0 0
      %1732 = vmatpush1.bf16.msra.mxu0 0
      %1733 = vmatprep.subr.bf16.mxu0 0
      %1734 = vmatpush1.bf16.msra.mxu0 0
      %1735 = vmatprep.mubr.bf16.mxu0 0
      %1736 = vmatmul.mubr.bf16.gmra.mrb[0].mxu0 %v1630
      %v1737 = vpop.f32.mrb[0].mxu0
      %v1738 = vadd.f32 0.0, %v1737
      %v1739 = vpop.f32.mrb[0].mxu0
      %v1740 = vpop.f32.mrb[0].mxu0
      %v1741 = vadd.f32 0.0, %v1740
      %v1742 = vpop.f32.mrb[0].mxu0
      %1743 = vmatprep.mubr.bf16.mxu0 0
      %1744 = vmatmul.mubr.bf16.gmra.mrb[0].mxu0 %v1631
      %v1745 = vpop.f32.mrb[0].mxu0
      %v1746 = vadd.f32 0.0, %v1745
      %v1747 = vpop.f32.mrb[0].mxu0
      %v1748 = vpop.f32.mrb[0].mxu0
      %v1749 = vadd.f32 0.0, %v1748
      %v1750 = vpop.f32.mrb[0].mxu0
      %1751 = vmatprep.mubr.bf16.mxu0 0
      %1752 = vmatmul.mubr.bf16.gmra.mrb[0].mxu0 %v1632
      %v1753 = vpop.f32.mrb[0].mxu0
      %v1754 = vadd.f32 0.0, %v1753
      %v1755 = vpop.f32.mrb[0].mxu0
      %v1756 = vpop.f32.mrb[0].mxu0
      %v1757 = vadd.f32 0.0, %v1756
      %v1758 = vpop.f32.mrb[0].mxu0
      %1759 = vmatprep.mubr.bf16.mxu0 0
      %1760 = vmatmul.mubr.bf16.gmra.mrb[0].mxu0 %v1633
      %v1761 = vpop.f32.mrb[0].mxu0
      %v1762 = vadd.f32 0.0, %v1761
      %v1763 = vpop.f32.mrb[0].mxu0
      %v1764 = vpop.f32.mrb[0].mxu0
      %v1765 = vadd.f32 0.0, %v1764
      %v1766 = vpop.f32.mrb[0].mxu0
      %1767 = vmatprep.mubr.bf16.mxu0 0
      %1768 = vmatmul.mubr.bf16.gmra.mrb[0].mxu0 %v1634
      %v1769 = vpop.f32.mrb[0].mxu0
      %v1770 = vadd.f32 0.0, %v1769
      %v1771 = vpop.f32.mrb[0].mxu0
      %v1772 = vpop.f32.mrb[0].mxu0
      %v1773 = vadd.f32 0.0, %v1772
      %v1774 = vpop.f32.mrb[0].mxu0
      %1775 = vmatprep.mubr.bf16.mxu0 0
      %1776 = vmatmul.mubr.bf16.gmra.mrb[0].mxu0 %v1635
      %v1777 = vpop.f32.mrb[0].mxu0
      %v1778 = vadd.f32 0.0, %v1777
      %v1779 = vpop.f32.mrb[0].mxu0
      %v1780 = vpop.f32.mrb[0].mxu0
      %v1781 = vadd.f32 0.0, %v1780
      %v1782 = vpop.f32.mrb[0].mxu0
      %1783 = vmatprep.mubr.bf16.mxu0 0
      %1784 = vmatmul.mubr.bf16.gmra.mrb[0].mxu0 %v1636
      %v1785 = vpop.f32.mrb[0].mxu0
      %v1786 = vadd.f32 0.0, %v1785
      %v1787 = vpop.f32.mrb[0].mxu0
      %v1788 = vpop.f32.mrb[0].mxu0
      %v1789 = vadd.f32 0.0, %v1788
      %v1790 = vpop.f32.mrb[0].mxu0
      %1791 = vmatprep.mubr.bf16.mxu0 0
      %1792 = vmatmul.mubr.bf16.gmra.mrb[0].mxu0 %v1637
      %v1793 = vpop.f32.mrb[0].mxu0
      %v1794 = vadd.f32 0.0, %v1793
      %v1795 = vpop.f32.mrb[0].mxu0
      %v1796 = vpop.f32.mrb[0].mxu0
      %v1797 = vadd.f32 0.0, %v1796
      %v1798 = vpop.f32.mrb[0].mxu0
      %1799 = vdwg.mxu0
      %v1800 = vadd.f32 %v1598, %v1738
      %v1801 = vadd.f32 %v1599, %v1741
      %v1802 = vadd.f32 %v1600, %v1746
      %v1803 = vadd.f32 %v1601, %v1749
      %v1804 = vadd.f32 %v1602, %v1754
      %v1805 = vadd.f32 %v1603, %v1757
      %v1806 = vadd.f32 %v1604, %v1762
      %v1807 = vadd.f32 %v1605, %v1765
      %v1808 = vadd.f32 %v1606, %v1770
      %v1809 = vadd.f32 %v1607, %v1773
      %v1810 = vadd.f32 %v1608, %v1778
      %v1811 = vadd.f32 %v1609, %v1781
      %v1812 = vadd.f32 %v1610, %v1786
      %v1813 = vadd.f32 %v1611, %v1789
      %v1814 = vadd.f32 %v1612, %v1794
      %v1815 = vadd.f32 %v1613, %v1797
      %v1816 = vld [vmem:[%s1411 + $0x2] sm:$0xff]
      %v1817 = vld [vmem:[%s1411 + $0xa] sm:$0xff]
      %v1818 = vld [vmem:[%s1411 + $0x1a] sm:$0xff]
      %v1819 = vld [vmem:[%s1411 + $0x22] sm:$0xff]
      %v1820 = vld [vmem:[%s1411 + $0x32] sm:$0xff]
      %v1821 = vld [vmem:[%s1411 + $0x3a] sm:$0xff]
      %v1822 = vld [vmem:[%s1411 + $0x4a] sm:$0xff]
      %v1823 = vld [vmem:[%s1411 + $0x52] sm:$0xff]
      %v1824 = vld [vmem:[%s1411 + $0x62] sm:$0xff]
      %v1825 = vld [vmem:[%s1411 + $0x6a] sm:$0xff]
      %v1826 = vld [vmem:[%s1411 + $0x7a] sm:$0xff]
      %v1827 = vld [vmem:[%s1411 + $0x82] sm:$0xff]
      %v1828 = vld [vmem:[%s1411 + $0x92] sm:$0xff]
      %v1829 = vld [vmem:[%s1411 + $0x9a] sm:$0xff]
      %v1830 = vld [vmem:[%s1411 + $0xaa] sm:$0xff]
      %v1831 = vld [vmem:[%s1411 + $0xb2] sm:$0xff]
      %v1832 = vpack.c.bf16 %v1817, %v1816
      %v1833 = vpack.c.bf16 %v1819, %v1818
      %v1834 = vpack.c.bf16 %v1821, %v1820
      %v1835 = vpack.c.bf16 %v1823, %v1822
      %v1836 = vpack.c.bf16 %v1825, %v1824
      %v1837 = vpack.c.bf16 %v1827, %v1826
      %v1838 = vpack.c.bf16 %v1829, %v1828
      %v1839 = vpack.c.bf16 %v1831, %v1830
      %s1840 = scalar_lea.vmem %s1, 512
      %v1841 = vld [vmem:[%s1840] sm:$0xf]
      %v1842 = vld [vmem:[%s1840 + $0x4] sm:$0xf]
      %v1843 = vld [vmem:[%s1840 + $0x8] sm:$0xf]
      %v1844 = vld [vmem:[%s1840 + $0xc] sm:$0xf]
      %v1845 = vld [vmem:[%s1840 + $0x10] sm:$0xf]
      %v1846 = vld [vmem:[%s1840 + $0x14] sm:$0xf]
      %v1847 = vld [vmem:[%s1840 + $0x18] sm:$0xf]
      %v1848 = vld [vmem:[%s1840 + $0x1c] sm:$0xf]
      %v1849 = vld [vmem:[%s1840 + $0x20] sm:$0xf]
      %v1850 = vld [vmem:[%s1840 + $0x24] sm:$0xf]
      %v1851 = vld [vmem:[%s1840 + $0x28] sm:$0xf]
      %v1852 = vld [vmem:[%s1840 + $0x2c] sm:$0xf]
      %v1853 = vld [vmem:[%s1840 + $0x30] sm:$0xf]
      %v1854 = vld [vmem:[%s1840 + $0x34] sm:$0xf]
      %v1855 = vld [vmem:[%s1840 + $0x38] sm:$0xf]
      %v1856 = vld [vmem:[%s1840 + $0x3c] sm:$0xf]
      %v1873 = vunpack.c.l.b16 %v1841
      %v1874 = vunpack.c.l.b16 %v1842
      %v1875 = vunpack.c.l.b16 %v1843
      %v1876 = vunpack.c.l.b16 %v1844
      %v1877 = vunpack.c.l.b16 %v1845
      %v1878 = vunpack.c.l.b16 %v1846
      %v1879 = vunpack.c.l.b16 %v1847
      %v1880 = vunpack.c.l.b16 %v1848
      %v1881 = vunpack.c.l.b16 %v1849
      %v1882 = vunpack.c.l.b16 %v1850
      %v1883 = vunpack.c.l.b16 %v1851
      %v1884 = vunpack.c.l.b16 %v1852
      %v1885 = vunpack.c.l.b16 %v1853
      %v1886 = vunpack.c.l.b16 %v1854
      %v1887 = vunpack.c.l.b16 %v1855
      %v1888 = vunpack.c.l.b16 %v1856
      %v1889 = vpack.c.b16 %v1874, %v1873
      %v1890 = vpack.c.b16 %v1876, %v1875
      %v1891 = vpack.c.b16 %v1878, %v1877
      %v1892 = vpack.c.b16 %v1880, %v1879
      %v1893 = vpack.c.b16 %v1882, %v1881
      %v1894 = vpack.c.b16 %v1884, %v1883
      %v1895 = vpack.c.b16 %v1886, %v1885
      %v1896 = vpack.c.b16 %v1888, %v1887
      %1905 = vmatprep.subr.bf16.mxu0 0
      %1906 = vmatpush1.bf16.msra.mxu0 %v1889
      %1907 = vmatprep.subr.bf16.mxu0 0
      %1908 = vmatpush1.bf16.msra.mxu0 %v1890
      %1909 = vmatprep.subr.bf16.mxu0 0
      %1910 = vmatpush1.bf16.msra.mxu0 %v1891
      %1911 = vmatprep.subr.bf16.mxu0 0
      %1912 = vmatpush1.bf16.msra.mxu0 %v1892
      %1913 = vmatprep.subr.bf16.mxu0 0
      %1914 = vmatpush1.bf16.msra.mxu0 %v1893
      %1915 = vmatprep.subr.bf16.mxu0 0
      %1916 = vmatpush1.bf16.msra.mxu0 %v1894
      %1917 = vmatprep.subr.bf16.mxu0 0
      %1918 = vmatpush1.bf16.msra.mxu0 %v1895
      %1919 = vmatprep.subr.bf16.mxu0 0
      %1920 = vmatpush1.bf16.msra.mxu0 %v1896
      %1921 = vmatprep.subr.bf16.mxu0 0
      %1922 = vmatpush1.bf16.msra.mxu0 0
      %1923 = vmatprep.subr.bf16.mxu0 0
      %1924 = vmatpush1.bf16.msra.mxu0 0
      %1925 = vmatprep.subr.bf16.mxu0 0
      %1926 = vmatpush1.bf16.msra.mxu0 0
      %1927 = vmatprep.subr.bf16.mxu0 0
      %1928 = vmatpush1.bf16.msra.mxu0 0
      %1929 = vmatprep.subr.bf16.mxu0 0
      %1930 = vmatpush1.bf16.msra.mxu0 0
      %1931 = vmatprep.subr.bf16.mxu0 0
      %1932 = vmatpush1.bf16.msra.mxu0 0
      %1933 = vmatprep.subr.bf16.mxu0 0
      %1934 = vmatpush1.bf16.msra.mxu0 0
      %1935 = vmatprep.subr.bf16.mxu0 0
      %1936 = vmatpush1.bf16.msra.mxu0 0
      %1937 = vmatprep.mubr.bf16.mxu0 0
      %1938 = vmatmul.mubr.bf16.gmra.mrb[0].mxu0 %v1832
      %v1939 = vpop.f32.mrb[0].mxu0
      %v1940 = vadd.f32 0.0, %v1939
      %v1941 = vpop.f32.mrb[0].mxu0
      %v1942 = vpop.f32.mrb[0].mxu0
      %v1943 = vadd.f32 0.0, %v1942
      %v1944 = vpop.f32.mrb[0].mxu0
      %1945 = vmatprep.mubr.bf16.mxu0 0
      %1946 = vmatmul.mubr.bf16.gmra.mrb[0].mxu0 %v1833
      %v1947 = vpop.f32.mrb[0].mxu0
      %v1948 = vadd.f32 0.0, %v1947
      %v1949 = vpop.f32.mrb[0].mxu0
      %v1950 = vpop.f32.mrb[0].mxu0
      %v1951 = vadd.f32 0.0, %v1950
      %v1952 = vpop.f32.mrb[0].mxu0
      %1953 = vmatprep.mubr.bf16.mxu0 0
      %1954 = vmatmul.mubr.bf16.gmra.mrb[0].mxu0 %v1834
      %v1955 = vpop.f32.mrb[0].mxu0
      %v1956 = vadd.f32 0.0, %v1955
      %v1957 = vpop.f32.mrb[0].mxu0
      %v1958 = vpop.f32.mrb[0].mxu0
      %v1959 = vadd.f32 0.0, %v1958
      %v1960 = vpop.f32.mrb[0].mxu0
      %1961 = vmatprep.mubr.bf16.mxu0 0
      %1962 = vmatmul.mubr.bf16.gmra.mrb[0].mxu0 %v1835
      %v1963 = vpop.f32.mrb[0].mxu0
      %v1964 = vadd.f32 0.0, %v1963
      %v1965 = vpop.f32.mrb[0].mxu0
      %v1966 = vpop.f32.mrb[0].mxu0
      %v1967 = vadd.f32 0.0, %v1966
      %v1968 = vpop.f32.mrb[0].mxu0
      %1969 = vmatprep.mubr.bf16.mxu0 0
      %1970 = vmatmul.mubr.bf16.gmra.mrb[0].mxu0 %v1836
      %v1971 = vpop.f32.mrb[0].mxu0
      %v1972 = vadd.f32 0.0, %v1971
      %v1973 = vpop.f32.mrb[0].mxu0
      %v1974 = vpop.f32.mrb[0].mxu0
      %v1975 = vadd.f32 0.0, %v1974
      %v1976 = vpop.f32.mrb[0].mxu0
      %1977 = vmatprep.mubr.bf16.mxu0 0
      %1978 = vmatmul.mubr.bf16.gmra.mrb[0].mxu0 %v1837
      %v1979 = vpop.f32.mrb[0].mxu0
      %v1980 = vadd.f32 0.0, %v1979
      %v1981 = vpop.f32.mrb[0].mxu0
      %v1982 = vpop.f32.mrb[0].mxu0
      %v1983 = vadd.f32 0.0, %v1982
      %v1984 = vpop.f32.mrb[0].mxu0
      %1985 = vmatprep.mubr.bf16.mxu0 0
      %1986 = vmatmul.mubr.bf16.gmra.mrb[0].mxu0 %v1838
      %v1987 = vpop.f32.mrb[0].mxu0
      %v1988 = vadd.f32 0.0, %v1987
      %v1989 = vpop.f32.mrb[0].mxu0
      %v1990 = vpop.f32.mrb[0].mxu0
      %v1991 = vadd.f32 0.0, %v1990
      %v1992 = vpop.f32.mrb[0].mxu0
      %1993 = vmatprep.mubr.bf16.mxu0 0
      %1994 = vmatmul.mubr.bf16.gmra.mrb[0].mxu0 %v1839
      %v1995 = vpop.f32.mrb[0].mxu0
      %v1996 = vadd.f32 0.0, %v1995
      %v1997 = vpop.f32.mrb[0].mxu0
      %v1998 = vpop.f32.mrb[0].mxu0
      %v1999 = vadd.f32 0.0, %v1998
      %v2000 = vpop.f32.mrb[0].mxu0
      %2001 = vdwg.mxu0
      %v2002 = vadd.f32 %v1800, %v1940
      %v2003 = vadd.f32 %v1801, %v1943
      %v2004 = vadd.f32 %v1802, %v1948
      %v2005 = vadd.f32 %v1803, %v1951
      %v2006 = vadd.f32 %v1804, %v1956
      %v2007 = vadd.f32 %v1805, %v1959
      %v2008 = vadd.f32 %v1806, %v1964
      %v2009 = vadd.f32 %v1807, %v1967
      %v2010 = vadd.f32 %v1808, %v1972
      %v2011 = vadd.f32 %v1809, %v1975
      %v2012 = vadd.f32 %v1810, %v1980
      %v2013 = vadd.f32 %v1811, %v1983
      %v2014 = vadd.f32 %v1812, %v1988
      %v2015 = vadd.f32 %v1813, %v1991
      %v2016 = vadd.f32 %v1814, %v1996
      %v2017 = vadd.f32 %v1815, %v1999
      %v2018 = vld [vmem:[%s2] sm:$0x1]
      %v2020 = vlaneseq
      %v2021 = vshrl.u32 %v2020, 7
      %v2022 = vsub.s32 0, %v2021
      %v2023 = vrot.slane %v2018, %v2022
      %v2025 = vmul.f32 %v2002, %v2023
      %v2026 = vmul.f32 %v2003, %v2023
      %v2027 = vmul.f32 %v2004, %v2023
      %v2028 = vmul.f32 %v2005, %v2023
      %v2029 = vmul.f32 %v2006, %v2023
      %v2030 = vmul.f32 %v2007, %v2023
      %v2031 = vmul.f32 %v2008, %v2023
      %v2032 = vmul.f32 %v2009, %v2023
      %v2033 = vmul.f32 %v2010, %v2023
      %v2034 = vmul.f32 %v2011, %v2023
      %v2035 = vmul.f32 %v2012, %v2023
      %v2036 = vmul.f32 %v2013, %v2023
      %v2037 = vmul.f32 %v2014, %v2023
      %v2038 = vmul.f32 %v2015, %v2023
      %v2039 = vmul.f32 %v2016, %v2023
      %v2040 = vmul.f32 %v2017, %v2023
      %v2041 = vld [vmem:[%s3] sm:$0x1]
      %v2043 = vlaneseq
      %v2044 = vshrl.u32 %v2043, 7
      %v2045 = vsub.s32 0, %v2044
      %v2046 = vrot.slane %v2041, %v2045
      %v2048 = vadd.f32 %v2025, %v2046
      %v2049 = vadd.f32 %v2026, %v2046
      %v2050 = vadd.f32 %v2027, %v2046
      %v2051 = vadd.f32 %v2028, %v2046
      %v2052 = vadd.f32 %v2029, %v2046
      %v2053 = vadd.f32 %v2030, %v2046
      %v2054 = vadd.f32 %v2031, %v2046
      %v2055 = vadd.f32 %v2032, %v2046
      %v2056 = vadd.f32 %v2033, %v2046
      %v2057 = vadd.f32 %v2034, %v2046
      %v2058 = vadd.f32 %v2035, %v2046
      %v2059 = vadd.f32 %v2036, %v2046
      %v2060 = vadd.f32 %v2037, %v2046
      %v2061 = vadd.f32 %v2038, %v2046
      %v2062 = vadd.f32 %v2039, %v2046
      %v2063 = vadd.f32 %v2040, %v2046
      %v2064 = vmax.f32 %v2048, 0.0
      %v2065 = vmax.f32 %v2049, 0.0
      %v2066 = vmax.f32 %v2050, 0.0
      %v2067 = vmax.f32 %v2051, 0.0
      %v2068 = vmax.f32 %v2052, 0.0
      %v2069 = vmax.f32 %v2053, 0.0
      %v2070 = vmax.f32 %v2054, 0.0
      %v2071 = vmax.f32 %v2055, 0.0
      %v2072 = vmax.f32 %v2056, 0.0
      %v2073 = vmax.f32 %v2057, 0.0
      %v2074 = vmax.f32 %v2058, 0.0
      %v2075 = vmax.f32 %v2059, 0.0
      %v2076 = vmax.f32 %v2060, 0.0
      %v2077 = vmax.f32 %v2061, 0.0
      %v2078 = vmax.f32 %v2062, 0.0
      %v2079 = vmax.f32 %v2063, 0.0
      %2080 = vst [vmem:[%s221] sm:$0xff] %v2064
      %2081 = vst [vmem:[%s221 + $0x8] sm:$0xff] %v2065
      %2082 = vst [vmem:[%s221 + $0x10] sm:$0xff] %v2066
      %2083 = vst [vmem:[%s221 + $0x18] sm:$0xff] %v2067
      %2084 = vst [vmem:[%s221 + $0x20] sm:$0xff] %v2068
      %2085 = vst [vmem:[%s221 + $0x28] sm:$0xff] %v2069
      %2086 = vst [vmem:[%s221 + $0x30] sm:$0xff] %v2070
      %2087 = vst [vmem:[%s221 + $0x38] sm:$0xff] %v2071
      %2088 = vst [vmem:[%s221 + $0x40] sm:$0xff] %v2072
      %2089 = vst [vmem:[%s221 + $0x48] sm:$0xff] %v2073
      %2090 = vst [vmem:[%s221 + $0x50] sm:$0xff] %v2074
      %2091 = vst [vmem:[%s221 + $0x58] sm:$0xff] %v2075
      %2092 = vst [vmem:[%s221 + $0x60] sm:$0xff] %v2076
      %2093 = vst [vmem:[%s221 + $0x68] sm:$0xff] %v2077
      %2094 = vst [vmem:[%s221 + $0x70] sm:$0xff] %v2078
      %2095 = vst [vmem:[%s221 + $0x78] sm:$0xff] %v2079
      %s2096 = smul.u32 8, %s20
      %p2097 = scmp.lt.s32.totalorder %s19, 1
      %s2098 = scalar_select %p2097, %s19, 1
      %p2099 = scmp.lt.s32.totalorder %s2096, 15
      %s2100 = scalar_select %p2099, %s2096, 15
      %s2101 = smul.addr %s2100, 2
      %s2102 = smul.addr %s2098, 32
      %s2103 = sadd.s32 %s2101, %s2102
      %s2104 = smul.addr %s2103, 8
      %s2105 = scalar_lea.vmem %s4, %s2104
      // Predicated region
      $region37: #{residual_block_forward.2} parent=35 // pred_check
        %p2106 = pneg %p136
      $region38: #{residual_block_forward.2} parent=35 // pred_check_branch
        %2108 = sbr.rel (%p2106) target = $region40
      $region39: #{residual_block_forward.2} parent=35 // pred_region
        %s2109 = smul.u32 8, %s20
      $region40: #{residual_block_forward.2} parent=35 // pred_fallthru
        _
    $region36: #{residual_block_forward.2} parent=5 // pred_fallthru
      _
    %p2110 = scmp.le.s32.totalorder 2, %s10
    // Predicated region
    $region41: #{residual_block_forward.2} parent=5 // pred_check
      %p2111 = pneg %p2110
    $region42: #{residual_block_forward.2} parent=5 // pred_check_branch
      %2113 = sbr.rel (%p2111) target = $region44
    $region43: #{residual_block_forward.2} parent=5 // pred_region
      %s2114 = ssub.s32 %s10, 2
      // Predicated region
      $region45: #{residual_block_forward.2} parent=43 // pred_check
        %p2115 = pneg %p142
      $region46: #{residual_block_forward.2} parent=43 // pred_check_branch
        %2117 = sbr.rel (%p2115) target = $region48
      $region47: #{residual_block_forward.2} parent=43 // pred_region
        %s2118 = smul.u32 8, %s22
        %p2119 = scmp.lt.s32.totalorder %s21, 1
        %s2120 = scalar_select %p2119, %s21, 1
        %p2121 = scmp.lt.s32.totalorder %s2118, 15
        %s2122 = scalar_select %p2121, %s2118, 15
        %s2123 = smul.addr %s2122, 2
        %s2124 = smul.addr %s2120, 32
        %s2125 = sadd.s32 %s2123, %s2124
        %s2126 = smul.addr %s2125, 8
        %s2127 = scalar_lea.vmem %s4, %s2126
      $region48: #{residual_block_forward.2} parent=43 // pred_fallthru
        _
    $region44: #{residual_block_forward.2} parent=5 // pred_fallthru
      _
  $region6: #{residual_block_forward.2} parent=0 // loop_footer
    %s14 = sadd.s32 1, %s10
  $region7: #{residual_block_forward.2} parent=0 // loop_footer_branch
    %9 = sbr.rel target = $region3
  $region8: #{residual_block_forward.2} parent=0 // loop_exit
    _

</llo_original>
